<compile_context>
chip_gen: v7x
topology: tpu7x:2x2x1
jax: 0.10.0
libtpu: 0.0.40
codegen_flags: <defaults>
</compile_context>

<pallas_src>
import math

import jax
import jax.numpy as jnp
from jax.experimental import pallas as pl
from jax.experimental.pallas import tpu as pltpu

# ----------------------- small, deterministic config -----------------------
VOCAB = 64
HIDDEN = 32          # stands in for hidden_size=768
N_HEADS = 4
HEAD_DIM = HIDDEN // N_HEADS
N_LAYERS = 2
INTERMEDIATE = 64
MID = 16             # stands in for mid_size=512
SEQ = 8
BATCH = 2
LN_EPS = 1e-12
BN_EPS = 1e-5

NB = 2 * BATCH       # source + target sequences packed into one encoder pass
ROWS = NB * SEQ

_VMEM = pl.BlockSpec(memory_space=pltpu.MemorySpace.VMEM)


# --------------------------- in-kernel helpers ------------------------------
def _gelu(x):
    # TODO(synk): torch.nn.GELU defaults to the exact erf form; tanh approx here.
    c = math.sqrt(2.0 / math.pi)
    return 0.5 * x * (1.0 + jnp.tanh(c * (x + 0.044715 * x * x * x)))


def _layernorm(x, g, b):
    # variance as E[x^2] - E[x]^2: the two lane reductions are independent, so
    # they overlap in the XLU slots instead of a reduce->sub->square->reduce chain.
    mu = jnp.mean(x, axis=-1, keepdims=True)
    ms = jnp.mean(x * x, axis=-1, keepdims=True)
    var = ms - mu * mu
    return (x - mu) * jax.lax.rsqrt(var + LN_EPS) * g + b


def _softmax_approx(x):
    # attention softmax: approximate reciprocal goes to the EUP slot (free-ish)
    m = jnp.max(x, axis=-1, keepdims=True)
    e = jnp.exp(x - m)
    return e * pl.reciprocal(jnp.sum(e, axis=-1, keepdims=True), approx=True)


def _softmax_exact(x):
    # output softmax: exact divide so returned probabilities sum to 1
    m = jnp.max(x, axis=-1, keepdims=True)
    e = jnp.exp(x - m)
    return e / jnp.sum(e, axis=-1, keepdims=True)


def _bf16(x):
    return x.astype(jnp.bfloat16)


# ------------------------------ fused kernel --------------------------------
def _model_kernel(attn_mask_ref, ids_col_ref,
                  word_emb_ref, tok_emb_ref, emb_ln_g_ref, emb_ln_b_ref,
                  wqkv_ref, bqkv_ref, wo_ref, bo_ref, ln1_g_ref, ln1_b_ref,
                  win_ref, b_in_ref, wout_ref, bout_ref, ln2_g_ref, ln2_b_ref,
                  pool_w_ref, pool_b_ref,
                  w1s_ref, w1t_ref, w1a_ref, b1_ref, w2_ref, b2_ref,
                  logits_ref, probs_ref,
                  h_vmem):
    # precomputed (ROWS, ROWS) additive attention mask: loaded once, reused by
    # every head / layer with zero re-broadcast work.
    attn_mask = attn_mask_ref[...]

    # embedding lookup as one-hot @ table (MXU-friendly gather at VOCAB=64).
    # TODO(synk): at real vocab sizes use a scalar-prefetch HBM row gather.
    vocab_iota = jax.lax.broadcasted_iota(jnp.int32, (ROWS, VOCAB), 1)
    onehot = (ids_col_ref[...] == vocab_iota).astype(jnp.bfloat16)      # (ROWS, V)
    h = jnp.dot(onehot, word_emb_ref[...], preferred_element_type=jnp.float32)
    h = h + tok_emb_ref[...]                    # token_type_ids == 0 everywhere
    h = _layernorm(h, emb_ln_g_ref[...], emb_ln_b_ref[...])             # (ROWS, H)

    inv_sqrt_d = 1.0 / math.sqrt(HEAD_DIM)

    # TODO(synk): NEZHA uses functional relative-position attention; approximated
    # here with standard scaled dot-product self-attention (no positional signal).
    for layer in range(N_LAYERS):
        # fused QKV projection: one (H, 3H) matmul
        qkv = jnp.dot(_bf16(h), wqkv_ref[layer],
                      preferred_element_type=jnp.float32) + bqkv_ref[layer]
        qkv_b = _bf16(qkv)                                               # (ROWS, 3H)

        ctx_heads = []
        for hd in range(N_HEADS):
            lo = hd * HEAD_DIM
            q = qkv_b[:, lo:lo + HEAD_DIM]                               # (ROWS, dH)
            k = qkv_b[:, HIDDEN + lo:HIDDEN + lo + HEAD_DIM]             # (ROWS, dH)
            v = qkv_b[:, 2 * HIDDEN + lo:2 * HIDDEN + lo + HEAD_DIM]     # (ROWS, dH)
            # block-diagonal scores over all packed sequences: one (ROWS, ROWS)
            # matmul per head, no 3D reshapes / relayouts.
            s = jax.lax.dot_general(q, k, (((1,), (1,)), ((), ())),
                                    preferred_element_type=jnp.float32)
            p = _softmax_approx(s * inv_sqrt_d + attn_mask)
            ctx_heads.append(jnp.dot(_bf16(p), v,
                                     preferred_element_type=jnp.float32))
        # heads rejoin as contiguous lane blocks of a (ROWS, HIDDEN) slab
        ctx = jnp.concatenate(ctx_heads, axis=-1)                        # (ROWS, H)

        attn = jnp.dot(_bf16(ctx), wo_ref[layer],
                       preferred_element_type=jnp.float32) + bo_ref[layer]
        h = _layernorm(attn + h, ln1_g_ref[layer], ln1_b_ref[layer])     # res + LN1

        ffn = _gelu(jnp.dot(_bf16(h), win_ref[layer],
                            preferred_element_type=jnp.float32) + b_in_ref[layer])
        ffn = jnp.dot(_bf16(ffn), wout_ref[layer],
                      preferred_element_type=jnp.float32) + bout_ref[layer]
        h = _layernorm(ffn + h, ln2_g_ref[layer], ln2_b_ref[layer])      # res + LN2

    # pooler on the [CLS] token ( == bert(...)[1] ): rows 0, SEQ, 2*SEQ, ...
    # strided sublane read from a VMEM staging buffer (no 3D reshape relayout).
    h_vmem[...] = h
    cls = h_vmem[pl.ds(0, NB, stride=SEQ), :]                            # (NB, H)
    pooled = jnp.tanh(jnp.dot(_bf16(cls), pool_w_ref[...],
                              preferred_element_type=jnp.float32) + pool_b_ref[...])

    # pair classifier: concat([src, tgt, |src-tgt|]) @ W1 done as three matmuls
    # against the row-blocks of W1 (eval-mode BatchNorm already folded into W1/b1).
    src = pooled[:BATCH]
    tgt = pooled[BATCH:]
    absd = jnp.abs(src - tgt)
    hid = (jnp.dot(_bf16(src), w1s_ref[...], preferred_element_type=jnp.float32)
           + jnp.dot(_bf16(tgt), w1t_ref[...], preferred_element_type=jnp.float32)
           + jnp.dot(_bf16(absd), w1a_ref[...], preferred_element_type=jnp.float32)
           + b1_ref[...])
    hid = jnp.maximum(hid, 0.0)                                          # ReLU
    logits = jnp.dot(_bf16(hid), w2_ref[...],
                     preferred_element_type=jnp.float32) + b2_ref[...]

    logits_ref[...] = logits
    probs_ref[...] = _softmax_exact(logits)


# ------------------------------- wrapper -------------------------------------
def forward(params, source_input_ids, target_input_ids):
    # batch source and target sequences into one encoder pass
    ids = jnp.concatenate([source_input_ids, target_input_ids], axis=0)   # (2B, S)
    ids_col = ids.reshape(ROWS, 1)

    # one (ROWS, ROWS) additive attention mask for block-diagonal attention:
    #   cross-sequence entries -> -1e9, padded key columns (ids == 0) -> -1e4.
    pad_bias = jnp.where(ids == 0, -10000.0, 0.0).reshape(1, ROWS)
    seq_ids = jnp.repeat(jnp.arange(NB, dtype=jnp.int32), SEQ)            # (ROWS,)
    same_seq = seq_ids[:, None] == seq_ids[None, :]                       # (ROWS, ROWS)
    attn_mask = jnp.where(same_seq, pad_bias, -1e9).astype(jnp.float32)

    args = (attn_mask, ids_col,
            params["word_emb"], params["tok_emb"],
            params["emb_ln_g"], params["emb_ln_b"],
            params["wqkv"], params["bqkv"], params["wo"], params["bo"],
            params["ln1_g"], params["ln1_b"],
            params["w_in"], params["b_in"], params["w_out"], params["b_out"],
            params["ln2_g"], params["ln2_b"],
            params["pool_w"], params["pool_b"],
            params["w1_src"], params["w1_tgt"], params["w1_abs"], params["b1"],
            params["w2"], params["b2"])

    logits, probability = pl.pallas_call(
        _model_kernel,
        out_shape=(jax.ShapeDtypeStruct((BATCH, 2), jnp.float32),
                   jax.ShapeDtypeStruct((BATCH, 2), jnp.float32)),
        in_specs=[_VMEM] * len(args),
        out_specs=(_VMEM, _VMEM),
        scratch_shapes=[pltpu.VMEM((ROWS, HIDDEN), jnp.float32)],
    )(*args)
    return logits, probability


# ------------------------------ parameters ----------------------------------
def init_params(key):
    keys = iter(jax.random.split(key, 64))

    def dense(shape, scale=0.02, dtype=jnp.bfloat16):
        return (jax.random.normal(next(keys), shape, jnp.float32) * scale).astype(dtype)

    def stack(fn):
        return jnp.stack([fn() for _ in range(N_LAYERS)], axis=0)

    params = {
        # embeddings (weights carried as bf16 MXU operands, affine params f32)
        "word_emb": dense((VOCAB, HIDDEN)),
        "tok_emb": dense((1, HIDDEN), dtype=jnp.float32),
        "emb_ln_g": jnp.ones((1, HIDDEN), jnp.float32),
        "emb_ln_b": jnp.zeros((1, HIDDEN), jnp.float32),
        # per-layer encoder params, stacked on a leading layer axis
        "wqkv": stack(lambda: dense((HIDDEN, 3 * HIDDEN))),       # fused Q|K|V
        "bqkv": jnp.zeros((N_LAYERS, 1, 3 * HIDDEN), jnp.float32),
        "wo": stack(lambda: dense((HIDDEN, HIDDEN))),
        "bo": jnp.zeros((N_LAYERS, 1, HIDDEN), jnp.float32),
        "ln1_g": jnp.ones((N_LAYERS, 1, HIDDEN), jnp.float32),
        "ln1_b": jnp.zeros((N_LAYERS, 1, HIDDEN), jnp.float32),
        "w_in": stack(lambda: dense((HIDDEN, INTERMEDIATE))),
        "b_in": jnp.zeros((N_LAYERS, 1, INTERMEDIATE), jnp.float32),
        "w_out": stack(lambda: dense((INTERMEDIATE, HIDDEN))),
        "b_out": jnp.zeros((N_LAYERS, 1, HIDDEN), jnp.float32),
        "ln2_g": jnp.ones((N_LAYERS, 1, HIDDEN), jnp.float32),
        "ln2_b": jnp.zeros((N_LAYERS, 1, HIDDEN), jnp.float32),
        # pooler
        "pool_w": dense((HIDDEN, HIDDEN)),
        "pool_b": jnp.zeros((1, HIDDEN), jnp.float32),
    }

    # classifier: Linear(3H, MID) -> BatchNorm1d(MID, eval) -> ReLU -> Linear(MID, 2)
    w1 = jax.random.normal(next(keys), (3 * HIDDEN, MID), jnp.float32) * 0.02
    b1 = jnp.zeros((MID,), jnp.float32)
    bn_g = jnp.ones((MID,), jnp.float32)
    bn_b = jnp.zeros((MID,), jnp.float32)
    bn_mean = jnp.zeros((MID,), jnp.float32)
    bn_var = jnp.ones((MID,), jnp.float32)
    # fold eval-mode BatchNorm (running stats) into the first classifier linear
    bn_scale = bn_g * jax.lax.rsqrt(bn_var + BN_EPS)
    w1f = w1 * bn_scale[None, :]
    b1f = (b1 - bn_mean) * bn_scale + bn_b
    params.update({
        "w1_src": w1f[0 * HIDDEN:1 * HIDDEN].astype(jnp.bfloat16),
        "w1_tgt": w1f[1 * HIDDEN:2 * HIDDEN].astype(jnp.bfloat16),
        "w1_abs": w1f[2 * HIDDEN:3 * HIDDEN].astype(jnp.bfloat16),
        "b1": b1f.reshape(1, MID),
        "w2": dense((MID, 2)),
        "b2": jnp.zeros((1, 2), jnp.float32),
    })
    return params


# --------------------------------- main --------------------------------------
if __name__ == "__main__":
    key = jax.random.PRNGKey(0)
    pkey, skey, tkey = jax.random.split(key, 3)
    params = init_params(pkey)

    source_input_ids = jax.random.randint(skey, (BATCH, SEQ), 1, VOCAB).astype(jnp.int32)
    target_input_ids = jax.random.randint(tkey, (BATCH, SEQ), 1, VOCAB).astype(jnp.int32)
    # pad a few positions with 0 to exercise the attention-mask path
    source_input_ids = source_input_ids.at[:, -2:].set(0)
    target_input_ids = target_input_ids.at[:, -1:].set(0)

    fwd = jax.jit(forward)
    logits, probability = fwd(params, source_input_ids, target_input_ids)
    jax.block_until_ready((logits, probability))

    assert logits.shape == (BATCH, 2) and probability.shape == (BATCH, 2)
    assert bool(jnp.all(jnp.isfinite(logits))) and bool(jnp.all(jnp.isfinite(probability)))
    assert bool(jnp.all(jnp.abs(jnp.sum(probability, axis=-1) - 1.0) < 1e-5))
    print("KERNEL_OK")
</pallas_src>

<mosaic_0001>
module attributes {stable_mosaic.version = 11 : i64} {
  func.func @_model_kernel(%arg0: memref<32x32xf32, #tpu.memory_space<vmem>>, %arg1: memref<32x1xi32, #tpu.memory_space<vmem>>, %arg2: memref<64x32xbf16, #tpu.memory_space<vmem>>, %arg3: memref<1x32xf32, #tpu.memory_space<vmem>>, %arg4: memref<1x32xf32, #tpu.memory_space<vmem>>, %arg5: memref<1x32xf32, #tpu.memory_space<vmem>>, %arg6: memref<2x32x96xbf16, #tpu.memory_space<vmem>>, %arg7: memref<2x1x96xf32, #tpu.memory_space<vmem>>, %arg8: memref<2x32x32xbf16, #tpu.memory_space<vmem>>, %arg9: memref<2x1x32xf32, #tpu.memory_space<vmem>>, %arg10: memref<2x1x32xf32, #tpu.memory_space<vmem>>, %arg11: memref<2x1x32xf32, #tpu.memory_space<vmem>>, %arg12: memref<2x32x64xbf16, #tpu.memory_space<vmem>>, %arg13: memref<2x1x64xf32, #tpu.memory_space<vmem>>, %arg14: memref<2x64x32xbf16, #tpu.memory_space<vmem>>, %arg15: memref<2x1x32xf32, #tpu.memory_space<vmem>>, %arg16: memref<2x1x32xf32, #tpu.memory_space<vmem>>, %arg17: memref<2x1x32xf32, #tpu.memory_space<vmem>>, %arg18: memref<32x32xbf16, #tpu.memory_space<vmem>>, %arg19: memref<1x32xf32, #tpu.memory_space<vmem>>, %arg20: memref<32x16xbf16, #tpu.memory_space<vmem>>, %arg21: memref<32x16xbf16, #tpu.memory_space<vmem>>, %arg22: memref<32x16xbf16, #tpu.memory_space<vmem>>, %arg23: memref<1x16xf32, #tpu.memory_space<vmem>>, %arg24: memref<16x2xbf16, #tpu.memory_space<vmem>>, %arg25: memref<1x2xf32, #tpu.memory_space<vmem>>, %arg26: memref<2x2xf32, #tpu.memory_space<vmem>>, %arg27: memref<2x2xf32, #tpu.memory_space<vmem>>, %arg28: memref<32x32xf32, #tpu.memory_space<vmem>>) attributes {dimension_semantics = [], scalar_prefetch = 0 : i64, scratch_operands = 1 : i64, tpu.core_type = #tpu.core_type<tc>} {
    %c0 = arith.constant 0 : index
    %c0_0 = arith.constant 0 : index
    %0 = vector.load %arg0[%c0, %c0_0] : memref<32x32xf32, #tpu.memory_space<vmem>>, vector<32x32xf32>
    %1 = tpu.iota {dimensions = array<i32: 1>} : vector<32x64xi32>
    %c0_1 = arith.constant 0 : index
    %c0_2 = arith.constant 0 : index
    %2 = vector.load %arg1[%c0_1, %c0_2] : memref<32x1xi32, #tpu.memory_space<vmem>>, vector<32x1xi32>
    %3 = vector.broadcast %2 : vector<32x1xi32> to vector<32x64xi32>
    %4 = arith.cmpi eq, %3, %1 : vector<32x64xi32>
    %5 = arith.extui %4 : vector<32x64xi1> to vector<32x64xi32>
    %6 = arith.sitofp %5 : vector<32x64xi32> to vector<32x64xf32>
    %7 = arith.truncf %6 : vector<32x64xf32> to vector<32x64xbf16>
    %c0_3 = arith.constant 0 : index
    %c0_4 = arith.constant 0 : index
    %8 = vector.load %arg2[%c0_3, %c0_4] : memref<64x32xbf16, #tpu.memory_space<vmem>>, vector<64x32xbf16>
    %cst = arith.constant dense<0.000000e+00> : vector<32x32xf32>
    %9 = tpu.matmul %7, %8, %cst {dimension_numbers = #tpu.dot_dimension_numbers<[1], [0], [0], [1], [0, 0, 1, 1], [], []>} : vector<32x64xbf16>, vector<64x32xbf16>, vector<32x32xf32> -> vector<32x32xf32>
    %c0_5 = arith.constant 0 : index
    %c0_6 = arith.constant 0 : index
    %10 = vector.load %arg3[%c0_5, %c0_6] : memref<1x32xf32, #tpu.memory_space<vmem>>, vector<1x32xf32>
    %11 = vector.broadcast %10 : vector<1x32xf32> to vector<32x32xf32>
    %12 = arith.addf %9, %11 : vector<32x32xf32>
    %c0_7 = arith.constant 0 : index
    %c0_8 = arith.constant 0 : index
    %13 = vector.load %arg4[%c0_7, %c0_8] : memref<1x32xf32, #tpu.memory_space<vmem>>, vector<1x32xf32>
    %c0_9 = arith.constant 0 : index
    %c0_10 = arith.constant 0 : index
    %14 = vector.load %arg5[%c0_9, %c0_10] : memref<1x32xf32, #tpu.memory_space<vmem>>, vector<1x32xf32>
    %cst_11 = arith.constant dense<0.000000e+00> : vector<32xf32>
    %15 = vector.multi_reduction <add>, %12, %cst_11 [1] : vector<32x32xf32> to vector<32xf32>
    %16 = vector.shape_cast %15 : vector<32xf32> to vector<32x1xf32>
    %cst_12 = arith.constant 3.200000e+01 : f32
    %17 = vector.broadcast %cst_12 : f32 to vector<32x1xf32>
    %18 = arith.divf %16, %17 : vector<32x1xf32>
    %19 = arith.mulf %12, %12 : vector<32x32xf32>
    %cst_13 = arith.constant dense<0.000000e+00> : vector<32xf32>
    %20 = vector.multi_reduction <add>, %19, %cst_13 [1] : vector<32x32xf32> to vector<32xf32>
    %21 = vector.shape_cast %20 : vector<32xf32> to vector<32x1xf32>
    %cst_14 = arith.constant 3.200000e+01 : f32
    %22 = vector.broadcast %cst_14 : f32 to vector<32x1xf32>
    %23 = arith.divf %21, %22 : vector<32x1xf32>
    %24 = arith.mulf %18, %18 : vector<32x1xf32>
    %25 = arith.subf %23, %24 : vector<32x1xf32>
    %26 = vector.broadcast %18 : vector<32x1xf32> to vector<32x32xf32>
    %27 = arith.subf %12, %26 : vector<32x32xf32>
    %cst_15 = arith.constant 9.99999996E-13 : f32
    %28 = vector.broadcast %cst_15 : f32 to vector<32x1xf32>
    %29 = arith.addf %25, %28 : vector<32x1xf32>
    %30 = math.rsqrt %29 : vector<32x1xf32>
    %31 = vector.broadcast %30 : vector<32x1xf32> to vector<32x32xf32>
    %32 = arith.mulf %27, %31 : vector<32x32xf32>
    %33 = vector.broadcast %13 : vector<1x32xf32> to vector<32x32xf32>
    %34 = arith.mulf %32, %33 : vector<32x32xf32>
    %35 = vector.broadcast %14 : vector<1x32xf32> to vector<32x32xf32>
    %36 = arith.addf %34, %35 : vector<32x32xf32>
    %37 = arith.truncf %36 : vector<32x32xf32> to vector<32x32xbf16>
    %c0_16 = arith.constant 0 : index
    %c0_17 = arith.constant 0 : index
    %c0_18 = arith.constant 0 : index
    %38 = vector.load %arg6[%c0_16, %c0_17, %c0_18] : memref<2x32x96xbf16, #tpu.memory_space<vmem>>, vector<1x32x96xbf16>
    %39 = vector.shape_cast %38 : vector<1x32x96xbf16> to vector<32x96xbf16>
    %cst_19 = arith.constant dense<0.000000e+00> : vector<32x96xf32>
    %40 = tpu.matmul %37, %39, %cst_19 {dimension_numbers = #tpu.dot_dimension_numbers<[1], [0], [0], [1], [0, 0, 1, 1], [], []>} : vector<32x32xbf16>, vector<32x96xbf16>, vector<32x96xf32> -> vector<32x96xf32>
    %c0_20 = arith.constant 0 : index
    %c0_21 = arith.constant 0 : index
    %c0_22 = arith.constant 0 : index
    %41 = vector.load %arg7[%c0_20, %c0_21, %c0_22] : memref<2x1x96xf32, #tpu.memory_space<vmem>>, vector<1x1x96xf32>
    %42 = vector.shape_cast %41 : vector<1x1x96xf32> to vector<1x96xf32>
    %43 = vector.broadcast %42 : vector<1x96xf32> to vector<32x96xf32>
    %44 = arith.addf %40, %43 : vector<32x96xf32>
    %45 = arith.truncf %44 : vector<32x96xf32> to vector<32x96xbf16>
    %46 = vector.extract_strided_slice %45 {offsets = [0, 0], sizes = [32, 8], strides = [1, 1]} : vector<32x96xbf16> to vector<32x8xbf16>
    %47 = vector.extract_strided_slice %45 {offsets = [0, 32], sizes = [32, 8], strides = [1, 1]} : vector<32x96xbf16> to vector<32x8xbf16>
    %48 = vector.extract_strided_slice %45 {offsets = [0, 64], sizes = [32, 8], strides = [1, 1]} : vector<32x96xbf16> to vector<32x8xbf16>
    %cst_23 = arith.constant dense<0.000000e+00> : vector<32x32xf32>
    %49 = tpu.matmul %46, %47, %cst_23 {dimension_numbers = #tpu.dot_dimension_numbers<[1], [1], [0], [0], [0, 0, 1, 0], [], []>} : vector<32x8xbf16>, vector<32x8xbf16>, vector<32x32xf32> -> vector<32x32xf32>
    %cst_24 = arith.constant 0.353553385 : f32
    %50 = vector.broadcast %cst_24 : f32 to vector<32x32xf32>
    %51 = arith.mulf %49, %50 : vector<32x32xf32>
    %52 = arith.addf %51, %0 : vector<32x32xf32>
    %cst_25 = arith.constant dense<0xFF800000> : vector<32xf32>
    %53 = vector.multi_reduction <maximumf>, %52, %cst_25 [1] : vector<32x32xf32> to vector<32xf32>
    %54 = vector.shape_cast %53 : vector<32xf32> to vector<32x1xf32>
    %55 = vector.broadcast %54 : vector<32x1xf32> to vector<32x32xf32>
    %56 = arith.subf %52, %55 : vector<32x32xf32>
    %57 = math.exp %56 : vector<32x32xf32>
    %cst_26 = arith.constant dense<0.000000e+00> : vector<32xf32>
    %58 = vector.multi_reduction <add>, %57, %cst_26 [1] : vector<32x32xf32> to vector<32xf32>
    %59 = vector.shape_cast %58 : vector<32xf32> to vector<32x1xf32>
    %60 = tpu.reciprocal %59 {approx = true} : vector<32x1xf32> -> vector<32x1xf32>
    %61 = vector.broadcast %60 : vector<32x1xf32> to vector<32x32xf32>
    %62 = arith.mulf %57, %61 : vector<32x32xf32>
    %63 = arith.truncf %62 : vector<32x32xf32> to vector<32x32xbf16>
    %cst_27 = arith.constant dense<0.000000e+00> : vector<32x8xf32>
    %64 = tpu.matmul %63, %48, %cst_27 {dimension_numbers = #tpu.dot_dimension_numbers<[1], [0], [0], [1], [0, 0, 1, 1], [], []>} : vector<32x32xbf16>, vector<32x8xbf16>, vector<32x8xf32> -> vector<32x8xf32>
    %65 = vector.extract_strided_slice %45 {offsets = [0, 8], sizes = [32, 8], strides = [1, 1]} : vector<32x96xbf16> to vector<32x8xbf16>
    %66 = vector.extract_strided_slice %45 {offsets = [0, 40], sizes = [32, 8], strides = [1, 1]} : vector<32x96xbf16> to vector<32x8xbf16>
    %67 = vector.extract_strided_slice %45 {offsets = [0, 72], sizes = [32, 8], strides = [1, 1]} : vector<32x96xbf16> to vector<32x8xbf16>
    %cst_28 = arith.constant dense<0.000000e+00> : vector<32x32xf32>
    %68 = tpu.matmul %65, %66, %cst_28 {dimension_numbers = #tpu.dot_dimension_numbers<[1], [1], [0], [0], [0, 0, 1, 0], [], []>} : vector<32x8xbf16>, vector<32x8xbf16>, vector<32x32xf32> -> vector<32x32xf32>
    %cst_29 = arith.constant 0.353553385 : f32
    %69 = vector.broadcast %cst_29 : f32 to vector<32x32xf32>
    %70 = arith.mulf %68, %69 : vector<32x32xf32>
    %71 = arith.addf %70, %0 : vector<32x32xf32>
    %cst_30 = arith.constant dense<0xFF800000> : vector<32xf32>
    %72 = vector.multi_reduction <maximumf>, %71, %cst_30 [1] : vector<32x32xf32> to vector<32xf32>
    %73 = vector.shape_cast %72 : vector<32xf32> to vector<32x1xf32>
    %74 = vector.broadcast %73 : vector<32x1xf32> to vector<32x32xf32>
    %75 = arith.subf %71, %74 : vector<32x32xf32>
    %76 = math.exp %75 : vector<32x32xf32>
    %cst_31 = arith.constant dense<0.000000e+00> : vector<32xf32>
    %77 = vector.multi_reduction <add>, %76, %cst_31 [1] : vector<32x32xf32> to vector<32xf32>
    %78 = vector.shape_cast %77 : vector<32xf32> to vector<32x1xf32>
    %79 = tpu.reciprocal %78 {approx = true} : vector<32x1xf32> -> vector<32x1xf32>
    %80 = vector.broadcast %79 : vector<32x1xf32> to vector<32x32xf32>
    %81 = arith.mulf %76, %80 : vector<32x32xf32>
    %82 = arith.truncf %81 : vector<32x32xf32> to vector<32x32xbf16>
    %cst_32 = arith.constant dense<0.000000e+00> : vector<32x8xf32>
    %83 = tpu.matmul %82, %67, %cst_32 {dimension_numbers = #tpu.dot_dimension_numbers<[1], [0], [0], [1], [0, 0, 1, 1], [], []>} : vector<32x32xbf16>, vector<32x8xbf16>, vector<32x8xf32> -> vector<32x8xf32>
    %84 = vector.extract_strided_slice %45 {offsets = [0, 16], sizes = [32, 8], strides = [1, 1]} : vector<32x96xbf16> to vector<32x8xbf16>
    %85 = vector.extract_strided_slice %45 {offsets = [0, 48], sizes = [32, 8], strides = [1, 1]} : vector<32x96xbf16> to vector<32x8xbf16>
    %86 = vector.extract_strided_slice %45 {offsets = [0, 80], sizes = [32, 8], strides = [1, 1]} : vector<32x96xbf16> to vector<32x8xbf16>
    %cst_33 = arith.constant dense<0.000000e+00> : vector<32x32xf32>
    %87 = tpu.matmul %84, %85, %cst_33 {dimension_numbers = #tpu.dot_dimension_numbers<[1], [1], [0], [0], [0, 0, 1, 0], [], []>} : vector<32x8xbf16>, vector<32x8xbf16>, vector<32x32xf32> -> vector<32x32xf32>
    %cst_34 = arith.constant 0.353553385 : f32
    %88 = vector.broadcast %cst_34 : f32 to vector<32x32xf32>
    %89 = arith.mulf %87, %88 : vector<32x32xf32>
    %90 = arith.addf %89, %0 : vector<32x32xf32>
    %cst_35 = arith.constant dense<0xFF800000> : vector<32xf32>
    %91 = vector.multi_reduction <maximumf>, %90, %cst_35 [1] : vector<32x32xf32> to vector<32xf32>
    %92 = vector.shape_cast %91 : vector<32xf32> to vector<32x1xf32>
    %93 = vector.broadcast %92 : vector<32x1xf32> to vector<32x32xf32>
    %94 = arith.subf %90, %93 : vector<32x32xf32>
    %95 = math.exp %94 : vector<32x32xf32>
    %cst_36 = arith.constant dense<0.000000e+00> : vector<32xf32>
    %96 = vector.multi_reduction <add>, %95, %cst_36 [1] : vector<32x32xf32> to vector<32xf32>
    %97 = vector.shape_cast %96 : vector<32xf32> to vector<32x1xf32>
    %98 = tpu.reciprocal %97 {approx = true} : vector<32x1xf32> -> vector<32x1xf32>
    %99 = vector.broadcast %98 : vector<32x1xf32> to vector<32x32xf32>
    %100 = arith.mulf %95, %99 : vector<32x32xf32>
    %101 = arith.truncf %100 : vector<32x32xf32> to vector<32x32xbf16>
    %cst_37 = arith.constant dense<0.000000e+00> : vector<32x8xf32>
    %102 = tpu.matmul %101, %86, %cst_37 {dimension_numbers = #tpu.dot_dimension_numbers<[1], [0], [0], [1], [0, 0, 1, 1], [], []>} : vector<32x32xbf16>, vector<32x8xbf16>, vector<32x8xf32> -> vector<32x8xf32>
    %103 = vector.extract_strided_slice %45 {offsets = [0, 24], sizes = [32, 8], strides = [1, 1]} : vector<32x96xbf16> to vector<32x8xbf16>
    %104 = vector.extract_strided_slice %45 {offsets = [0, 56], sizes = [32, 8], strides = [1, 1]} : vector<32x96xbf16> to vector<32x8xbf16>
    %105 = vector.extract_strided_slice %45 {offsets = [0, 88], sizes = [32, 8], strides = [1, 1]} : vector<32x96xbf16> to vector<32x8xbf16>
    %cst_38 = arith.constant dense<0.000000e+00> : vector<32x32xf32>
    %106 = tpu.matmul %103, %104, %cst_38 {dimension_numbers = #tpu.dot_dimension_numbers<[1], [1], [0], [0], [0, 0, 1, 0], [], []>} : vector<32x8xbf16>, vector<32x8xbf16>, vector<32x32xf32> -> vector<32x32xf32>
    %cst_39 = arith.constant 0.353553385 : f32
    %107 = vector.broadcast %cst_39 : f32 to vector<32x32xf32>
    %108 = arith.mulf %106, %107 : vector<32x32xf32>
    %109 = arith.addf %108, %0 : vector<32x32xf32>
    %cst_40 = arith.constant dense<0xFF800000> : vector<32xf32>
    %110 = vector.multi_reduction <maximumf>, %109, %cst_40 [1] : vector<32x32xf32> to vector<32xf32>
    %111 = vector.shape_cast %110 : vector<32xf32> to vector<32x1xf32>
    %112 = vector.broadcast %111 : vector<32x1xf32> to vector<32x32xf32>
    %113 = arith.subf %109, %112 : vector<32x32xf32>
    %114 = math.exp %113 : vector<32x32xf32>
    %cst_41 = arith.constant dense<0.000000e+00> : vector<32xf32>
    %115 = vector.multi_reduction <add>, %114, %cst_41 [1] : vector<32x32xf32> to vector<32xf32>
    %116 = vector.shape_cast %115 : vector<32xf32> to vector<32x1xf32>
    %117 = tpu.reciprocal %116 {approx = true} : vector<32x1xf32> -> vector<32x1xf32>
    %118 = vector.broadcast %117 : vector<32x1xf32> to vector<32x32xf32>
    %119 = arith.mulf %114, %118 : vector<32x32xf32>
    %120 = arith.truncf %119 : vector<32x32xf32> to vector<32x32xbf16>
    %cst_42 = arith.constant dense<0.000000e+00> : vector<32x8xf32>
    %121 = tpu.matmul %120, %105, %cst_42 {dimension_numbers = #tpu.dot_dimension_numbers<[1], [0], [0], [1], [0, 0, 1, 1], [], []>} : vector<32x32xbf16>, vector<32x8xbf16>, vector<32x8xf32> -> vector<32x8xf32>
    %122 = tpu.concatenate %64, %83, %102, %121 in 1 : vector<32x8xf32>, vector<32x8xf32>, vector<32x8xf32>, vector<32x8xf32> -> vector<32x32xf32>
    %123 = arith.truncf %122 : vector<32x32xf32> to vector<32x32xbf16>
    %c0_43 = arith.constant 0 : index
    %c0_44 = arith.constant 0 : index
    %c0_45 = arith.constant 0 : index
    %124 = vector.load %arg8[%c0_43, %c0_44, %c0_45] : memref<2x32x32xbf16, #tpu.memory_space<vmem>>, vector<1x32x32xbf16>
    %125 = vector.shape_cast %124 : vector<1x32x32xbf16> to vector<32x32xbf16>
    %cst_46 = arith.constant dense<0.000000e+00> : vector<32x32xf32>
    %126 = tpu.matmul %123, %125, %cst_46 {dimension_numbers = #tpu.dot_dimension_numbers<[1], [0], [0], [1], [0, 0, 1, 1], [], []>} : vector<32x32xbf16>, vector<32x32xbf16>, vector<32x32xf32> -> vector<32x32xf32>
    %c0_47 = arith.constant 0 : index
    %c0_48 = arith.constant 0 : index
    %c0_49 = arith.constant 0 : index
    %127 = vector.load %arg9[%c0_47, %c0_48, %c0_49] : memref<2x1x32xf32, #tpu.memory_space<vmem>>, vector<1x1x32xf32>
    %128 = vector.shape_cast %127 : vector<1x1x32xf32> to vector<1x32xf32>
    %129 = vector.broadcast %128 : vector<1x32xf32> to vector<32x32xf32>
    %130 = arith.addf %126, %129 : vector<32x32xf32>
    %131 = arith.addf %130, %36 : vector<32x32xf32>
    %c0_50 = arith.constant 0 : index
    %c0_51 = arith.constant 0 : index
    %c0_52 = arith.constant 0 : index
    %132 = vector.load %arg10[%c0_50, %c0_51, %c0_52] : memref<2x1x32xf32, #tpu.memory_space<vmem>>, vector<1x1x32xf32>
    %133 = vector.shape_cast %132 : vector<1x1x32xf32> to vector<1x32xf32>
    %c0_53 = arith.constant 0 : index
    %c0_54 = arith.constant 0 : index
    %c0_55 = arith.constant 0 : index
    %134 = vector.load %arg11[%c0_53, %c0_54, %c0_55] : memref<2x1x32xf32, #tpu.memory_space<vmem>>, vector<1x1x32xf32>
    %135 = vector.shape_cast %134 : vector<1x1x32xf32> to vector<1x32xf32>
    %cst_56 = arith.constant dense<0.000000e+00> : vector<32xf32>
    %136 = vector.multi_reduction <add>, %131, %cst_56 [1] : vector<32x32xf32> to vector<32xf32>
    %137 = vector.shape_cast %136 : vector<32xf32> to vector<32x1xf32>
    %cst_57 = arith.constant 3.200000e+01 : f32
    %138 = vector.broadcast %cst_57 : f32 to vector<32x1xf32>
    %139 = arith.divf %137, %138 : vector<32x1xf32>
    %140 = arith.mulf %131, %131 : vector<32x32xf32>
    %cst_58 = arith.constant dense<0.000000e+00> : vector<32xf32>
    %141 = vector.multi_reduction <add>, %140, %cst_58 [1] : vector<32x32xf32> to vector<32xf32>
    %142 = vector.shape_cast %141 : vector<32xf32> to vector<32x1xf32>
    %cst_59 = arith.constant 3.200000e+01 : f32
    %143 = vector.broadcast %cst_59 : f32 to vector<32x1xf32>
    %144 = arith.divf %142, %143 : vector<32x1xf32>
    %145 = arith.mulf %139, %139 : vector<32x1xf32>
    %146 = arith.subf %144, %145 : vector<32x1xf32>
    %147 = vector.broadcast %139 : vector<32x1xf32> to vector<32x32xf32>
    %148 = arith.subf %131, %147 : vector<32x32xf32>
    %cst_60 = arith.constant 9.99999996E-13 : f32
    %149 = vector.broadcast %cst_60 : f32 to vector<32x1xf32>
    %150 = arith.addf %146, %149 : vector<32x1xf32>
    %151 = math.rsqrt %150 : vector<32x1xf32>
    %152 = vector.broadcast %151 : vector<32x1xf32> to vector<32x32xf32>
    %153 = arith.mulf %148, %152 : vector<32x32xf32>
    %154 = vector.broadcast %133 : vector<1x32xf32> to vector<32x32xf32>
    %155 = arith.mulf %153, %154 : vector<32x32xf32>
    %156 = vector.broadcast %135 : vector<1x32xf32> to vector<32x32xf32>
    %157 = arith.addf %155, %156 : vector<32x32xf32>
    %158 = arith.truncf %157 : vector<32x32xf32> to vector<32x32xbf16>
    %c0_61 = arith.constant 0 : index
    %c0_62 = arith.constant 0 : index
    %c0_63 = arith.constant 0 : index
    %159 = vector.load %arg12[%c0_61, %c0_62, %c0_63] : memref<2x32x64xbf16, #tpu.memory_space<vmem>>, vector<1x32x64xbf16>
    %160 = vector.shape_cast %159 : vector<1x32x64xbf16> to vector<32x64xbf16>
    %cst_64 = arith.constant dense<0.000000e+00> : vector<32x64xf32>
    %161 = tpu.matmul %158, %160, %cst_64 {dimension_numbers = #tpu.dot_dimension_numbers<[1], [0], [0], [1], [0, 0, 1, 1], [], []>} : vector<32x32xbf16>, vector<32x64xbf16>, vector<32x64xf32> -> vector<32x64xf32>
    %c0_65 = arith.constant 0 : index
    %c0_66 = arith.constant 0 : index
    %c0_67 = arith.constant 0 : index
    %162 = vector.load %arg13[%c0_65, %c0_66, %c0_67] : memref<2x1x64xf32, #tpu.memory_space<vmem>>, vector<1x1x64xf32>
    %163 = vector.shape_cast %162 : vector<1x1x64xf32> to vector<1x64xf32>
    %164 = vector.broadcast %163 : vector<1x64xf32> to vector<32x64xf32>
    %165 = arith.addf %161, %164 : vector<32x64xf32>
    %cst_68 = arith.constant 5.000000e-01 : f32
    %166 = vector.broadcast %cst_68 : f32 to vector<32x64xf32>
    %167 = arith.mulf %166, %165 : vector<32x64xf32>
    %cst_69 = arith.constant 4.471500e-02 : f32
    %168 = vector.broadcast %cst_69 : f32 to vector<32x64xf32>
    %169 = arith.mulf %168, %165 : vector<32x64xf32>
    %170 = arith.mulf %169, %165 : vector<32x64xf32>
    %171 = arith.mulf %170, %165 : vector<32x64xf32>
    %172 = arith.addf %165, %171 : vector<32x64xf32>
    %cst_70 = arith.constant 0.797884583 : f32
    %173 = vector.broadcast %cst_70 : f32 to vector<32x64xf32>
    %174 = arith.mulf %173, %172 : vector<32x64xf32>
    %175 = math.tanh %174 : vector<32x64xf32>
    %cst_71 = arith.constant 1.000000e+00 : f32
    %176 = vector.broadcast %cst_71 : f32 to vector<32x64xf32>
    %177 = arith.addf %176, %175 : vector<32x64xf32>
    %178 = arith.mulf %167, %177 : vector<32x64xf32>
    %179 = arith.truncf %178 : vector<32x64xf32> to vector<32x64xbf16>
    %c0_72 = arith.constant 0 : index
    %c0_73 = arith.constant 0 : index
    %c0_74 = arith.constant 0 : index
    %180 = vector.load %arg14[%c0_72, %c0_73, %c0_74] : memref<2x64x32xbf16, #tpu.memory_space<vmem>>, vector<1x64x32xbf16>
    %181 = vector.shape_cast %180 : vector<1x64x32xbf16> to vector<64x32xbf16>
    %cst_75 = arith.constant dense<0.000000e+00> : vector<32x32xf32>
    %182 = tpu.matmul %179, %181, %cst_75 {dimension_numbers = #tpu.dot_dimension_numbers<[1], [0], [0], [1], [0, 0, 1, 1], [], []>} : vector<32x64xbf16>, vector<64x32xbf16>, vector<32x32xf32> -> vector<32x32xf32>
    %c0_76 = arith.constant 0 : index
    %c0_77 = arith.constant 0 : index
    %c0_78 = arith.constant 0 : index
    %183 = vector.load %arg15[%c0_76, %c0_77, %c0_78] : memref<2x1x32xf32, #tpu.memory_space<vmem>>, vector<1x1x32xf32>
    %184 = vector.shape_cast %183 : vector<1x1x32xf32> to vector<1x32xf32>
    %185 = vector.broadcast %184 : vector<1x32xf32> to vector<32x32xf32>
    %186 = arith.addf %182, %185 : vector<32x32xf32>
    %187 = arith.addf %186, %157 : vector<32x32xf32>
    %c0_79 = arith.constant 0 : index
    %c0_80 = arith.constant 0 : index
    %c0_81 = arith.constant 0 : index
    %188 = vector.load %arg16[%c0_79, %c0_80, %c0_81] : memref<2x1x32xf32, #tpu.memory_space<vmem>>, vector<1x1x32xf32>
    %189 = vector.shape_cast %188 : vector<1x1x32xf32> to vector<1x32xf32>
    %c0_82 = arith.constant 0 : index
    %c0_83 = arith.constant 0 : index
    %c0_84 = arith.constant 0 : index
    %190 = vector.load %arg17[%c0_82, %c0_83, %c0_84] : memref<2x1x32xf32, #tpu.memory_space<vmem>>, vector<1x1x32xf32>
    %191 = vector.shape_cast %190 : vector<1x1x32xf32> to vector<1x32xf32>
    %cst_85 = arith.constant dense<0.000000e+00> : vector<32xf32>
    %192 = vector.multi_reduction <add>, %187, %cst_85 [1] : vector<32x32xf32> to vector<32xf32>
    %193 = vector.shape_cast %192 : vector<32xf32> to vector<32x1xf32>
    %cst_86 = arith.constant 3.200000e+01 : f32
    %194 = vector.broadcast %cst_86 : f32 to vector<32x1xf32>
    %195 = arith.divf %193, %194 : vector<32x1xf32>
    %196 = arith.mulf %187, %187 : vector<32x32xf32>
    %cst_87 = arith.constant dense<0.000000e+00> : vector<32xf32>
    %197 = vector.multi_reduction <add>, %196, %cst_87 [1] : vector<32x32xf32> to vector<32xf32>
    %198 = vector.shape_cast %197 : vector<32xf32> to vector<32x1xf32>
    %cst_88 = arith.constant 3.200000e+01 : f32
    %199 = vector.broadcast %cst_88 : f32 to vector<32x1xf32>
    %200 = arith.divf %198, %199 : vector<32x1xf32>
    %201 = arith.mulf %195, %195 : vector<32x1xf32>
    %202 = arith.subf %200, %201 : vector<32x1xf32>
    %203 = vector.broadcast %195 : vector<32x1xf32> to vector<32x32xf32>
    %204 = arith.subf %187, %203 : vector<32x32xf32>
    %cst_89 = arith.constant 9.99999996E-13 : f32
    %205 = vector.broadcast %cst_89 : f32 to vector<32x1xf32>
    %206 = arith.addf %202, %205 : vector<32x1xf32>
    %207 = math.rsqrt %206 : vector<32x1xf32>
    %208 = vector.broadcast %207 : vector<32x1xf32> to vector<32x32xf32>
    %209 = arith.mulf %204, %208 : vector<32x32xf32>
    %210 = vector.broadcast %189 : vector<1x32xf32> to vector<32x32xf32>
    %211 = arith.mulf %209, %210 : vector<32x32xf32>
    %212 = vector.broadcast %191 : vector<1x32xf32> to vector<32x32xf32>
    %213 = arith.addf %211, %212 : vector<32x32xf32>
    %214 = arith.truncf %213 : vector<32x32xf32> to vector<32x32xbf16>
    %c1 = arith.constant 1 : index
    %c0_90 = arith.constant 0 : index
    %c0_91 = arith.constant 0 : index
    %215 = vector.load %arg6[%c1, %c0_90, %c0_91] : memref<2x32x96xbf16, #tpu.memory_space<vmem>>, vector<1x32x96xbf16>
    %216 = vector.shape_cast %215 : vector<1x32x96xbf16> to vector<32x96xbf16>
    %cst_92 = arith.constant dense<0.000000e+00> : vector<32x96xf32>
    %217 = tpu.matmul %214, %216, %cst_92 {dimension_numbers = #tpu.dot_dimension_numbers<[1], [0], [0], [1], [0, 0, 1, 1], [], []>} : vector<32x32xbf16>, vector<32x96xbf16>, vector<32x96xf32> -> vector<32x96xf32>
    %c1_93 = arith.constant 1 : index
    %c0_94 = arith.constant 0 : index
    %c0_95 = arith.constant 0 : index
    %218 = vector.load %arg7[%c1_93, %c0_94, %c0_95] : memref<2x1x96xf32, #tpu.memory_space<vmem>>, vector<1x1x96xf32>
    %219 = vector.shape_cast %218 : vector<1x1x96xf32> to vector<1x96xf32>
    %220 = vector.broadcast %219 : vector<1x96xf32> to vector<32x96xf32>
    %221 = arith.addf %217, %220 : vector<32x96xf32>
    %222 = arith.truncf %221 : vector<32x96xf32> to vector<32x96xbf16>
    %223 = vector.extract_strided_slice %222 {offsets = [0, 0], sizes = [32, 8], strides = [1, 1]} : vector<32x96xbf16> to vector<32x8xbf16>
    %224 = vector.extract_strided_slice %222 {offsets = [0, 32], sizes = [32, 8], strides = [1, 1]} : vector<32x96xbf16> to vector<32x8xbf16>
    %225 = vector.extract_strided_slice %222 {offsets = [0, 64], sizes = [32, 8], strides = [1, 1]} : vector<32x96xbf16> to vector<32x8xbf16>
    %cst_96 = arith.constant dense<0.000000e+00> : vector<32x32xf32>
    %226 = tpu.matmul %223, %224, %cst_96 {dimension_numbers = #tpu.dot_dimension_numbers<[1], [1], [0], [0], [0, 0, 1, 0], [], []>} : vector<32x8xbf16>, vector<32x8xbf16>, vector<32x32xf32> -> vector<32x32xf32>
    %cst_97 = arith.constant 0.353553385 : f32
    %227 = vector.broadcast %cst_97 : f32 to vector<32x32xf32>
    %228 = arith.mulf %226, %227 : vector<32x32xf32>
    %229 = arith.addf %228, %0 : vector<32x32xf32>
    %cst_98 = arith.constant dense<0xFF800000> : vector<32xf32>
    %230 = vector.multi_reduction <maximumf>, %229, %cst_98 [1] : vector<32x32xf32> to vector<32xf32>
    %231 = vector.shape_cast %230 : vector<32xf32> to vector<32x1xf32>
    %232 = vector.broadcast %231 : vector<32x1xf32> to vector<32x32xf32>
    %233 = arith.subf %229, %232 : vector<32x32xf32>
    %234 = math.exp %233 : vector<32x32xf32>
    %cst_99 = arith.constant dense<0.000000e+00> : vector<32xf32>
    %235 = vector.multi_reduction <add>, %234, %cst_99 [1] : vector<32x32xf32> to vector<32xf32>
    %236 = vector.shape_cast %235 : vector<32xf32> to vector<32x1xf32>
    %237 = tpu.reciprocal %236 {approx = true} : vector<32x1xf32> -> vector<32x1xf32>
    %238 = vector.broadcast %237 : vector<32x1xf32> to vector<32x32xf32>
    %239 = arith.mulf %234, %238 : vector<32x32xf32>
    %240 = arith.truncf %239 : vector<32x32xf32> to vector<32x32xbf16>
    %cst_100 = arith.constant dense<0.000000e+00> : vector<32x8xf32>
    %241 = tpu.matmul %240, %225, %cst_100 {dimension_numbers = #tpu.dot_dimension_numbers<[1], [0], [0], [1], [0, 0, 1, 1], [], []>} : vector<32x32xbf16>, vector<32x8xbf16>, vector<32x8xf32> -> vector<32x8xf32>
    %242 = vector.extract_strided_slice %222 {offsets = [0, 8], sizes = [32, 8], strides = [1, 1]} : vector<32x96xbf16> to vector<32x8xbf16>
    %243 = vector.extract_strided_slice %222 {offsets = [0, 40], sizes = [32, 8], strides = [1, 1]} : vector<32x96xbf16> to vector<32x8xbf16>
    %244 = vector.extract_strided_slice %222 {offsets = [0, 72], sizes = [32, 8], strides = [1, 1]} : vector<32x96xbf16> to vector<32x8xbf16>
    %cst_101 = arith.constant dense<0.000000e+00> : vector<32x32xf32>
    %245 = tpu.matmul %242, %243, %cst_101 {dimension_numbers = #tpu.dot_dimension_numbers<[1], [1], [0], [0], [0, 0, 1, 0], [], []>} : vector<32x8xbf16>, vector<32x8xbf16>, vector<32x32xf32> -> vector<32x32xf32>
    %cst_102 = arith.constant 0.353553385 : f32
    %246 = vector.broadcast %cst_102 : f32 to vector<32x32xf32>
    %247 = arith.mulf %245, %246 : vector<32x32xf32>
    %248 = arith.addf %247, %0 : vector<32x32xf32>
    %cst_103 = arith.constant dense<0xFF800000> : vector<32xf32>
    %249 = vector.multi_reduction <maximumf>, %248, %cst_103 [1] : vector<32x32xf32> to vector<32xf32>
    %250 = vector.shape_cast %249 : vector<32xf32> to vector<32x1xf32>
    %251 = vector.broadcast %250 : vector<32x1xf32> to vector<32x32xf32>
    %252 = arith.subf %248, %251 : vector<32x32xf32>
    %253 = math.exp %252 : vector<32x32xf32>
    %cst_104 = arith.constant dense<0.000000e+00> : vector<32xf32>
    %254 = vector.multi_reduction <add>, %253, %cst_104 [1] : vector<32x32xf32> to vector<32xf32>
    %255 = vector.shape_cast %254 : vector<32xf32> to vector<32x1xf32>
    %256 = tpu.reciprocal %255 {approx = true} : vector<32x1xf32> -> vector<32x1xf32>
    %257 = vector.broadcast %256 : vector<32x1xf32> to vector<32x32xf32>
    %258 = arith.mulf %253, %257 : vector<32x32xf32>
    %259 = arith.truncf %258 : vector<32x32xf32> to vector<32x32xbf16>
    %cst_105 = arith.constant dense<0.000000e+00> : vector<32x8xf32>
    %260 = tpu.matmul %259, %244, %cst_105 {dimension_numbers = #tpu.dot_dimension_numbers<[1], [0], [0], [1], [0, 0, 1, 1], [], []>} : vector<32x32xbf16>, vector<32x8xbf16>, vector<32x8xf32> -> vector<32x8xf32>
    %261 = vector.extract_strided_slice %222 {offsets = [0, 16], sizes = [32, 8], strides = [1, 1]} : vector<32x96xbf16> to vector<32x8xbf16>
    %262 = vector.extract_strided_slice %222 {offsets = [0, 48], sizes = [32, 8], strides = [1, 1]} : vector<32x96xbf16> to vector<32x8xbf16>
    %263 = vector.extract_strided_slice %222 {offsets = [0, 80], sizes = [32, 8], strides = [1, 1]} : vector<32x96xbf16> to vector<32x8xbf16>
    %cst_106 = arith.constant dense<0.000000e+00> : vector<32x32xf32>
    %264 = tpu.matmul %261, %262, %cst_106 {dimension_numbers = #tpu.dot_dimension_numbers<[1], [1], [0], [0], [0, 0, 1, 0], [], []>} : vector<32x8xbf16>, vector<32x8xbf16>, vector<32x32xf32> -> vector<32x32xf32>
    %cst_107 = arith.constant 0.353553385 : f32
    %265 = vector.broadcast %cst_107 : f32 to vector<32x32xf32>
    %266 = arith.mulf %264, %265 : vector<32x32xf32>
    %267 = arith.addf %266, %0 : vector<32x32xf32>
    %cst_108 = arith.constant dense<0xFF800000> : vector<32xf32>
    %268 = vector.multi_reduction <maximumf>, %267, %cst_108 [1] : vector<32x32xf32> to vector<32xf32>
    %269 = vector.shape_cast %268 : vector<32xf32> to vector<32x1xf32>
    %270 = vector.broadcast %269 : vector<32x1xf32> to vector<32x32xf32>
    %271 = arith.subf %267, %270 : vector<32x32xf32>
    %272 = math.exp %271 : vector<32x32xf32>
    %cst_109 = arith.constant dense<0.000000e+00> : vector<32xf32>
    %273 = vector.multi_reduction <add>, %272, %cst_109 [1] : vector<32x32xf32> to vector<32xf32>
    %274 = vector.shape_cast %273 : vector<32xf32> to vector<32x1xf32>
    %275 = tpu.reciprocal %274 {approx = true} : vector<32x1xf32> -> vector<32x1xf32>
    %276 = vector.broadcast %275 : vector<32x1xf32> to vector<32x32xf32>
    %277 = arith.mulf %272, %276 : vector<32x32xf32>
    %278 = arith.truncf %277 : vector<32x32xf32> to vector<32x32xbf16>
    %cst_110 = arith.constant dense<0.000000e+00> : vector<32x8xf32>
    %279 = tpu.matmul %278, %263, %cst_110 {dimension_numbers = #tpu.dot_dimension_numbers<[1], [0], [0], [1], [0, 0, 1, 1], [], []>} : vector<32x32xbf16>, vector<32x8xbf16>, vector<32x8xf32> -> vector<32x8xf32>
    %280 = vector.extract_strided_slice %222 {offsets = [0, 24], sizes = [32, 8], strides = [1, 1]} : vector<32x96xbf16> to vector<32x8xbf16>
    %281 = vector.extract_strided_slice %222 {offsets = [0, 56], sizes = [32, 8], strides = [1, 1]} : vector<32x96xbf16> to vector<32x8xbf16>
    %282 = vector.extract_strided_slice %222 {offsets = [0, 88], sizes = [32, 8], strides = [1, 1]} : vector<32x96xbf16> to vector<32x8xbf16>
    %cst_111 = arith.constant dense<0.000000e+00> : vector<32x32xf32>
    %283 = tpu.matmul %280, %281, %cst_111 {dimension_numbers = #tpu.dot_dimension_numbers<[1], [1], [0], [0], [0, 0, 1, 0], [], []>} : vector<32x8xbf16>, vector<32x8xbf16>, vector<32x32xf32> -> vector<32x32xf32>
    %cst_112 = arith.constant 0.353553385 : f32
    %284 = vector.broadcast %cst_112 : f32 to vector<32x32xf32>
    %285 = arith.mulf %283, %284 : vector<32x32xf32>
    %286 = arith.addf %285, %0 : vector<32x32xf32>
    %cst_113 = arith.constant dense<0xFF800000> : vector<32xf32>
    %287 = vector.multi_reduction <maximumf>, %286, %cst_113 [1] : vector<32x32xf32> to vector<32xf32>
    %288 = vector.shape_cast %287 : vector<32xf32> to vector<32x1xf32>
    %289 = vector.broadcast %288 : vector<32x1xf32> to vector<32x32xf32>
    %290 = arith.subf %286, %289 : vector<32x32xf32>
    %291 = math.exp %290 : vector<32x32xf32>
    %cst_114 = arith.constant dense<0.000000e+00> : vector<32xf32>
    %292 = vector.multi_reduction <add>, %291, %cst_114 [1] : vector<32x32xf32> to vector<32xf32>
    %293 = vector.shape_cast %292 : vector<32xf32> to vector<32x1xf32>
    %294 = tpu.reciprocal %293 {approx = true} : vector<32x1xf32> -> vector<32x1xf32>
    %295 = vector.broadcast %294 : vector<32x1xf32> to vector<32x32xf32>
    %296 = arith.mulf %291, %295 : vector<32x32xf32>
    %297 = arith.truncf %296 : vector<32x32xf32> to vector<32x32xbf16>
    %cst_115 = arith.constant dense<0.000000e+00> : vector<32x8xf32>
    %298 = tpu.matmul %297, %282, %cst_115 {dimension_numbers = #tpu.dot_dimension_numbers<[1], [0], [0], [1], [0, 0, 1, 1], [], []>} : vector<32x32xbf16>, vector<32x8xbf16>, vector<32x8xf32> -> vector<32x8xf32>
    %299 = tpu.concatenate %241, %260, %279, %298 in 1 : vector<32x8xf32>, vector<32x8xf32>, vector<32x8xf32>, vector<32x8xf32> -> vector<32x32xf32>
    %300 = arith.truncf %299 : vector<32x32xf32> to vector<32x32xbf16>
    %c1_116 = arith.constant 1 : index
    %c0_117 = arith.constant 0 : index
    %c0_118 = arith.constant 0 : index
    %301 = vector.load %arg8[%c1_116, %c0_117, %c0_118] : memref<2x32x32xbf16, #tpu.memory_space<vmem>>, vector<1x32x32xbf16>
    %302 = vector.shape_cast %301 : vector<1x32x32xbf16> to vector<32x32xbf16>
    %cst_119 = arith.constant dense<0.000000e+00> : vector<32x32xf32>
    %303 = tpu.matmul %300, %302, %cst_119 {dimension_numbers = #tpu.dot_dimension_numbers<[1], [0], [0], [1], [0, 0, 1, 1], [], []>} : vector<32x32xbf16>, vector<32x32xbf16>, vector<32x32xf32> -> vector<32x32xf32>
    %c1_120 = arith.constant 1 : index
    %c0_121 = arith.constant 0 : index
    %c0_122 = arith.constant 0 : index
    %304 = vector.load %arg9[%c1_120, %c0_121, %c0_122] : memref<2x1x32xf32, #tpu.memory_space<vmem>>, vector<1x1x32xf32>
    %305 = vector.shape_cast %304 : vector<1x1x32xf32> to vector<1x32xf32>
    %306 = vector.broadcast %305 : vector<1x32xf32> to vector<32x32xf32>
    %307 = arith.addf %303, %306 : vector<32x32xf32>
    %308 = arith.addf %307, %213 : vector<32x32xf32>
    %c1_123 = arith.constant 1 : index
    %c0_124 = arith.constant 0 : index
    %c0_125 = arith.constant 0 : index
    %309 = vector.load %arg10[%c1_123, %c0_124, %c0_125] : memref<2x1x32xf32, #tpu.memory_space<vmem>>, vector<1x1x32xf32>
    %310 = vector.shape_cast %309 : vector<1x1x32xf32> to vector<1x32xf32>
    %c1_126 = arith.constant 1 : index
    %c0_127 = arith.constant 0 : index
    %c0_128 = arith.constant 0 : index
    %311 = vector.load %arg11[%c1_126, %c0_127, %c0_128] : memref<2x1x32xf32, #tpu.memory_space<vmem>>, vector<1x1x32xf32>
    %312 = vector.shape_cast %311 : vector<1x1x32xf32> to vector<1x32xf32>
    %cst_129 = arith.constant dense<0.000000e+00> : vector<32xf32>
    %313 = vector.multi_reduction <add>, %308, %cst_129 [1] : vector<32x32xf32> to vector<32xf32>
    %314 = vector.shape_cast %313 : vector<32xf32> to vector<32x1xf32>
    %cst_130 = arith.constant 3.200000e+01 : f32
    %315 = vector.broadcast %cst_130 : f32 to vector<32x1xf32>
    %316 = arith.divf %314, %315 : vector<32x1xf32>
    %317 = arith.mulf %308, %308 : vector<32x32xf32>
    %cst_131 = arith.constant dense<0.000000e+00> : vector<32xf32>
    %318 = vector.multi_reduction <add>, %317, %cst_131 [1] : vector<32x32xf32> to vector<32xf32>
    %319 = vector.shape_cast %318 : vector<32xf32> to vector<32x1xf32>
    %cst_132 = arith.constant 3.200000e+01 : f32
    %320 = vector.broadcast %cst_132 : f32 to vector<32x1xf32>
    %321 = arith.divf %319, %320 : vector<32x1xf32>
    %322 = arith.mulf %316, %316 : vector<32x1xf32>
    %323 = arith.subf %321, %322 : vector<32x1xf32>
    %324 = vector.broadcast %316 : vector<32x1xf32> to vector<32x32xf32>
    %325 = arith.subf %308, %324 : vector<32x32xf32>
    %cst_133 = arith.constant 9.99999996E-13 : f32
    %326 = vector.broadcast %cst_133 : f32 to vector<32x1xf32>
    %327 = arith.addf %323, %326 : vector<32x1xf32>
    %328 = math.rsqrt %327 : vector<32x1xf32>
    %329 = vector.broadcast %328 : vector<32x1xf32> to vector<32x32xf32>
    %330 = arith.mulf %325, %329 : vector<32x32xf32>
    %331 = vector.broadcast %310 : vector<1x32xf32> to vector<32x32xf32>
    %332 = arith.mulf %330, %331 : vector<32x32xf32>
    %333 = vector.broadcast %312 : vector<1x32xf32> to vector<32x32xf32>
    %334 = arith.addf %332, %333 : vector<32x32xf32>
    %335 = arith.truncf %334 : vector<32x32xf32> to vector<32x32xbf16>
    %c1_134 = arith.constant 1 : index
    %c0_135 = arith.constant 0 : index
    %c0_136 = arith.constant 0 : index
    %336 = vector.load %arg12[%c1_134, %c0_135, %c0_136] : memref<2x32x64xbf16, #tpu.memory_space<vmem>>, vector<1x32x64xbf16>
    %337 = vector.shape_cast %336 : vector<1x32x64xbf16> to vector<32x64xbf16>
    %cst_137 = arith.constant dense<0.000000e+00> : vector<32x64xf32>
    %338 = tpu.matmul %335, %337, %cst_137 {dimension_numbers = #tpu.dot_dimension_numbers<[1], [0], [0], [1], [0, 0, 1, 1], [], []>} : vector<32x32xbf16>, vector<32x64xbf16>, vector<32x64xf32> -> vector<32x64xf32>
    %c1_138 = arith.constant 1 : index
    %c0_139 = arith.constant 0 : index
    %c0_140 = arith.constant 0 : index
    %339 = vector.load %arg13[%c1_138, %c0_139, %c0_140] : memref<2x1x64xf32, #tpu.memory_space<vmem>>, vector<1x1x64xf32>
    %340 = vector.shape_cast %339 : vector<1x1x64xf32> to vector<1x64xf32>
    %341 = vector.broadcast %340 : vector<1x64xf32> to vector<32x64xf32>
    %342 = arith.addf %338, %341 : vector<32x64xf32>
    %cst_141 = arith.constant 5.000000e-01 : f32
    %343 = vector.broadcast %cst_141 : f32 to vector<32x64xf32>
    %344 = arith.mulf %343, %342 : vector<32x64xf32>
    %cst_142 = arith.constant 4.471500e-02 : f32
    %345 = vector.broadcast %cst_142 : f32 to vector<32x64xf32>
    %346 = arith.mulf %345, %342 : vector<32x64xf32>
    %347 = arith.mulf %346, %342 : vector<32x64xf32>
    %348 = arith.mulf %347, %342 : vector<32x64xf32>
    %349 = arith.addf %342, %348 : vector<32x64xf32>
    %cst_143 = arith.constant 0.797884583 : f32
    %350 = vector.broadcast %cst_143 : f32 to vector<32x64xf32>
    %351 = arith.mulf %350, %349 : vector<32x64xf32>
    %352 = math.tanh %351 : vector<32x64xf32>
    %cst_144 = arith.constant 1.000000e+00 : f32
    %353 = vector.broadcast %cst_144 : f32 to vector<32x64xf32>
    %354 = arith.addf %353, %352 : vector<32x64xf32>
    %355 = arith.mulf %344, %354 : vector<32x64xf32>
    %356 = arith.truncf %355 : vector<32x64xf32> to vector<32x64xbf16>
    %c1_145 = arith.constant 1 : index
    %c0_146 = arith.constant 0 : index
    %c0_147 = arith.constant 0 : index
    %357 = vector.load %arg14[%c1_145, %c0_146, %c0_147] : memref<2x64x32xbf16, #tpu.memory_space<vmem>>, vector<1x64x32xbf16>
    %358 = vector.shape_cast %357 : vector<1x64x32xbf16> to vector<64x32xbf16>
    %cst_148 = arith.constant dense<0.000000e+00> : vector<32x32xf32>
    %359 = tpu.matmul %356, %358, %cst_148 {dimension_numbers = #tpu.dot_dimension_numbers<[1], [0], [0], [1], [0, 0, 1, 1], [], []>} : vector<32x64xbf16>, vector<64x32xbf16>, vector<32x32xf32> -> vector<32x32xf32>
    %c1_149 = arith.constant 1 : index
    %c0_150 = arith.constant 0 : index
    %c0_151 = arith.constant 0 : index
    %360 = vector.load %arg15[%c1_149, %c0_150, %c0_151] : memref<2x1x32xf32, #tpu.memory_space<vmem>>, vector<1x1x32xf32>
    %361 = vector.shape_cast %360 : vector<1x1x32xf32> to vector<1x32xf32>
    %362 = vector.broadcast %361 : vector<1x32xf32> to vector<32x32xf32>
    %363 = arith.addf %359, %362 : vector<32x32xf32>
    %364 = arith.addf %363, %334 : vector<32x32xf32>
    %c1_152 = arith.constant 1 : index
    %c0_153 = arith.constant 0 : index
    %c0_154 = arith.constant 0 : index
    %365 = vector.load %arg16[%c1_152, %c0_153, %c0_154] : memref<2x1x32xf32, #tpu.memory_space<vmem>>, vector<1x1x32xf32>
    %366 = vector.shape_cast %365 : vector<1x1x32xf32> to vector<1x32xf32>
    %c1_155 = arith.constant 1 : index
    %c0_156 = arith.constant 0 : index
    %c0_157 = arith.constant 0 : index
    %367 = vector.load %arg17[%c1_155, %c0_156, %c0_157] : memref<2x1x32xf32, #tpu.memory_space<vmem>>, vector<1x1x32xf32>
    %368 = vector.shape_cast %367 : vector<1x1x32xf32> to vector<1x32xf32>
    %cst_158 = arith.constant dense<0.000000e+00> : vector<32xf32>
    %369 = vector.multi_reduction <add>, %364, %cst_158 [1] : vector<32x32xf32> to vector<32xf32>
    %370 = vector.shape_cast %369 : vector<32xf32> to vector<32x1xf32>
    %cst_159 = arith.constant 3.200000e+01 : f32
    %371 = vector.broadcast %cst_159 : f32 to vector<32x1xf32>
    %372 = arith.divf %370, %371 : vector<32x1xf32>
    %373 = arith.mulf %364, %364 : vector<32x32xf32>
    %cst_160 = arith.constant dense<0.000000e+00> : vector<32xf32>
    %374 = vector.multi_reduction <add>, %373, %cst_160 [1] : vector<32x32xf32> to vector<32xf32>
    %375 = vector.shape_cast %374 : vector<32xf32> to vector<32x1xf32>
    %cst_161 = arith.constant 3.200000e+01 : f32
    %376 = vector.broadcast %cst_161 : f32 to vector<32x1xf32>
    %377 = arith.divf %375, %376 : vector<32x1xf32>
    %378 = arith.mulf %372, %372 : vector<32x1xf32>
    %379 = arith.subf %377, %378 : vector<32x1xf32>
    %380 = vector.broadcast %372 : vector<32x1xf32> to vector<32x32xf32>
    %381 = arith.subf %364, %380 : vector<32x32xf32>
    %cst_162 = arith.constant 9.99999996E-13 : f32
    %382 = vector.broadcast %cst_162 : f32 to vector<32x1xf32>
    %383 = arith.addf %379, %382 : vector<32x1xf32>
    %384 = math.rsqrt %383 : vector<32x1xf32>
    %385 = vector.broadcast %384 : vector<32x1xf32> to vector<32x32xf32>
    %386 = arith.mulf %381, %385 : vector<32x32xf32>
    %387 = vector.broadcast %366 : vector<1x32xf32> to vector<32x32xf32>
    %388 = arith.mulf %386, %387 : vector<32x32xf32>
    %389 = vector.broadcast %368 : vector<1x32xf32> to vector<32x32xf32>
    %390 = arith.addf %388, %389 : vector<32x32xf32>
    %c0_163 = arith.constant 0 : index
    %c0_164 = arith.constant 0 : index
    %391 = vector.load %arg28[%c0_163, %c0_164] : memref<32x32xf32, #tpu.memory_space<vmem>>, vector<32x32xf32>
    tpu.vector_store %arg28[%c0_163, %c0_164], %390 {strides = array<i32>} : memref<32x32xf32, #tpu.memory_space<vmem>>, vector<32x32xf32>,
    %c0_165 = arith.constant 0 : index
    %c0_166 = arith.constant 0 : index
    %392 = tpu.strided_load %arg28[%c0_165, %c0_166] {strides = array<i32: 8, 1>} : memref<32x32xf32, #tpu.memory_space<vmem>>, vector<4x32xf32>
    %393 = arith.truncf %392 : vector<4x32xf32> to vector<4x32xbf16>
    %c0_167 = arith.constant 0 : index
    %c0_168 = arith.constant 0 : index
    %394 = vector.load %arg18[%c0_167, %c0_168] : memref<32x32xbf16, #tpu.memory_space<vmem>>, vector<32x32xbf16>
    %cst_169 = arith.constant dense<0.000000e+00> : vector<4x32xf32>
    %395 = tpu.matmul %393, %394, %cst_169 {dimension_numbers = #tpu.dot_dimension_numbers<[1], [0], [0], [1], [0, 0, 1, 1], [], []>} : vector<4x32xbf16>, vector<32x32xbf16>, vector<4x32xf32> -> vector<4x32xf32>
    %c0_170 = arith.constant 0 : index
    %c0_171 = arith.constant 0 : index
    %396 = vector.load %arg19[%c0_170, %c0_171] : memref<1x32xf32, #tpu.memory_space<vmem>>, vector<1x32xf32>
    %397 = vector.broadcast %396 : vector<1x32xf32> to vector<4x32xf32>
    %398 = arith.addf %395, %397 : vector<4x32xf32>
    %399 = math.tanh %398 : vector<4x32xf32>
    %400 = vector.extract_strided_slice %399 {offsets = [0, 0], sizes = [2, 32], strides = [1, 1]} : vector<4x32xf32> to vector<2x32xf32>
    %401 = vector.extract_strided_slice %399 {offsets = [2, 0], sizes = [2, 32], strides = [1, 1]} : vector<4x32xf32> to vector<2x32xf32>
    %402 = arith.subf %400, %401 : vector<2x32xf32>
    %403 = math.absf %402 : vector<2x32xf32>
    %404 = arith.truncf %400 : vector<2x32xf32> to vector<2x32xbf16>
    %c0_172 = arith.constant 0 : index
    %c0_173 = arith.constant 0 : index
    %405 = vector.load %arg20[%c0_172, %c0_173] : memref<32x16xbf16, #tpu.memory_space<vmem>>, vector<32x16xbf16>
    %cst_174 = arith.constant dense<0.000000e+00> : vector<2x16xf32>
    %406 = tpu.matmul %404, %405, %cst_174 {dimension_numbers = #tpu.dot_dimension_numbers<[1], [0], [0], [1], [0, 0, 1, 1], [], []>} : vector<2x32xbf16>, vector<32x16xbf16>, vector<2x16xf32> -> vector<2x16xf32>
    %407 = arith.truncf %401 : vector<2x32xf32> to vector<2x32xbf16>
    %c0_175 = arith.constant 0 : index
    %c0_176 = arith.constant 0 : index
    %408 = vector.load %arg21[%c0_175, %c0_176] : memref<32x16xbf16, #tpu.memory_space<vmem>>, vector<32x16xbf16>
    %cst_177 = arith.constant dense<0.000000e+00> : vector<2x16xf32>
    %409 = tpu.matmul %407, %408, %cst_177 {dimension_numbers = #tpu.dot_dimension_numbers<[1], [0], [0], [1], [0, 0, 1, 1], [], []>} : vector<2x32xbf16>, vector<32x16xbf16>, vector<2x16xf32> -> vector<2x16xf32>
    %410 = arith.addf %406, %409 : vector<2x16xf32>
    %411 = arith.truncf %403 : vector<2x32xf32> to vector<2x32xbf16>
    %c0_178 = arith.constant 0 : index
    %c0_179 = arith.constant 0 : index
    %412 = vector.load %arg22[%c0_178, %c0_179] : memref<32x16xbf16, #tpu.memory_space<vmem>>, vector<32x16xbf16>
    %cst_180 = arith.constant dense<0.000000e+00> : vector<2x16xf32>
    %413 = tpu.matmul %411, %412, %cst_180 {dimension_numbers = #tpu.dot_dimension_numbers<[1], [0], [0], [1], [0, 0, 1, 1], [], []>} : vector<2x32xbf16>, vector<32x16xbf16>, vector<2x16xf32> -> vector<2x16xf32>
    %414 = arith.addf %410, %413 : vector<2x16xf32>
    %c0_181 = arith.constant 0 : index
    %c0_182 = arith.constant 0 : index
    %415 = vector.load %arg23[%c0_181, %c0_182] : memref<1x16xf32, #tpu.memory_space<vmem>>, vector<1x16xf32>
    %416 = vector.broadcast %415 : vector<1x16xf32> to vector<2x16xf32>
    %417 = arith.addf %414, %416 : vector<2x16xf32>
    %cst_183 = arith.constant 0.000000e+00 : f32
    %418 = vector.broadcast %cst_183 : f32 to vector<2x16xf32>
    %419 = arith.maximumf %417, %418 : vector<2x16xf32>
    %420 = arith.truncf %419 : vector<2x16xf32> to vector<2x16xbf16>
    %c0_184 = arith.constant 0 : index
    %c0_185 = arith.constant 0 : index
    %421 = vector.load %arg24[%c0_184, %c0_185] : memref<16x2xbf16, #tpu.memory_space<vmem>>, vector<16x2xbf16>
    %cst_186 = arith.constant dense<0.000000e+00> : vector<2x2xf32>
    %422 = tpu.matmul %420, %421, %cst_186 {dimension_numbers = #tpu.dot_dimension_numbers<[1], [0], [0], [1], [0, 0, 1, 1], [], []>} : vector<2x16xbf16>, vector<16x2xbf16>, vector<2x2xf32> -> vector<2x2xf32>
    %c0_187 = arith.constant 0 : index
    %c0_188 = arith.constant 0 : index
    %423 = vector.load %arg25[%c0_187, %c0_188] : memref<1x2xf32, #tpu.memory_space<vmem>>, vector<1x2xf32>
    %424 = vector.broadcast %423 : vector<1x2xf32> to vector<2x2xf32>
    %425 = arith.addf %422, %424 : vector<2x2xf32>
    %c0_189 = arith.constant 0 : index
    %c0_190 = arith.constant 0 : index
    %426 = vector.load %arg26[%c0_189, %c0_190] : memref<2x2xf32, #tpu.memory_space<vmem>>, vector<2x2xf32>
    tpu.vector_store %arg26[%c0_189, %c0_190], %425 {strides = array<i32>} : memref<2x2xf32, #tpu.memory_space<vmem>>, vector<2x2xf32>,
    %cst_191 = arith.constant dense<0xFF800000> : vector<2xf32>
    %427 = vector.multi_reduction <maximumf>, %425, %cst_191 [1] : vector<2x2xf32> to vector<2xf32>
    %428 = vector.shape_cast %427 : vector<2xf32> to vector<2x1xf32>
    %429 = vector.broadcast %428 : vector<2x1xf32> to vector<2x2xf32>
    %430 = arith.subf %425, %429 : vector<2x2xf32>
    %431 = math.exp %430 : vector<2x2xf32>
    %cst_192 = arith.constant dense<0.000000e+00> : vector<2xf32>
    %432 = vector.multi_reduction <add>, %431, %cst_192 [1] : vector<2x2xf32> to vector<2xf32>
    %433 = vector.shape_cast %432 : vector<2xf32> to vector<2x1xf32>
    %434 = vector.broadcast %433 : vector<2x1xf32> to vector<2x2xf32>
    %435 = arith.divf %431, %434 : vector<2x2xf32>
    %c0_193 = arith.constant 0 : index
    %c0_194 = arith.constant 0 : index
    %436 = vector.load %arg27[%c0_193, %c0_194] : memref<2x2xf32, #tpu.memory_space<vmem>>, vector<2x2xf32>
    tpu.vector_store %arg27[%c0_193, %c0_194], %435 {strides = array<i32>} : memref<2x2xf32, #tpu.memory_space<vmem>>, vector<2x2xf32>,
    return
  }
}

</mosaic_0001>

<llo_original>
// kernel: eq.12
$region0: #{eq.12}
  %s0 = inlined_call_operand.vmem [shape: s32[4,8], index: 0, kind: input, shape index: {}]
  %s1 = inlined_call_operand.vmem [shape: s32[32], index: 1, kind: output, shape index: {}]
  $region1: #{eq.12} parent=0
    #allocation0 [shape = 'u8[4096]{0}', space=vmem, size = 0x1000, scoped, tag = 'scoped mem for output reshape']
    #allocation1 [shape = 'u8[4096]{0}', space=vmem, size = 0x1000, scoped, tag = 'scoped mem for input reshape']
    %s3 = sshllo.u32 0, 4
    %v4 = vld [vmem:[%s0] sm:%s3]
    %5 = vst [vmem:[#allocation1] sm:%s3] %v4
    %v6 = vld [vmem:[#allocation1] sm:$0x1]
    %vm7 = vcmask 64512
    %8 = vst.msk [vmem:[#allocation0] sm:$0x1] %vm7, %v6
    %s9 = scalar_lea.vmem [#allocation1], 3
    %v10 = vld [vmem:[%s9] sm:$0x1]
    %11 = vrot.lane.b32.xlu0 %v10, 24
    %v12 = vpop.permute.xlu0 %11
    %vm13 = vcmask 261312
    %14 = vst.msk [vmem:[#allocation0] sm:$0x1] %vm13, %v12
    %s15 = scalar_lea.vmem [#allocation1], 2
    %v16 = vld [vmem:[%s15] sm:$0x1]
    %17 = vrot.lane.b32.xlu0 %v16, 16
    %v18 = vpop.permute.xlu0 %17
    %vm19 = vcmask 195712
    %20 = vst.msk [vmem:[#allocation0] sm:$0x1] %vm19, %v18
    %s21 = scalar_lea.vmem [#allocation1], 1
    %v22 = vld [vmem:[%s21] sm:$0x1]
    %23 = vrot.lane.b32.xlu0 %v22, 8
    %v24 = vpop.permute.xlu0 %23
    %vm25 = vcmask 130112
    %26 = vst.msk [vmem:[#allocation0] sm:$0x1] %vm25, %v24
    %s28 = sshllo.u32 0, 1
    %v30 = vld [vmem:[#allocation0] sm:%s28]
    %s31 = sshllo.u32 0, 1
    %32 = vst [vmem:[%s1] sm:%s31] %v30

// kernel: forward.1
$region0: #{forward.1}
  #allocation0 [shape = 'u32[]', space=smem, size = 0x4, offset = 0x4, fixed_abs, tag = 'smem constant byte address 0x4 - core index']
  #allocation1 [shape = 'u32[144,128]{1,0:T(1,128)}', space=vmem, size = 0x12000, scoped, tag = 'internal scratch']
  #allocation2 [shape = 'f32[32,32]{1,0:T(8,128)}', space=vmem, size = 0x4000, scoped, tag = 'scratch operand']
  %s0 = inlined_call_operand.vmem [shape: f32[32,32], index: 0, kind: input, shape index: {}]
  %s1 = inlined_call_operand.vmem [shape: s32[32,1], index: 1, kind: input, shape index: {}]
  %s2 = inlined_call_operand.vmem [shape: bf16[64,32], index: 2, kind: input, shape index: {}]
  %s3 = inlined_call_operand.vmem [shape: f32[1,32], index: 3, kind: input, shape index: {}]
  %s4 = inlined_call_operand.vmem [shape: f32[1,32], index: 4, kind: input, shape index: {}]
  %s5 = inlined_call_operand.vmem [shape: f32[1,32], index: 5, kind: input, shape index: {}]
  %s6 = inlined_call_operand.vmem [shape: bf16[2,32,96], index: 6, kind: input, shape index: {}]
  %s7 = inlined_call_operand.vmem [shape: f32[2,1,96], index: 7, kind: input, shape index: {}]
  %s8 = inlined_call_operand.vmem [shape: bf16[2,32,32], index: 8, kind: input, shape index: {}]
  %s9 = inlined_call_operand.vmem [shape: f32[2,1,32], index: 9, kind: input, shape index: {}]
  %s10 = inlined_call_operand.vmem [shape: f32[2,1,32], index: 10, kind: input, shape index: {}]
  %s11 = inlined_call_operand.vmem [shape: f32[2,1,32], index: 11, kind: input, shape index: {}]
  %s12 = inlined_call_operand.vmem [shape: bf16[2,32,64], index: 12, kind: input, shape index: {}]
  %s13 = inlined_call_operand.vmem [shape: f32[2,1,64], index: 13, kind: input, shape index: {}]
  %s14 = inlined_call_operand.vmem [shape: bf16[2,64,32], index: 14, kind: input, shape index: {}]
  %s15 = inlined_call_operand.vmem [shape: f32[2,1,32], index: 15, kind: input, shape index: {}]
  %s16 = inlined_call_operand.vmem [shape: f32[2,1,32], index: 16, kind: input, shape index: {}]
  %s17 = inlined_call_operand.vmem [shape: f32[2,1,32], index: 17, kind: input, shape index: {}]
  %s18 = inlined_call_operand.vmem [shape: bf16[32,32], index: 18, kind: input, shape index: {}]
  %s19 = inlined_call_operand.vmem [shape: f32[1,32], index: 19, kind: input, shape index: {}]
  %s20 = inlined_call_operand.vmem [shape: bf16[32,16], index: 20, kind: input, shape index: {}]
  %s21 = inlined_call_operand.vmem [shape: bf16[32,16], index: 21, kind: input, shape index: {}]
  %s22 = inlined_call_operand.vmem [shape: bf16[32,16], index: 22, kind: input, shape index: {}]
  %s23 = inlined_call_operand.vmem [shape: f32[1,16], index: 23, kind: input, shape index: {}]
  %s24 = inlined_call_operand.vmem [shape: bf16[16,2], index: 24, kind: input, shape index: {}]
  %s25 = inlined_call_operand.vmem [shape: f32[1,2], index: 25, kind: input, shape index: {}]
  %s26 = inlined_call_operand.hbm [shape: f32[2,2], index: 26, kind: output, shape index: {0}]
  %s27 = inlined_call_operand.hbm [shape: f32[2,2], index: 27, kind: output, shape index: {1}]
  %28 = xla_tuple %s26, %s27
  %s29 = sld [smem:[#allocation0]]
  $region122: #{forward.1} parent=0
    _
  %s31 = ssub.s32 1, %s29
  %s32 = scalar_select 0, %s31, %s29
  $region1: #{forward.1} parent=0
    #allocation3 [shape = 'u8[1024]{0}', space=vmem, size = 0x400, scoped, tag = 'output window, operand 0, single buffered']
    #allocation4 [shape = 's32[1]{0}', space=sflag, size = 0x4, scoped, tag = 'scoped memory for forward.1']
    #allocation5 [shape = 'u8[1024]{0}', space=vmem, size = 0x400, scoped, tag = 'output window, operand 1, single buffered']
    #allocation6 [shape = 's32[1]{0}', space=sflag, size = 0x4, scoped, tag = 'scoped memory for forward.1']
    %33 = vsyncpa [#allocation4], 0
    %34 = vsyncpa [#allocation6], 0
    // Predicated region
    $region2: #{forward.1} parent=1 // pred_check
      _
    $region3: #{forward.1} parent=1 // pred_check_branch
      %36 = sbr.rel (0) target = $region5
    $region4: #{forward.1} parent=1 // pred_region
      _
    $region5: #{forward.1} parent=1 // pred_fallthru
      _
    // Predicated region
    $region6: #{forward.1} parent=1 // pred_check
      _
    $region7: #{forward.1} parent=1 // pred_check_branch
      %38 = sbr.rel (0) target = $region9
    $region8: #{forward.1} parent=1 // pred_region
      _
    $region9: #{forward.1} parent=1 // pred_fallthru
      _
    // Predicated region
    $region10: #{forward.1} parent=1 // pred_check
      _
    $region11: #{forward.1} parent=1 // pred_check_branch
      %40 = sbr.rel (0) target = $region13
    $region12: #{forward.1} parent=1 // pred_region
      _
    $region13: #{forward.1} parent=1 // pred_fallthru
      _
    // Predicated region
    $region14: #{forward.1} parent=1 // pred_check
      _
    $region15: #{forward.1} parent=1 // pred_check_branch
      %42 = sbr.rel (0) target = $region17
    $region16: #{forward.1} parent=1 // pred_region
      _
    $region17: #{forward.1} parent=1 // pred_fallthru
      _
    // Predicated region
    $region18: #{forward.1} parent=1 // pred_check
      _
    $region19: #{forward.1} parent=1 // pred_check_branch
      %44 = sbr.rel (0) target = $region21
    $region20: #{forward.1} parent=1 // pred_region
      _
    $region21: #{forward.1} parent=1 // pred_fallthru
      _
    // Predicated region
    $region22: #{forward.1} parent=1 // pred_check
      _
    $region23: #{forward.1} parent=1 // pred_check_branch
      %46 = sbr.rel (0) target = $region25
    $region24: #{forward.1} parent=1 // pred_region
      _
    $region25: #{forward.1} parent=1 // pred_fallthru
      _
    // Predicated region
    $region26: #{forward.1} parent=1 // pred_check
      _
    $region27: #{forward.1} parent=1 // pred_check_branch
      %48 = sbr.rel (0) target = $region29
    $region28: #{forward.1} parent=1 // pred_region
      _
    $region29: #{forward.1} parent=1 // pred_fallthru
      _
    // Predicated region
    $region30: #{forward.1} parent=1 // pred_check
      _
    $region31: #{forward.1} parent=1 // pred_check_branch
      %50 = sbr.rel (0) target = $region33
    $region32: #{forward.1} parent=1 // pred_region
      _
    $region33: #{forward.1} parent=1 // pred_fallthru
      _
    // Predicated region
    $region34: #{forward.1} parent=1 // pred_check
      _
    $region35: #{forward.1} parent=1 // pred_check_branch
      %52 = sbr.rel (0) target = $region37
    $region36: #{forward.1} parent=1 // pred_region
      _
    $region37: #{forward.1} parent=1 // pred_fallthru
      _
    // Predicated region
    $region38: #{forward.1} parent=1 // pred_check
      _
    $region39: #{forward.1} parent=1 // pred_check_branch
      %54 = sbr.rel (0) target = $region41
    $region40: #{forward.1} parent=1 // pred_region
      _
    $region41: #{forward.1} parent=1 // pred_fallthru
      _
    // Predicated region
    $region42: #{forward.1} parent=1 // pred_check
      _
    $region43: #{forward.1} parent=1 // pred_check_branch
      %56 = sbr.rel (0) target = $region45
    $region44: #{forward.1} parent=1 // pred_region
      _
    $region45: #{forward.1} parent=1 // pred_fallthru
      _
    // Predicated region
    $region46: #{forward.1} parent=1 // pred_check
      _
    $region47: #{forward.1} parent=1 // pred_check_branch
      %58 = sbr.rel (0) target = $region49
    $region48: #{forward.1} parent=1 // pred_region
      _
    $region49: #{forward.1} parent=1 // pred_fallthru
      _
    // Predicated region
    $region50: #{forward.1} parent=1 // pred_check
      _
    $region51: #{forward.1} parent=1 // pred_check_branch
      %60 = sbr.rel (0) target = $region53
    $region52: #{forward.1} parent=1 // pred_region
      _
    $region53: #{forward.1} parent=1 // pred_fallthru
      _
    // Predicated region
    $region54: #{forward.1} parent=1 // pred_check
      _
    $region55: #{forward.1} parent=1 // pred_check_branch
      %62 = sbr.rel (0) target = $region57
    $region56: #{forward.1} parent=1 // pred_region
      _
    $region57: #{forward.1} parent=1 // pred_fallthru
      _
    // Predicated region
    $region58: #{forward.1} parent=1 // pred_check
      _
    $region59: #{forward.1} parent=1 // pred_check_branch
      %64 = sbr.rel (0) target = $region61
    $region60: #{forward.1} parent=1 // pred_region
      _
    $region61: #{forward.1} parent=1 // pred_fallthru
      _
    // Predicated region
    $region62: #{forward.1} parent=1 // pred_check
      _
    $region63: #{forward.1} parent=1 // pred_check_branch
      %66 = sbr.rel (0) target = $region65
    $region64: #{forward.1} parent=1 // pred_region
      _
    $region65: #{forward.1} parent=1 // pred_fallthru
      _
    // Predicated region
    $region66: #{forward.1} parent=1 // pred_check
      _
    $region67: #{forward.1} parent=1 // pred_check_branch
      %68 = sbr.rel (0) target = $region69
    $region68: #{forward.1} parent=1 // pred_region
      _
    $region69: #{forward.1} parent=1 // pred_fallthru
      _
    // Predicated region
    $region70: #{forward.1} parent=1 // pred_check
      _
    $region71: #{forward.1} parent=1 // pred_check_branch
      %70 = sbr.rel (0) target = $region73
    $region72: #{forward.1} parent=1 // pred_region
      _
    $region73: #{forward.1} parent=1 // pred_fallthru
      _
    // Predicated region
    $region74: #{forward.1} parent=1 // pred_check
      _
    $region75: #{forward.1} parent=1 // pred_check_branch
      %72 = sbr.rel (0) target = $region77
    $region76: #{forward.1} parent=1 // pred_region
      _
    $region77: #{forward.1} parent=1 // pred_fallthru
      _
    // Predicated region
    $region78: #{forward.1} parent=1 // pred_check
      _
    $region79: #{forward.1} parent=1 // pred_check_branch
      %74 = sbr.rel (0) target = $region81
    $region80: #{forward.1} parent=1 // pred_region
      _
    $region81: #{forward.1} parent=1 // pred_fallthru
      _
    // Predicated region
    $region82: #{forward.1} parent=1 // pred_check
      _
    $region83: #{forward.1} parent=1 // pred_check_branch
      %76 = sbr.rel (0) target = $region85
    $region84: #{forward.1} parent=1 // pred_region
      _
    $region85: #{forward.1} parent=1 // pred_fallthru
      _
    // Predicated region
    $region86: #{forward.1} parent=1 // pred_check
      _
    $region87: #{forward.1} parent=1 // pred_check_branch
      %78 = sbr.rel (0) target = $region89
    $region88: #{forward.1} parent=1 // pred_region
      _
    $region89: #{forward.1} parent=1 // pred_fallthru
      _
    // Predicated region
    $region90: #{forward.1} parent=1 // pred_check
      _
    $region91: #{forward.1} parent=1 // pred_check_branch
      %80 = sbr.rel (0) target = $region93
    $region92: #{forward.1} parent=1 // pred_region
      _
    $region93: #{forward.1} parent=1 // pred_fallthru
      _
    // Predicated region
    $region94: #{forward.1} parent=1 // pred_check
      _
    $region95: #{forward.1} parent=1 // pred_check_branch
      %82 = sbr.rel (0) target = $region97
    $region96: #{forward.1} parent=1 // pred_region
      _
    $region97: #{forward.1} parent=1 // pred_fallthru
      _
    // Predicated region
    $region98: #{forward.1} parent=1 // pred_check
      _
    $region99: #{forward.1} parent=1 // pred_check_branch
      %84 = sbr.rel (0) target = $region101
    $region100: #{forward.1} parent=1 // pred_region
      _
    $region101: #{forward.1} parent=1 // pred_fallthru
      _
    // Predicated region
    $region102: #{forward.1} parent=1 // pred_check
      _
    $region103: #{forward.1} parent=1 // pred_check_branch
      %86 = sbr.rel (0) target = $region105
    $region104: #{forward.1} parent=1 // pred_region
      _
    $region105: #{forward.1} parent=1 // pred_fallthru
      _
    %v88 = vld [vmem:[%s0] sm:$0xff]
    %v89 = vld [vmem:[%s0 + $0x8] sm:$0xff]
    %v90 = vld [vmem:[%s0 + $0x10] sm:$0xff]
    %v91 = vld [vmem:[%s0 + $0x18] sm:$0xff]
    %v92 = vlaneseq
    %v93 = vand.u32 %v92, 127
    %v94 = vld [vmem:[%s1] sm:$0xff]
    %v95 = vld [vmem:[%s1 + $0x8] sm:$0xff]
    %v96 = vld [vmem:[%s1 + $0x10] sm:$0xff]
    %v97 = vld [vmem:[%s1 + $0x18] sm:$0xff]
    %98 = vset.pattern.permute.xlu0 0
    %99 = vperm.xlu0 %98, %v94
    %v100 = vpop.permute.xlu0 %99
    %101 = vset.pattern.permute.xlu0 0
    %102 = vperm.xlu0 %101, %v95
    %v103 = vpop.permute.xlu0 %102
    %104 = vset.pattern.permute.xlu0 0
    %105 = vperm.xlu0 %104, %v96
    %v106 = vpop.permute.xlu0 %105
    %107 = vset.pattern.permute.xlu0 0
    %108 = vperm.xlu0 %107, %v97
    %v109 = vpop.permute.xlu0 %108
    %vm110 = vcmp.eq.s32.totalorder %v100, %v93
    %vm111 = vcmp.eq.s32.totalorder %v103, %v93
    %vm112 = vcmp.eq.s32.totalorder %v106, %v93
    %vm113 = vcmp.eq.s32.totalorder %v109, %v93
    %v114 = vsel %vm110, 1, 0
    %v115 = vsel %vm111, 1, 0
    %v116 = vsel %vm112, 1, 0
    %v117 = vsel %vm113, 1, 0
    %v118 = vcvt.s32.f32 %v114
    %v119 = vcvt.s32.f32 %v115
    %v120 = vcvt.s32.f32 %v116
    %v121 = vcvt.s32.f32 %v117
    %v122 = vpack.c.bf16 %v119, %v118
    %v123 = vpack.c.bf16 %v121, %v120
    %v124 = vld [vmem:[%s2] sm:$0xf]
    %v125 = vld [vmem:[%s2 + $0x4] sm:$0xf]
    %v126 = vld [vmem:[%s2 + $0x8] sm:$0xf]
    %v127 = vld [vmem:[%s2 + $0xc] sm:$0xf]
    %v128 = vld [vmem:[%s2 + $0x10] sm:$0xf]
    %v129 = vld [vmem:[%s2 + $0x14] sm:$0xf]
    %v130 = vld [vmem:[%s2 + $0x18] sm:$0xf]
    %v131 = vld [vmem:[%s2 + $0x1c] sm:$0xf]
    %v132 = vld [vmem:[%s3] sm:$0x1]
    %v134 = vlaneseq
    %v135 = vshrl.u32 %v134, 7
    %v136 = vsub.s32 0, %v135
    %v137 = vrot.slane %v132, %v136
    %v147 = vunpack.c.l.b16 %v124
    %v148 = vunpack.c.l.b16 %v125
    %v149 = vunpack.c.l.b16 %v126
    %v150 = vunpack.c.l.b16 %v127
    %v151 = vunpack.c.l.b16 %v128
    %v152 = vunpack.c.l.b16 %v129
    %v153 = vunpack.c.l.b16 %v130
    %v154 = vunpack.c.l.b16 %v131
    %v155 = vpack.c.b16 %v148, %v147
    %v156 = vpack.c.b16 %v150, %v149
    %v157 = vpack.c.b16 %v152, %v151
    %v158 = vpack.c.b16 %v154, %v153
    %vm163 = vcmask 523264
    %v165 = vsel %vm163, %v122, 0
    %v168 = vsel %vm163, %v123, 0
    %170 = vmatprep.subr.bf16.mxu0 0
    %171 = vmatpush1.bf16.msra.mxu0 %v155
    %172 = vmatprep.subr.bf16.mxu0 0
    %173 = vmatpush1.bf16.msra.mxu0 %v156
    %174 = vmatprep.subr.bf16.mxu0 0
    %175 = vmatpush1.bf16.msra.mxu0 %v157
    %176 = vmatprep.subr.bf16.mxu0 0
    %177 = vmatpush1.bf16.msra.mxu0 %v158
    %178 = vmatprep.subr.bf16.mxu0 0
    %179 = vmatpush1.bf16.msra.mxu0 0
    %180 = vmatprep.subr.bf16.mxu0 0
    %181 = vmatpush1.bf16.msra.mxu0 0
    %182 = vmatprep.subr.bf16.mxu0 0
    %183 = vmatpush1.bf16.msra.mxu0 0
    %184 = vmatprep.subr.bf16.mxu0 0
    %185 = vmatpush1.bf16.msra.mxu0 0
    %186 = vmatprep.subr.bf16.mxu0 0
    %187 = vmatpush1.bf16.msra.mxu0 0
    %188 = vmatprep.subr.bf16.mxu0 0
    %189 = vmatpush1.bf16.msra.mxu0 0
    %190 = vmatprep.subr.bf16.mxu0 0
    %191 = vmatpush1.bf16.msra.mxu0 0
    %192 = vmatprep.subr.bf16.mxu0 0
    %193 = vmatpush1.bf16.msra.mxu0 0
    %194 = vmatprep.subr.bf16.mxu0 0
    %195 = vmatpush1.bf16.msra.mxu0 0
    %196 = vmatprep.subr.bf16.mxu0 0
    %197 = vmatpush1.bf16.msra.mxu0 0
    %198 = vmatprep.subr.bf16.mxu0 0
    %199 = vmatpush1.bf16.msra.mxu0 0
    %200 = vmatprep.subr.bf16.mxu0 0
    %201 = vmatpush1.bf16.msra.mxu0 0
    %202 = vmatprep.mubr.bf16.mxu0 0
    %203 = vmatmul.mubr.bf16.gmra.mrb[0].mxu0 %v165
    %v204 = vpop.f32.mrb[0].mxu0
    %v205 = vadd.f32 %v137, %v204
    %v206 = vpop.f32.mrb[0].mxu0
    %v207 = vpop.f32.mrb[0].mxu0
    %v208 = vadd.f32 %v137, %v207
    %v209 = vpop.f32.mrb[0].mxu0
    %210 = vmatprep.mubr.bf16.mxu0 0
    %211 = vmatmul.mubr.bf16.gmra.mrb[0].mxu0 %v168
    %v212 = vpop.f32.mrb[0].mxu0
    %v213 = vadd.f32 %v137, %v212
    %v214 = vpop.f32.mrb[0].mxu0
    %v215 = vpop.f32.mrb[0].mxu0
    %v216 = vadd.f32 %v137, %v215
    %v217 = vpop.f32.mrb[0].mxu0
    %218 = vdwg.mxu0
    %v219 = vld [vmem:[%s4] sm:$0x1]
    %v220 = vld [vmem:[%s5] sm:$0x1]
    %vm221 = vcmask 261120
    %v222 = vsel %vm221, %v205, 0.0
    %223 = vadd.xlane.f32.xlu0 %v222
    %v224 = vpop.xlane.xlu0 %223
    %v225 = vsel %vm221, %v208, 0.0
    %226 = vadd.xlane.f32.xlu0 %v225
    %v227 = vpop.xlane.xlu0 %226
    %v228 = vsel %vm221, %v213, 0.0
    %229 = vadd.xlane.f32.xlu0 %v228
    %v230 = vpop.xlane.xlu0 %229
    %v231 = vsel %vm221, %v216, 0.0
    %232 = vadd.xlane.f32.xlu0 %v231
    %v233 = vpop.xlane.xlu0 %232
    %v234 = vrcp.pop 32.0
    %v235 = vmul.f32 %v224, %v234
    %v236 = vmul.f32 %v227, %v234
    %v237 = vmul.f32 %v230, %v234
    %v238 = vmul.f32 %v233, %v234
    %v239 = vmul.f32 %v205, %v205
    %v240 = vmul.f32 %v208, %v208
    %v241 = vmul.f32 %v213, %v213
    %v242 = vmul.f32 %v216, %v216
    %v243 = vsel %vm221, %v239, 0.0
    %244 = vadd.xlane.f32.xlu0 %v243
    %v245 = vpop.xlane.xlu0 %244
    %v246 = vsel %vm221, %v240, 0.0
    %247 = vadd.xlane.f32.xlu0 %v246
    %v248 = vpop.xlane.xlu0 %247
    %v249 = vsel %vm221, %v241, 0.0
    %250 = vadd.xlane.f32.xlu0 %v249
    %v251 = vpop.xlane.xlu0 %250
    %v252 = vsel %vm221, %v242, 0.0
    %253 = vadd.xlane.f32.xlu0 %v252
    %v254 = vpop.xlane.xlu0 %253
    %v255 = vmul.f32 %v245, %v234
    %v256 = vmul.f32 %v248, %v234
    %v257 = vmul.f32 %v251, %v234
    %v258 = vmul.f32 %v254, %v234
    %v259 = vmul.f32 %v235, %v235
    %v260 = vmul.f32 %v236, %v236
    %v261 = vmul.f32 %v237, %v237
    %v262 = vmul.f32 %v238, %v238
    %v263 = vsub.f32 %v255, %v259
    %v264 = vsub.f32 %v256, %v260
    %v265 = vsub.f32 %v257, %v261
    %v266 = vsub.f32 %v258, %v262
    %v267 = vsub.f32 %v205, %v235
    %v268 = vsub.f32 %v208, %v236
    %v269 = vsub.f32 %v213, %v237
    %v270 = vsub.f32 %v216, %v238
    %v271 = vadd.f32 %v263, 1e-12
    %v272 = vadd.f32 %v264, 1e-12
    %v273 = vadd.f32 %v265, 1e-12
    %v274 = vadd.f32 %v266, 1e-12
    %v275 = vrsqrt.pop %v271
    %v276 = vrsqrt.pop %v272
    %v277 = vrsqrt.pop %v273
    %v278 = vrsqrt.pop %v274
    %v279 = vmul.f32 %v267, %v275
    %v280 = vmul.f32 %v268, %v276
    %v281 = vmul.f32 %v269, %v277
    %v282 = vmul.f32 %v270, %v278
    %v284 = vlaneseq
    %v285 = vshrl.u32 %v284, 7
    %v286 = vsub.s32 0, %v285
    %v287 = vrot.slane %v219, %v286
    %v289 = vmul.f32 %v279, %v287
    %v290 = vmul.f32 %v280, %v287
    %v291 = vmul.f32 %v281, %v287
    %v292 = vmul.f32 %v282, %v287
    %v294 = vlaneseq
    %v295 = vshrl.u32 %v294, 7
    %v296 = vsub.s32 0, %v295
    %v297 = vrot.slane %v220, %v296
    %v299 = vadd.f32 %v289, %v297
    %v300 = vadd.f32 %v290, %v297
    %v301 = vadd.f32 %v291, %v297
    %v302 = vadd.f32 %v292, %v297
    %v303 = vpack.c.bf16 %v300, %v299
    %v304 = vpack.c.bf16 %v302, %v301
    %v305 = vld [vmem:[%s6] sm:$0xf]
    %v306 = vld [vmem:[%s6 + $0x4] sm:$0xf]
    %v307 = vld [vmem:[%s6 + $0x8] sm:$0xf]
    %v308 = vld [vmem:[%s6 + $0xc] sm:$0xf]
    %v309 = vld [vmem:[%s7] sm:$0x1]
    %v311 = vlaneseq
    %v312 = vshrl.u32 %v311, 7
    %v313 = vsub.s32 0, %v312
    %v314 = vrot.slane %v309, %v313
    %v320 = vunpack.c.l.b16 %v305
    %v321 = vunpack.c.l.b16 %v306
    %v322 = vunpack.c.l.b16 %v307
    %v323 = vunpack.c.l.b16 %v308
    %v324 = vpack.c.b16 %v321, %v320
    %v325 = vpack.c.b16 %v323, %v322
    %v329 = vsel %vm221, %v303, 0
    %v332 = vsel %vm221, %v304, 0
    %334 = vmatprep.subr.bf16.mxu0 0
    %335 = vmatpush1.bf16.msra.mxu0 %v324
    %336 = vmatprep.subr.bf16.mxu0 0
    %337 = vmatpush1.bf16.msra.mxu0 %v325
    %338 = vmatprep.subr.bf16.mxu0 0
    %339 = vmatpush1.bf16.msra.mxu0 0
    %340 = vmatprep.subr.bf16.mxu0 0
    %341 = vmatpush1.bf16.msra.mxu0 0
    %342 = vmatprep.subr.bf16.mxu0 0
    %343 = vmatpush1.bf16.msra.mxu0 0
    %344 = vmatprep.subr.bf16.mxu0 0
    %345 = vmatpush1.bf16.msra.mxu0 0
    %346 = vmatprep.subr.bf16.mxu0 0
    %347 = vmatpush1.bf16.msra.mxu0 0
    %348 = vmatprep.subr.bf16.mxu0 0
    %349 = vmatpush1.bf16.msra.mxu0 0
    %350 = vmatprep.subr.bf16.mxu0 0
    %351 = vmatpush1.bf16.msra.mxu0 0
    %352 = vmatprep.subr.bf16.mxu0 0
    %353 = vmatpush1.bf16.msra.mxu0 0
    %354 = vmatprep.subr.bf16.mxu0 0
    %355 = vmatpush1.bf16.msra.mxu0 0
    %356 = vmatprep.subr.bf16.mxu0 0
    %357 = vmatpush1.bf16.msra.mxu0 0
    %358 = vmatprep.subr.bf16.mxu0 0
    %359 = vmatpush1.bf16.msra.mxu0 0
    %360 = vmatprep.subr.bf16.mxu0 0
    %361 = vmatpush1.bf16.msra.mxu0 0
    %362 = vmatprep.subr.bf16.mxu0 0
    %363 = vmatpush1.bf16.msra.mxu0 0
    %364 = vmatprep.subr.bf16.mxu0 0
    %365 = vmatpush1.bf16.msra.mxu0 0
    %366 = vmatprep.mubr.bf16.mxu0 0
    %367 = vmatmul.mubr.bf16.gmra.mrb[0].mxu0 %v329
    %v368 = vpop.f32.mrb[0].mxu0
    %v369 = vadd.f32 %v314, %v368
    %v370 = vpop.f32.mrb[0].mxu0
    %v371 = vpop.f32.mrb[0].mxu0
    %v372 = vadd.f32 %v314, %v371
    %v373 = vpop.f32.mrb[0].mxu0
    %374 = vmatprep.mubr.bf16.mxu0 0
    %375 = vmatmul.mubr.bf16.gmra.mrb[0].mxu0 %v332
    %v376 = vpop.f32.mrb[0].mxu0
    %v377 = vadd.f32 %v314, %v376
    %v378 = vpop.f32.mrb[0].mxu0
    %v379 = vpop.f32.mrb[0].mxu0
    %v380 = vadd.f32 %v314, %v379
    %v381 = vpop.f32.mrb[0].mxu0
    %382 = vdwg.mxu0
    %v383 = vpack.c.bf16 %v372, %v369
    %v384 = vpack.c.bf16 %v380, %v377
    %387 = vrot.lane.b32.xlu0 %v383, 96
    %v388 = vpop.permute.xlu0 %387
    %389 = vrot.lane.b32.xlu0 %v384, 96
    %v390 = vpop.permute.xlu0 %389
    %vm391 = vcmask 64512
    %v393 = vsel %vm391, %v383, 0
    %v396 = vsel %vm391, %v384, 0
    %v399 = vsel %vm391, %v388, 0
    %v402 = vsel %vm391, %v390, 0
    %404 = vmatprep.subr.bf16.mxu0 0
    %405 = vmatpush1.bf16.xpose.msra.mxu0 %v399
    %406 = vmatprep.subr.bf16.mxu0 0
    %407 = vmatpush1.bf16.xpose.msra.mxu0 %v402
    %408 = vmatprep.subr.bf16.mxu0 0
    %409 = vmatpush1.bf16.xpose.msra.mxu0 0
    %410 = vmatprep.subr.bf16.mxu0 0
    %411 = vmatpush1.bf16.xpose.msra.mxu0 0
    %412 = vmatprep.subr.bf16.mxu0 0
    %413 = vmatpush1.bf16.xpose.msra.mxu0 0
    %414 = vmatprep.subr.bf16.mxu0 0
    %415 = vmatpush1.bf16.xpose.msra.mxu0 0
    %416 = vmatprep.subr.bf16.mxu0 0
    %417 = vmatpush1.bf16.xpose.msra.mxu0 0
    %418 = vmatprep.subr.bf16.mxu0 0
    %419 = vmatpush1.bf16.xpose.msra.mxu0 0
    %420 = vmatprep.subr.bf16.mxu0 0
    %421 = vmatpush1.bf16.xpose.msra.mxu0 0
    %422 = vmatprep.subr.bf16.mxu0 0
    %423 = vmatpush1.bf16.xpose.msra.mxu0 0
    %424 = vmatprep.subr.bf16.mxu0 0
    %425 = vmatpush1.bf16.xpose.msra.mxu0 0
    %426 = vmatprep.subr.bf16.mxu0 0
    %427 = vmatpush1.bf16.xpose.msra.mxu0 0
    %428 = vmatprep.subr.bf16.mxu0 0
    %429 = vmatpush1.bf16.xpose.msra.mxu0 0
    %430 = vmatprep.subr.bf16.mxu0 0
    %431 = vmatpush1.bf16.xpose.msra.mxu0 0
    %432 = vmatprep.subr.bf16.mxu0 0
    %433 = vmatpush1.bf16.xpose.msra.mxu0 0
    %434 = vmatprep.subr.bf16.mxu0 0
    %435 = vmatpush1.bf16.xpose.msra.mxu0 0
    %436 = vmatprep.mubr.bf16.mxu0 0
    %437 = vmatmul.mubr.bf16.gmra.mrb[0].mxu0 %v393
    %v438 = vpop.f32.mrb[0].mxu0
    %v439 = vadd.f32 0.0, %v438
    %v440 = vpop.f32.mrb[0].mxu0
    %v441 = vpop.f32.mrb[0].mxu0
    %v442 = vadd.f32 0.0, %v441
    %v443 = vpop.f32.mrb[0].mxu0
    %444 = vmatprep.mubr.bf16.mxu0 0
    %445 = vmatmul.mubr.bf16.gmra.mrb[0].mxu0 %v396
    %v446 = vpop.f32.mrb[0].mxu0
    %v447 = vadd.f32 0.0, %v446
    %v448 = vpop.f32.mrb[0].mxu0
    %v449 = vpop.f32.mrb[0].mxu0
    %v450 = vadd.f32 0.0, %v449
    %v451 = vpop.f32.mrb[0].mxu0
    %452 = vdwg.mxu0
    %v453 = vmul.f32 %v439, 0.35355338
    %v454 = vmul.f32 %v442, 0.35355338
    %v455 = vmul.f32 %v447, 0.35355338
    %v456 = vmul.f32 %v450, 0.35355338
    %v457 = vadd.f32 %v453, %v88
    %v458 = vadd.f32 %v454, %v89
    %v459 = vadd.f32 %v455, %v90
    %v460 = vadd.f32 %v456, %v91
    %v461 = vsel %vm221, %v457, -inf
    %462 = vmax.xlane.f32.xlu0 %v461
    %v463 = vpop.xlane.xlu0 %462
    %v464 = vsel %vm221, %v458, -inf
    %465 = vmax.xlane.f32.xlu0 %v464
    %v466 = vpop.xlane.xlu0 %465
    %v467 = vsel %vm221, %v459, -inf
    %468 = vmax.xlane.f32.xlu0 %v467
    %v469 = vpop.xlane.xlu0 %468
    %v470 = vsel %vm221, %v460, -inf
    %471 = vmax.xlane.f32.xlu0 %v470
    %v472 = vpop.xlane.xlu0 %471
    %v473 = vsub.f32 %v457, %v463
    %v474 = vsub.f32 %v458, %v466
    %v475 = vsub.f32 %v459, %v469
    %v476 = vsub.f32 %v460, %v472
    %v477 = vmul.f32 %v473, 1.442695
    %v478 = vpow.pop %v477
    %v479 = vmul.f32 %v474, 1.442695
    %v480 = vpow.pop %v479
    %v481 = vmul.f32 %v475, 1.442695
    %v482 = vpow.pop %v481
    %v483 = vmul.f32 %v476, 1.442695
    %v484 = vpow.pop %v483
    %v485 = vsel %vm221, %v478, 0.0
    %486 = vadd.xlane.f32.xlu0 %v485
    %v487 = vpop.xlane.xlu0 %486
    %v488 = vsel %vm221, %v480, 0.0
    %489 = vadd.xlane.f32.xlu0 %v488
    %v490 = vpop.xlane.xlu0 %489
    %v491 = vsel %vm221, %v482, 0.0
    %492 = vadd.xlane.f32.xlu0 %v491
    %v493 = vpop.xlane.xlu0 %492
    %v494 = vsel %vm221, %v484, 0.0
    %495 = vadd.xlane.f32.xlu0 %v494
    %v496 = vpop.xlane.xlu0 %495
    %v497 = vrcp.pop %v487
    %v498 = vrcp.pop %v490
    %v499 = vrcp.pop %v493
    %v500 = vrcp.pop %v496
    %v501 = vmul.f32 %v478, %v497
    %v502 = vmul.f32 %v480, %v498
    %v503 = vmul.f32 %v482, %v499
    %v504 = vmul.f32 %v484, %v500
    %v505 = vpack.c.bf16 %v502, %v501
    %v506 = vpack.c.bf16 %v504, %v503
    %507 = vrot.lane.b32.xlu0 %v383, 64
    %v508 = vpop.permute.xlu0 %507
    %509 = vrot.lane.b32.xlu0 %v384, 64
    %v510 = vpop.permute.xlu0 %509
    %v514 = vsel %vm221, %v505, 0
    %v517 = vsel %vm221, %v506, 0
    %519 = vmatprep.subr.bf16.mxu0 0
    %520 = vmatpush1.bf16.msra.mxu0 %v508
    %521 = vmatprep.subr.bf16.mxu0 0
    %522 = vmatpush1.bf16.msra.mxu0 %v510
    %523 = vmatprep.subr.bf16.mxu0 0
    %524 = vmatpush1.bf16.msra.mxu0 0
    %525 = vmatprep.subr.bf16.mxu0 0
    %526 = vmatpush1.bf16.msra.mxu0 0
    %527 = vmatprep.subr.bf16.mxu0 0
    %528 = vmatpush1.bf16.msra.mxu0 0
    %529 = vmatprep.subr.bf16.mxu0 0
    %530 = vmatpush1.bf16.msra.mxu0 0
    %531 = vmatprep.subr.bf16.mxu0 0
    %532 = vmatpush1.bf16.msra.mxu0 0
    %533 = vmatprep.subr.bf16.mxu0 0
    %534 = vmatpush1.bf16.msra.mxu0 0
    %535 = vmatprep.subr.bf16.mxu0 0
    %536 = vmatpush1.bf16.msra.mxu0 0
    %537 = vmatprep.subr.bf16.mxu0 0
    %538 = vmatpush1.bf16.msra.mxu0 0
    %539 = vmatprep.subr.bf16.mxu0 0
    %540 = vmatpush1.bf16.msra.mxu0 0
    %541 = vmatprep.subr.bf16.mxu0 0
    %542 = vmatpush1.bf16.msra.mxu0 0
    %543 = vmatprep.subr.bf16.mxu0 0
    %544 = vmatpush1.bf16.msra.mxu0 0
    %545 = vmatprep.subr.bf16.mxu0 0
    %546 = vmatpush1.bf16.msra.mxu0 0
    %547 = vmatprep.subr.bf16.mxu0 0
    %548 = vmatpush1.bf16.msra.mxu0 0
    %549 = vmatprep.subr.bf16.mxu0 0
    %550 = vmatpush1.bf16.msra.mxu0 0
    %551 = vmatprep.mubr.bf16.mxu0 0
    %552 = vmatmul.mubr.bf16.gmra.mrb[0].mxu0 %v514
    %v553 = vpop.f32.mrb[0].mxu0
    %v554 = vadd.f32 0.0, %v553
    %v555 = vpop.f32.mrb[0].mxu0
    %v556 = vpop.f32.mrb[0].mxu0
    %v557 = vadd.f32 0.0, %v556
    %v558 = vpop.f32.mrb[0].mxu0
    %559 = vmatprep.mubr.bf16.mxu0 0
    %560 = vmatmul.mubr.bf16.gmra.mrb[0].mxu0 %v517
    %v561 = vpop.f32.mrb[0].mxu0
    %v562 = vadd.f32 0.0, %v561
    %v563 = vpop.f32.mrb[0].mxu0
    %v564 = vpop.f32.mrb[0].mxu0
    %v565 = vadd.f32 0.0, %v564
    %v566 = vpop.f32.mrb[0].mxu0
    %567 = vdwg.mxu0
    %568 = vrot.lane.b32.xlu0 %v383, 120
    %v569 = vpop.permute.xlu0 %568
    %570 = vrot.lane.b32.xlu0 %v384, 120
    %v571 = vpop.permute.xlu0 %570
    %572 = vrot.lane.b32.xlu0 %v383, 88
    %v573 = vpop.permute.xlu0 %572
    %574 = vrot.lane.b32.xlu0 %v384, 88
    %v575 = vpop.permute.xlu0 %574
    %v577 = vsel %vm391, %v569, 0
    %v580 = vsel %vm391, %v571, 0
    %v583 = vsel %vm391, %v573, 0
    %v586 = vsel %vm391, %v575, 0
    %588 = vmatprep.subr.bf16.mxu0 0
    %589 = vmatpush1.bf16.xpose.msra.mxu0 %v583
    %590 = vmatprep.subr.bf16.mxu0 0
    %591 = vmatpush1.bf16.xpose.msra.mxu0 %v586
    %592 = vmatprep.subr.bf16.mxu0 0
    %593 = vmatpush1.bf16.xpose.msra.mxu0 0
    %594 = vmatprep.subr.bf16.mxu0 0
    %595 = vmatpush1.bf16.xpose.msra.mxu0 0
    %596 = vmatprep.subr.bf16.mxu0 0
    %597 = vmatpush1.bf16.xpose.msra.mxu0 0
    %598 = vmatprep.subr.bf16.mxu0 0
    %599 = vmatpush1.bf16.xpose.msra.mxu0 0
    %600 = vmatprep.subr.bf16.mxu0 0
    %601 = vmatpush1.bf16.xpose.msra.mxu0 0
    %602 = vmatprep.subr.bf16.mxu0 0
    %603 = vmatpush1.bf16.xpose.msra.mxu0 0
    %604 = vmatprep.subr.bf16.mxu0 0
    %605 = vmatpush1.bf16.xpose.msra.mxu0 0
    %606 = vmatprep.subr.bf16.mxu0 0
    %607 = vmatpush1.bf16.xpose.msra.mxu0 0
    %608 = vmatprep.subr.bf16.mxu0 0
    %609 = vmatpush1.bf16.xpose.msra.mxu0 0
    %610 = vmatprep.subr.bf16.mxu0 0
    %611 = vmatpush1.bf16.xpose.msra.mxu0 0
    %612 = vmatprep.subr.bf16.mxu0 0
    %613 = vmatpush1.bf16.xpose.msra.mxu0 0
    %614 = vmatprep.subr.bf16.mxu0 0
    %615 = vmatpush1.bf16.xpose.msra.mxu0 0
    %616 = vmatprep.subr.bf16.mxu0 0
    %617 = vmatpush1.bf16.xpose.msra.mxu0 0
    %618 = vmatprep.subr.bf16.mxu0 0
    %619 = vmatpush1.bf16.xpose.msra.mxu0 0
    %620 = vmatprep.mubr.bf16.mxu0 0
    %621 = vmatmul.mubr.bf16.gmra.mrb[0].mxu0 %v577
    %v622 = vpop.f32.mrb[0].mxu0
    %v623 = vadd.f32 0.0, %v622
    %v624 = vpop.f32.mrb[0].mxu0
    %v625 = vpop.f32.mrb[0].mxu0
    %v626 = vadd.f32 0.0, %v625
    %v627 = vpop.f32.mrb[0].mxu0
    %628 = vmatprep.mubr.bf16.mxu0 0
    %629 = vmatmul.mubr.bf16.gmra.mrb[0].mxu0 %v580
    %v630 = vpop.f32.mrb[0].mxu0
    %v631 = vadd.f32 0.0, %v630
    %v632 = vpop.f32.mrb[0].mxu0
    %v633 = vpop.f32.mrb[0].mxu0
    %v634 = vadd.f32 0.0, %v633
    %v635 = vpop.f32.mrb[0].mxu0
    %636 = vdwg.mxu0
    %v637 = vmul.f32 %v623, 0.35355338
    %v638 = vmul.f32 %v626, 0.35355338
    %v639 = vmul.f32 %v631, 0.35355338
    %v640 = vmul.f32 %v634, 0.35355338
    %v641 = vadd.f32 %v637, %v88
    %v642 = vadd.f32 %v638, %v89
    %v643 = vadd.f32 %v639, %v90
    %v644 = vadd.f32 %v640, %v91
    %v645 = vsel %vm221, %v641, -inf
    %646 = vmax.xlane.f32.xlu0 %v645
    %v647 = vpop.xlane.xlu0 %646
    %v648 = vsel %vm221, %v642, -inf
    %649 = vmax.xlane.f32.xlu0 %v648
    %v650 = vpop.xlane.xlu0 %649
    %v651 = vsel %vm221, %v643, -inf
    %652 = vmax.xlane.f32.xlu0 %v651
    %v653 = vpop.xlane.xlu0 %652
    %v654 = vsel %vm221, %v644, -inf
    %655 = vmax.xlane.f32.xlu0 %v654
    %v656 = vpop.xlane.xlu0 %655
    %v657 = vsub.f32 %v641, %v647
    %v658 = vsub.f32 %v642, %v650
    %v659 = vsub.f32 %v643, %v653
    %v660 = vsub.f32 %v644, %v656
    %v661 = vmul.f32 %v657, 1.442695
    %v662 = vpow.pop %v661
    %v663 = vmul.f32 %v658, 1.442695
    %v664 = vpow.pop %v663
    %v665 = vmul.f32 %v659, 1.442695
    %v666 = vpow.pop %v665
    %v667 = vmul.f32 %v660, 1.442695
    %v668 = vpow.pop %v667
    %v669 = vsel %vm221, %v662, 0.0
    %670 = vadd.xlane.f32.xlu0 %v669
    %v671 = vpop.xlane.xlu0 %670
    %v672 = vsel %vm221, %v664, 0.0
    %673 = vadd.xlane.f32.xlu0 %v672
    %v674 = vpop.xlane.xlu0 %673
    %v675 = vsel %vm221, %v666, 0.0
    %676 = vadd.xlane.f32.xlu0 %v675
    %v677 = vpop.xlane.xlu0 %676
    %v678 = vsel %vm221, %v668, 0.0
    %679 = vadd.xlane.f32.xlu0 %v678
    %v680 = vpop.xlane.xlu0 %679
    %v681 = vrcp.pop %v671
    %v682 = vrcp.pop %v674
    %v683 = vrcp.pop %v677
    %v684 = vrcp.pop %v680
    %v685 = vmul.f32 %v662, %v681
    %v686 = vmul.f32 %v664, %v682
    %v687 = vmul.f32 %v666, %v683
    %v688 = vmul.f32 %v668, %v684
    %v689 = vpack.c.bf16 %v686, %v685
    %v690 = vpack.c.bf16 %v688, %v687
    %691 = vrot.lane.b32.xlu0 %v383, 56
    %v692 = vpop.permute.xlu0 %691
    %693 = vrot.lane.b32.xlu0 %v384, 56
    %v694 = vpop.permute.xlu0 %693
    %v698 = vsel %vm221, %v689, 0
    %v701 = vsel %vm221, %v690, 0
    %703 = vmatprep.subr.bf16.mxu0 0
    %704 = vmatpush1.bf16.msra.mxu0 %v692
    %705 = vmatprep.subr.bf16.mxu0 0
    %706 = vmatpush1.bf16.msra.mxu0 %v694
    %707 = vmatprep.subr.bf16.mxu0 0
    %708 = vmatpush1.bf16.msra.mxu0 0
    %709 = vmatprep.subr.bf16.mxu0 0
    %710 = vmatpush1.bf16.msra.mxu0 0
    %711 = vmatprep.subr.bf16.mxu0 0
    %712 = vmatpush1.bf16.msra.mxu0 0
    %713 = vmatprep.subr.bf16.mxu0 0
    %714 = vmatpush1.bf16.msra.mxu0 0
    %715 = vmatprep.subr.bf16.mxu0 0
    %716 = vmatpush1.bf16.msra.mxu0 0
    %717 = vmatprep.subr.bf16.mxu0 0
    %718 = vmatpush1.bf16.msra.mxu0 0
    %719 = vmatprep.subr.bf16.mxu0 0
    %720 = vmatpush1.bf16.msra.mxu0 0
    %721 = vmatprep.subr.bf16.mxu0 0
    %722 = vmatpush1.bf16.msra.mxu0 0
    %723 = vmatprep.subr.bf16.mxu0 0
    %724 = vmatpush1.bf16.msra.mxu0 0
    %725 = vmatprep.subr.bf16.mxu0 0
    %726 = vmatpush1.bf16.msra.mxu0 0
    %727 = vmatprep.subr.bf16.mxu0 0
    %728 = vmatpush1.bf16.msra.mxu0 0
    %729 = vmatprep.subr.bf16.mxu0 0
    %730 = vmatpush1.bf16.msra.mxu0 0
    %731 = vmatprep.subr.bf16.mxu0 0
    %732 = vmatpush1.bf16.msra.mxu0 0
    %733 = vmatprep.subr.bf16.mxu0 0
    %734 = vmatpush1.bf16.msra.mxu0 0
    %735 = vmatprep.mubr.bf16.mxu0 0
    %736 = vmatmul.mubr.bf16.gmra.mrb[0].mxu0 %v698
    %v737 = vpop.f32.mrb[0].mxu0
    %v738 = vadd.f32 0.0, %v737
    %v739 = vpop.f32.mrb[0].mxu0
    %v740 = vpop.f32.mrb[0].mxu0
    %v741 = vadd.f32 0.0, %v740
    %v742 = vpop.f32.mrb[0].mxu0
    %743 = vmatprep.mubr.bf16.mxu0 0
    %744 = vmatmul.mubr.bf16.gmra.mrb[0].mxu0 %v701
    %v745 = vpop.f32.mrb[0].mxu0
    %v746 = vadd.f32 0.0, %v745
    %v747 = vpop.f32.mrb[0].mxu0
    %v748 = vpop.f32.mrb[0].mxu0
    %v749 = vadd.f32 0.0, %v748
    %v750 = vpop.f32.mrb[0].mxu0
    %751 = vdwg.mxu0
    %752 = vrot.lane.b32.xlu0 %v383, 112
    %v753 = vpop.permute.xlu0 %752
    %754 = vrot.lane.b32.xlu0 %v384, 112
    %v755 = vpop.permute.xlu0 %754
    %756 = vrot.lane.b32.xlu0 %v383, 80
    %v757 = vpop.permute.xlu0 %756
    %758 = vrot.lane.b32.xlu0 %v384, 80
    %v759 = vpop.permute.xlu0 %758
    %v761 = vsel %vm391, %v753, 0
    %v764 = vsel %vm391, %v755, 0
    %v767 = vsel %vm391, %v757, 0
    %v770 = vsel %vm391, %v759, 0
    %772 = vmatprep.subr.bf16.mxu0 0
    %773 = vmatpush1.bf16.xpose.msra.mxu0 %v767
    %774 = vmatprep.subr.bf16.mxu0 0
    %775 = vmatpush1.bf16.xpose.msra.mxu0 %v770
    %776 = vmatprep.subr.bf16.mxu0 0
    %777 = vmatpush1.bf16.xpose.msra.mxu0 0
    %778 = vmatprep.subr.bf16.mxu0 0
    %779 = vmatpush1.bf16.xpose.msra.mxu0 0
    %780 = vmatprep.subr.bf16.mxu0 0
    %781 = vmatpush1.bf16.xpose.msra.mxu0 0
    %782 = vmatprep.subr.bf16.mxu0 0
    %783 = vmatpush1.bf16.xpose.msra.mxu0 0
    %784 = vmatprep.subr.bf16.mxu0 0
    %785 = vmatpush1.bf16.xpose.msra.mxu0 0
    %786 = vmatprep.subr.bf16.mxu0 0
    %787 = vmatpush1.bf16.xpose.msra.mxu0 0
    %788 = vmatprep.subr.bf16.mxu0 0
    %789 = vmatpush1.bf16.xpose.msra.mxu0 0
    %790 = vmatprep.subr.bf16.mxu0 0
    %791 = vmatpush1.bf16.xpose.msra.mxu0 0
    %792 = vmatprep.subr.bf16.mxu0 0
    %793 = vmatpush1.bf16.xpose.msra.mxu0 0
    %794 = vmatprep.subr.bf16.mxu0 0
    %795 = vmatpush1.bf16.xpose.msra.mxu0 0
    %796 = vmatprep.subr.bf16.mxu0 0
    %797 = vmatpush1.bf16.xpose.msra.mxu0 0
    %798 = vmatprep.subr.bf16.mxu0 0
    %799 = vmatpush1.bf16.xpose.msra.mxu0 0
    %800 = vmatprep.subr.bf16.mxu0 0
    %801 = vmatpush1.bf16.xpose.msra.mxu0 0
    %802 = vmatprep.subr.bf16.mxu0 0
    %803 = vmatpush1.bf16.xpose.msra.mxu0 0
    %804 = vmatprep.mubr.bf16.mxu0 0
    %805 = vmatmul.mubr.bf16.gmra.mrb[0].mxu0 %v761
    %v806 = vpop.f32.mrb[0].mxu0
    %v807 = vadd.f32 0.0, %v806
    %v808 = vpop.f32.mrb[0].mxu0
    %v809 = vpop.f32.mrb[0].mxu0
    %v810 = vadd.f32 0.0, %v809
    %v811 = vpop.f32.mrb[0].mxu0
    %812 = vmatprep.mubr.bf16.mxu0 0
    %813 = vmatmul.mubr.bf16.gmra.mrb[0].mxu0 %v764
    %v814 = vpop.f32.mrb[0].mxu0
    %v815 = vadd.f32 0.0, %v814
    %v816 = vpop.f32.mrb[0].mxu0
    %v817 = vpop.f32.mrb[0].mxu0
    %v818 = vadd.f32 0.0, %v817
    %v819 = vpop.f32.mrb[0].mxu0
    %820 = vdwg.mxu0
    %v821 = vmul.f32 %v807, 0.35355338
    %v822 = vmul.f32 %v810, 0.35355338
    %v823 = vmul.f32 %v815, 0.35355338
    %v824 = vmul.f32 %v818, 0.35355338
    %v825 = vadd.f32 %v821, %v88
    %v826 = vadd.f32 %v822, %v89
    %v827 = vadd.f32 %v823, %v90
    %v828 = vadd.f32 %v824, %v91
    %v829 = vsel %vm221, %v825, -inf
    %830 = vmax.xlane.f32.xlu0 %v829
    %v831 = vpop.xlane.xlu0 %830
    %v832 = vsel %vm221, %v826, -inf
    %833 = vmax.xlane.f32.xlu0 %v832
    %v834 = vpop.xlane.xlu0 %833
    %v835 = vsel %vm221, %v827, -inf
    %836 = vmax.xlane.f32.xlu0 %v835
    %v837 = vpop.xlane.xlu0 %836
    %v838 = vsel %vm221, %v828, -inf
    %839 = vmax.xlane.f32.xlu0 %v838
    %v840 = vpop.xlane.xlu0 %839
    %v841 = vsub.f32 %v825, %v831
    %v842 = vsub.f32 %v826, %v834
    %v843 = vsub.f32 %v827, %v837
    %v844 = vsub.f32 %v828, %v840
    %v845 = vmul.f32 %v841, 1.442695
    %v846 = vpow.pop %v845
    %v847 = vmul.f32 %v842, 1.442695
    %v848 = vpow.pop %v847
    %v849 = vmul.f32 %v843, 1.442695
    %v850 = vpow.pop %v849
    %v851 = vmul.f32 %v844, 1.442695
    %v852 = vpow.pop %v851
    %v853 = vsel %vm221, %v846, 0.0
    %854 = vadd.xlane.f32.xlu0 %v853
    %v855 = vpop.xlane.xlu0 %854
    %v856 = vsel %vm221, %v848, 0.0
    %857 = vadd.xlane.f32.xlu0 %v856
    %v858 = vpop.xlane.xlu0 %857
    %v859 = vsel %vm221, %v850, 0.0
    %860 = vadd.xlane.f32.xlu0 %v859
    %v861 = vpop.xlane.xlu0 %860
    %v862 = vsel %vm221, %v852, 0.0
    %863 = vadd.xlane.f32.xlu0 %v862
    %v864 = vpop.xlane.xlu0 %863
    %v865 = vrcp.pop %v855
    %v866 = vrcp.pop %v858
    %v867 = vrcp.pop %v861
    %v868 = vrcp.pop %v864
    %v869 = vmul.f32 %v846, %v865
    %v870 = vmul.f32 %v848, %v866
    %v871 = vmul.f32 %v850, %v867
    %v872 = vmul.f32 %v852, %v868
    %v873 = vpack.c.bf16 %v870, %v869
    %v874 = vpack.c.bf16 %v872, %v871
    %875 = vrot.lane.b32.xlu0 %v383, 48
    %v876 = vpop.permute.xlu0 %875
    %877 = vrot.lane.b32.xlu0 %v384, 48
    %v878 = vpop.permute.xlu0 %877
    %v882 = vsel %vm221, %v873, 0
    %v885 = vsel %vm221, %v874, 0
    %887 = vmatprep.subr.bf16.mxu0 0
    %888 = vmatpush1.bf16.msra.mxu0 %v876
    %889 = vmatprep.subr.bf16.mxu0 0
    %890 = vmatpush1.bf16.msra.mxu0 %v878
    %891 = vmatprep.subr.bf16.mxu0 0
    %892 = vmatpush1.bf16.msra.mxu0 0
    %893 = vmatprep.subr.bf16.mxu0 0
    %894 = vmatpush1.bf16.msra.mxu0 0
    %895 = vmatprep.subr.bf16.mxu0 0
    %896 = vmatpush1.bf16.msra.mxu0 0
    %897 = vmatprep.subr.bf16.mxu0 0
    %898 = vmatpush1.bf16.msra.mxu0 0
    %899 = vmatprep.subr.bf16.mxu0 0
    %900 = vmatpush1.bf16.msra.mxu0 0
    %901 = vmatprep.subr.bf16.mxu0 0
    %902 = vmatpush1.bf16.msra.mxu0 0
    %903 = vmatprep.subr.bf16.mxu0 0
    %904 = vmatpush1.bf16.msra.mxu0 0
    %905 = vmatprep.subr.bf16.mxu0 0
    %906 = vmatpush1.bf16.msra.mxu0 0
    %907 = vmatprep.subr.bf16.mxu0 0
    %908 = vmatpush1.bf16.msra.mxu0 0
    %909 = vmatprep.subr.bf16.mxu0 0
    %910 = vmatpush1.bf16.msra.mxu0 0
    %911 = vmatprep.subr.bf16.mxu0 0
    %912 = vmatpush1.bf16.msra.mxu0 0
    %913 = vmatprep.subr.bf16.mxu0 0
    %914 = vmatpush1.bf16.msra.mxu0 0
    %915 = vmatprep.subr.bf16.mxu0 0
    %916 = vmatpush1.bf16.msra.mxu0 0
    %917 = vmatprep.subr.bf16.mxu0 0
    %918 = vmatpush1.bf16.msra.mxu0 0
    %919 = vmatprep.mubr.bf16.mxu0 0
    %920 = vmatmul.mubr.bf16.gmra.mrb[0].mxu0 %v882
    %v921 = vpop.f32.mrb[0].mxu0
    %v922 = vadd.f32 0.0, %v921
    %v923 = vpop.f32.mrb[0].mxu0
    %v924 = vpop.f32.mrb[0].mxu0
    %v925 = vadd.f32 0.0, %v924
    %v926 = vpop.f32.mrb[0].mxu0
    %927 = vmatprep.mubr.bf16.mxu0 0
    %928 = vmatmul.mubr.bf16.gmra.mrb[0].mxu0 %v885
    %v929 = vpop.f32.mrb[0].mxu0
    %v930 = vadd.f32 0.0, %v929
    %v931 = vpop.f32.mrb[0].mxu0
    %v932 = vpop.f32.mrb[0].mxu0
    %v933 = vadd.f32 0.0, %v932
    %v934 = vpop.f32.mrb[0].mxu0
    %935 = vdwg.mxu0
    %936 = vrot.lane.b32.xlu0 %v383, 104
    %v937 = vpop.permute.xlu0 %936
    %938 = vrot.lane.b32.xlu0 %v384, 104
    %v939 = vpop.permute.xlu0 %938
    %940 = vrot.lane.b32.xlu0 %v383, 72
    %v941 = vpop.permute.xlu0 %940
    %942 = vrot.lane.b32.xlu0 %v384, 72
    %v943 = vpop.permute.xlu0 %942
    %v945 = vsel %vm391, %v937, 0
    %v948 = vsel %vm391, %v939, 0
    %v951 = vsel %vm391, %v941, 0
    %v954 = vsel %vm391, %v943, 0
    %956 = vmatprep.subr.bf16.mxu0 0
    %957 = vmatpush1.bf16.xpose.msra.mxu0 %v951
    %958 = vmatprep.subr.bf16.mxu0 0
    %959 = vmatpush1.bf16.xpose.msra.mxu0 %v954
    %960 = vmatprep.subr.bf16.mxu0 0
    %961 = vmatpush1.bf16.xpose.msra.mxu0 0
    %962 = vmatprep.subr.bf16.mxu0 0
    %963 = vmatpush1.bf16.xpose.msra.mxu0 0
    %964 = vmatprep.subr.bf16.mxu0 0
    %965 = vmatpush1.bf16.xpose.msra.mxu0 0
    %966 = vmatprep.subr.bf16.mxu0 0
    %967 = vmatpush1.bf16.xpose.msra.mxu0 0
    %968 = vmatprep.subr.bf16.mxu0 0
    %969 = vmatpush1.bf16.xpose.msra.mxu0 0
    %970 = vmatprep.subr.bf16.mxu0 0
    %971 = vmatpush1.bf16.xpose.msra.mxu0 0
    %972 = vmatprep.subr.bf16.mxu0 0
    %973 = vmatpush1.bf16.xpose.msra.mxu0 0
    %974 = vmatprep.subr.bf16.mxu0 0
    %975 = vmatpush1.bf16.xpose.msra.mxu0 0
    %976 = vmatprep.subr.bf16.mxu0 0
    %977 = vmatpush1.bf16.xpose.msra.mxu0 0
    %978 = vmatprep.subr.bf16.mxu0 0
    %979 = vmatpush1.bf16.xpose.msra.mxu0 0
    %980 = vmatprep.subr.bf16.mxu0 0
    %981 = vmatpush1.bf16.xpose.msra.mxu0 0
    %982 = vmatprep.subr.bf16.mxu0 0
    %983 = vmatpush1.bf16.xpose.msra.mxu0 0
    %984 = vmatprep.subr.bf16.mxu0 0
    %985 = vmatpush1.bf16.xpose.msra.mxu0 0
    %986 = vmatprep.subr.bf16.mxu0 0
    %987 = vmatpush1.bf16.xpose.msra.mxu0 0
    %988 = vmatprep.mubr.bf16.mxu0 0
    %989 = vmatmul.mubr.bf16.gmra.mrb[0].mxu0 %v945
    %v990 = vpop.f32.mrb[0].mxu0
    %v991 = vadd.f32 0.0, %v990
    %v992 = vpop.f32.mrb[0].mxu0
    %v993 = vpop.f32.mrb[0].mxu0
    %v994 = vadd.f32 0.0, %v993
    %v995 = vpop.f32.mrb[0].mxu0
    %996 = vmatprep.mubr.bf16.mxu0 0
    %997 = vmatmul.mubr.bf16.gmra.mrb[0].mxu0 %v948
    %v998 = vpop.f32.mrb[0].mxu0
    %v999 = vadd.f32 0.0, %v998
    %v1000 = vpop.f32.mrb[0].mxu0
    %v1001 = vpop.f32.mrb[0].mxu0
    %v1002 = vadd.f32 0.0, %v1001
    %v1003 = vpop.f32.mrb[0].mxu0
    %1004 = vdwg.mxu0
    %v1005 = vmul.f32 %v991, 0.35355338
    %v1006 = vmul.f32 %v994, 0.35355338
    %v1007 = vmul.f32 %v999, 0.35355338
    %v1008 = vmul.f32 %v1002, 0.35355338
    %v1009 = vadd.f32 %v1005, %v88
    %v1010 = vadd.f32 %v1006, %v89
    %v1011 = vadd.f32 %v1007, %v90
    %v1012 = vadd.f32 %v1008, %v91
    %v1013 = vsel %vm221, %v1009, -inf
    %1014 = vmax.xlane.f32.xlu0 %v1013
    %v1015 = vpop.xlane.xlu0 %1014
    %v1016 = vsel %vm221, %v1010, -inf
    %1017 = vmax.xlane.f32.xlu0 %v1016
    %v1018 = vpop.xlane.xlu0 %1017
    %v1019 = vsel %vm221, %v1011, -inf
    %1020 = vmax.xlane.f32.xlu0 %v1019
    %v1021 = vpop.xlane.xlu0 %1020
    %v1022 = vsel %vm221, %v1012, -inf
    %1023 = vmax.xlane.f32.xlu0 %v1022
    %v1024 = vpop.xlane.xlu0 %1023
    %v1025 = vsub.f32 %v1009, %v1015
    %v1026 = vsub.f32 %v1010, %v1018
    %v1027 = vsub.f32 %v1011, %v1021
    %v1028 = vsub.f32 %v1012, %v1024
    %v1029 = vmul.f32 %v1025, 1.442695
    %v1030 = vpow.pop %v1029
    %v1031 = vmul.f32 %v1026, 1.442695
    %v1032 = vpow.pop %v1031
    %v1033 = vmul.f32 %v1027, 1.442695
    %v1034 = vpow.pop %v1033
    %v1035 = vmul.f32 %v1028, 1.442695
    %v1036 = vpow.pop %v1035
    %v1037 = vsel %vm221, %v1030, 0.0
    %1038 = vadd.xlane.f32.xlu0 %v1037
    %v1039 = vpop.xlane.xlu0 %1038
    %v1040 = vsel %vm221, %v1032, 0.0
    %1041 = vadd.xlane.f32.xlu0 %v1040
    %v1042 = vpop.xlane.xlu0 %1041
    %v1043 = vsel %vm221, %v1034, 0.0
    %1044 = vadd.xlane.f32.xlu0 %v1043
    %v1045 = vpop.xlane.xlu0 %1044
    %v1046 = vsel %vm221, %v1036, 0.0
    %1047 = vadd.xlane.f32.xlu0 %v1046
    %v1048 = vpop.xlane.xlu0 %1047
    %v1049 = vrcp.pop %v1039
    %v1050 = vrcp.pop %v1042
    %v1051 = vrcp.pop %v1045
    %v1052 = vrcp.pop %v1048
    %v1053 = vmul.f32 %v1030, %v1049
    %v1054 = vmul.f32 %v1032, %v1050
    %v1055 = vmul.f32 %v1034, %v1051
    %v1056 = vmul.f32 %v1036, %v1052
    %v1057 = vpack.c.bf16 %v1054, %v1053
    %v1058 = vpack.c.bf16 %v1056, %v1055
    %1059 = vrot.lane.b32.xlu0 %v383, 40
    %v1060 = vpop.permute.xlu0 %1059
    %1061 = vrot.lane.b32.xlu0 %v384, 40
    %v1062 = vpop.permute.xlu0 %1061
    %v1066 = vsel %vm221, %v1057, 0
    %v1069 = vsel %vm221, %v1058, 0
    %1071 = vmatprep.subr.bf16.mxu0 0
    %1072 = vmatpush1.bf16.msra.mxu0 %v1060
    %1073 = vmatprep.subr.bf16.mxu0 0
    %1074 = vmatpush1.bf16.msra.mxu0 %v1062
    %1075 = vmatprep.subr.bf16.mxu0 0
    %1076 = vmatpush1.bf16.msra.mxu0 0
    %1077 = vmatprep.subr.bf16.mxu0 0
    %1078 = vmatpush1.bf16.msra.mxu0 0
    %1079 = vmatprep.subr.bf16.mxu0 0
    %1080 = vmatpush1.bf16.msra.mxu0 0
    %1081 = vmatprep.subr.bf16.mxu0 0
    %1082 = vmatpush1.bf16.msra.mxu0 0
    %1083 = vmatprep.subr.bf16.mxu0 0
    %1084 = vmatpush1.bf16.msra.mxu0 0
    %1085 = vmatprep.subr.bf16.mxu0 0
    %1086 = vmatpush1.bf16.msra.mxu0 0
    %1087 = vmatprep.subr.bf16.mxu0 0
    %1088 = vmatpush1.bf16.msra.mxu0 0
    %1089 = vmatprep.subr.bf16.mxu0 0
    %1090 = vmatpush1.bf16.msra.mxu0 0
    %1091 = vmatprep.subr.bf16.mxu0 0
    %1092 = vmatpush1.bf16.msra.mxu0 0
    %1093 = vmatprep.subr.bf16.mxu0 0
    %1094 = vmatpush1.bf16.msra.mxu0 0
    %1095 = vmatprep.subr.bf16.mxu0 0
    %1096 = vmatpush1.bf16.msra.mxu0 0
    %1097 = vmatprep.subr.bf16.mxu0 0
    %1098 = vmatpush1.bf16.msra.mxu0 0
    %1099 = vmatprep.subr.bf16.mxu0 0
    %1100 = vmatpush1.bf16.msra.mxu0 0
    %1101 = vmatprep.subr.bf16.mxu0 0
    %1102 = vmatpush1.bf16.msra.mxu0 0
    %1103 = vmatprep.mubr.bf16.mxu0 0
    %1104 = vmatmul.mubr.bf16.gmra.mrb[0].mxu0 %v1066
    %v1105 = vpop.f32.mrb[0].mxu0
    %v1106 = vadd.f32 0.0, %v1105
    %v1107 = vpop.f32.mrb[0].mxu0
    %v1108 = vpop.f32.mrb[0].mxu0
    %v1109 = vadd.f32 0.0, %v1108
    %v1110 = vpop.f32.mrb[0].mxu0
    %1111 = vmatprep.mubr.bf16.mxu0 0
    %1112 = vmatmul.mubr.bf16.gmra.mrb[0].mxu0 %v1069
    %v1113 = vpop.f32.mrb[0].mxu0
    %v1114 = vadd.f32 0.0, %v1113
    %v1115 = vpop.f32.mrb[0].mxu0
    %v1116 = vpop.f32.mrb[0].mxu0
    %v1117 = vadd.f32 0.0, %v1116
    %v1118 = vpop.f32.mrb[0].mxu0
    %1119 = vdwg.mxu0
    %1124 = vrot.lane.b32.xlu0 %v738, 8
    %v1125 = vpop.permute.xlu0 %1124
    %1126 = vrot.lane.b32.xlu0 %v741, 8
    %v1127 = vpop.permute.xlu0 %1126
    %1128 = vrot.lane.b32.xlu0 %v746, 8
    %v1129 = vpop.permute.xlu0 %1128
    %1130 = vrot.lane.b32.xlu0 %v749, 8
    %v1131 = vpop.permute.xlu0 %1130
    %1140 = vrot.lane.b32.xlu0 %v922, 16
    %v1141 = vpop.permute.xlu0 %1140
    %1142 = vrot.lane.b32.xlu0 %v925, 16
    %v1143 = vpop.permute.xlu0 %1142
    %1144 = vrot.lane.b32.xlu0 %v930, 16
    %v1145 = vpop.permute.xlu0 %1144
    %1146 = vrot.lane.b32.xlu0 %v933, 16
    %v1147 = vpop.permute.xlu0 %1146
    %1156 = vrot.lane.b32.xlu0 %v1106, 24
    %v1157 = vpop.permute.xlu0 %1156
    %1158 = vrot.lane.b32.xlu0 %v1109, 24
    %v1159 = vpop.permute.xlu0 %1158
    %1160 = vrot.lane.b32.xlu0 %v1114, 24
    %v1161 = vpop.permute.xlu0 %1160
    %1162 = vrot.lane.b32.xlu0 %v1117, 24
    %v1163 = vpop.permute.xlu0 %1162
    %v1168 = vsel %vm391, %v554, %v1125
    %v1169 = vsel %vm391, %v557, %v1127
    %v1170 = vsel %vm391, %v562, %v1129
    %v1171 = vsel %vm391, %v565, %v1131
    %vm1172 = vcmask 130048
    %v1173 = vsel %vm1172, %v1168, %v1141
    %v1174 = vsel %vm1172, %v1169, %v1143
    %v1175 = vsel %vm1172, %v1170, %v1145
    %v1176 = vsel %vm1172, %v1171, %v1147
    %vm1177 = vcmask 195584
    %v1178 = vsel %vm1177, %v1173, %v1157
    %v1179 = vsel %vm1177, %v1174, %v1159
    %v1180 = vsel %vm1177, %v1175, %v1161
    %v1181 = vsel %vm1177, %v1176, %v1163
    %v1182 = vpack.c.bf16 %v1179, %v1178
    %v1183 = vpack.c.bf16 %v1181, %v1180
    %v1184 = vld [vmem:[%s8] sm:$0xf]
    %v1185 = vld [vmem:[%s8 + $0x4] sm:$0xf]
    %v1186 = vld [vmem:[%s8 + $0x8] sm:$0xf]
    %v1187 = vld [vmem:[%s8 + $0xc] sm:$0xf]
    %v1188 = vld [vmem:[%s9] sm:$0x1]
    %v1190 = vlaneseq
    %v1191 = vshrl.u32 %v1190, 7
    %v1192 = vsub.s32 0, %v1191
    %v1193 = vrot.slane %v1188, %v1192
    %v1199 = vunpack.c.l.b16 %v1184
    %v1200 = vunpack.c.l.b16 %v1185
    %v1201 = vunpack.c.l.b16 %v1186
    %v1202 = vunpack.c.l.b16 %v1187
    %v1203 = vpack.c.b16 %v1200, %v1199
    %v1204 = vpack.c.b16 %v1202, %v1201
    %v1208 = vsel %vm221, %v1182, 0
    %v1211 = vsel %vm221, %v1183, 0
    %1213 = vmatprep.subr.bf16.mxu0 0
    %1214 = vmatpush1.bf16.msra.mxu0 %v1203
    %1215 = vmatprep.subr.bf16.mxu0 0
    %1216 = vmatpush1.bf16.msra.mxu0 %v1204
    %1217 = vmatprep.subr.bf16.mxu0 0
    %1218 = vmatpush1.bf16.msra.mxu0 0
    %1219 = vmatprep.subr.bf16.mxu0 0
    %1220 = vmatpush1.bf16.msra.mxu0 0
    %1221 = vmatprep.subr.bf16.mxu0 0
    %1222 = vmatpush1.bf16.msra.mxu0 0
    %1223 = vmatprep.subr.bf16.mxu0 0
    %1224 = vmatpush1.bf16.msra.mxu0 0
    %1225 = vmatprep.subr.bf16.mxu0 0
    %1226 = vmatpush1.bf16.msra.mxu0 0
    %1227 = vmatprep.subr.bf16.mxu0 0
    %1228 = vmatpush1.bf16.msra.mxu0 0
    %1229 = vmatprep.subr.bf16.mxu0 0
    %1230 = vmatpush1.bf16.msra.mxu0 0
    %1231 = vmatprep.subr.bf16.mxu0 0
    %1232 = vmatpush1.bf16.msra.mxu0 0
    %1233 = vmatprep.subr.bf16.mxu0 0
    %1234 = vmatpush1.bf16.msra.mxu0 0
    %1235 = vmatprep.subr.bf16.mxu0 0
    %1236 = vmatpush1.bf16.msra.mxu0 0
    %1237 = vmatprep.subr.bf16.mxu0 0
    %1238 = vmatpush1.bf16.msra.mxu0 0
    %1239 = vmatprep.subr.bf16.mxu0 0
    %1240 = vmatpush1.bf16.msra.mxu0 0
    %1241 = vmatprep.subr.bf16.mxu0 0
    %1242 = vmatpush1.bf16.msra.mxu0 0
    %1243 = vmatprep.subr.bf16.mxu0 0
    %1244 = vmatpush1.bf16.msra.mxu0 0
    %1245 = vmatprep.mubr.bf16.mxu0 0
    %1246 = vmatmul.mubr.bf16.gmra.mrb[0].mxu0 %v1208
    %v1247 = vpop.f32.mrb[0].mxu0
    %v1248 = vadd.f32 %v1193, %v1247
    %v1249 = vpop.f32.mrb[0].mxu0
    %v1250 = vpop.f32.mrb[0].mxu0
    %v1251 = vadd.f32 %v1193, %v1250
    %v1252 = vpop.f32.mrb[0].mxu0
    %1253 = vmatprep.mubr.bf16.mxu0 0
    %1254 = vmatmul.mubr.bf16.gmra.mrb[0].mxu0 %v1211
    %v1255 = vpop.f32.mrb[0].mxu0
    %v1256 = vadd.f32 %v1193, %v1255
    %v1257 = vpop.f32.mrb[0].mxu0
    %v1258 = vpop.f32.mrb[0].mxu0
    %v1259 = vadd.f32 %v1193, %v1258
    %v1260 = vpop.f32.mrb[0].mxu0
    %1261 = vdwg.mxu0
    %v1262 = vadd.f32 %v1248, %v299
    %v1263 = vadd.f32 %v1251, %v300
    %v1264 = vadd.f32 %v1256, %v301
    %v1265 = vadd.f32 %v1259, %v302
    %v1266 = vld [vmem:[%s10] sm:$0x1]
    %v1267 = vld [vmem:[%s11] sm:$0x1]
    %v1268 = vsel %vm221, %v1262, 0.0
    %1269 = vadd.xlane.f32.xlu0 %v1268
    %v1270 = vpop.xlane.xlu0 %1269
    %v1271 = vsel %vm221, %v1263, 0.0
    %1272 = vadd.xlane.f32.xlu0 %v1271
    %v1273 = vpop.xlane.xlu0 %1272
    %v1274 = vsel %vm221, %v1264, 0.0
    %1275 = vadd.xlane.f32.xlu0 %v1274
    %v1276 = vpop.xlane.xlu0 %1275
    %v1277 = vsel %vm221, %v1265, 0.0
    %1278 = vadd.xlane.f32.xlu0 %v1277
    %v1279 = vpop.xlane.xlu0 %1278
    %v1280 = vmul.f32 %v1270, %v234
    %v1281 = vmul.f32 %v1273, %v234
    %v1282 = vmul.f32 %v1276, %v234
    %v1283 = vmul.f32 %v1279, %v234
    %v1284 = vmul.f32 %v1262, %v1262
    %v1285 = vmul.f32 %v1263, %v1263
    %v1286 = vmul.f32 %v1264, %v1264
    %v1287 = vmul.f32 %v1265, %v1265
    %v1288 = vsel %vm221, %v1284, 0.0
    %1289 = vadd.xlane.f32.xlu0 %v1288
    %v1290 = vpop.xlane.xlu0 %1289
    %v1291 = vsel %vm221, %v1285, 0.0
    %1292 = vadd.xlane.f32.xlu0 %v1291
    %v1293 = vpop.xlane.xlu0 %1292
    %v1294 = vsel %vm221, %v1286, 0.0
    %1295 = vadd.xlane.f32.xlu0 %v1294
    %v1296 = vpop.xlane.xlu0 %1295
    %v1297 = vsel %vm221, %v1287, 0.0
    %1298 = vadd.xlane.f32.xlu0 %v1297
    %v1299 = vpop.xlane.xlu0 %1298
    %v1300 = vmul.f32 %v1290, %v234
    %v1301 = vmul.f32 %v1293, %v234
    %v1302 = vmul.f32 %v1296, %v234
    %v1303 = vmul.f32 %v1299, %v234
    %v1304 = vmul.f32 %v1280, %v1280
    %v1305 = vmul.f32 %v1281, %v1281
    %v1306 = vmul.f32 %v1282, %v1282
    %v1307 = vmul.f32 %v1283, %v1283
    %v1308 = vsub.f32 %v1300, %v1304
    %v1309 = vsub.f32 %v1301, %v1305
    %v1310 = vsub.f32 %v1302, %v1306
    %v1311 = vsub.f32 %v1303, %v1307
    %v1312 = vsub.f32 %v1262, %v1280
    %v1313 = vsub.f32 %v1263, %v1281
    %v1314 = vsub.f32 %v1264, %v1282
    %v1315 = vsub.f32 %v1265, %v1283
    %v1316 = vadd.f32 %v1308, 1e-12
    %v1317 = vadd.f32 %v1309, 1e-12
    %v1318 = vadd.f32 %v1310, 1e-12
    %v1319 = vadd.f32 %v1311, 1e-12
    %v1320 = vrsqrt.pop %v1316
    %v1321 = vrsqrt.pop %v1317
    %v1322 = vrsqrt.pop %v1318
    %v1323 = vrsqrt.pop %v1319
    %v1324 = vmul.f32 %v1312, %v1320
    %v1325 = vmul.f32 %v1313, %v1321
    %v1326 = vmul.f32 %v1314, %v1322
    %v1327 = vmul.f32 %v1315, %v1323
    %v1329 = vlaneseq
    %v1330 = vshrl.u32 %v1329, 7
    %v1331 = vsub.s32 0, %v1330
    %v1332 = vrot.slane %v1266, %v1331
    %v1334 = vmul.f32 %v1324, %v1332
    %v1335 = vmul.f32 %v1325, %v1332
    %v1336 = vmul.f32 %v1326, %v1332
    %v1337 = vmul.f32 %v1327, %v1332
    %v1339 = vlaneseq
    %v1340 = vshrl.u32 %v1339, 7
    %v1341 = vsub.s32 0, %v1340
    %v1342 = vrot.slane %v1267, %v1341
    %v1344 = vadd.f32 %v1334, %v1342
    %v1345 = vadd.f32 %v1335, %v1342
    %v1346 = vadd.f32 %v1336, %v1342
    %v1347 = vadd.f32 %v1337, %v1342
    %v1348 = vpack.c.bf16 %v1345, %v1344
    %v1349 = vpack.c.bf16 %v1347, %v1346
    %v1350 = vld [vmem:[%s12] sm:$0xf]
    %v1351 = vld [vmem:[%s12 + $0x4] sm:$0xf]
    %v1352 = vld [vmem:[%s12 + $0x8] sm:$0xf]
    %v1353 = vld [vmem:[%s12 + $0xc] sm:$0xf]
    %v1354 = vld [vmem:[%s13] sm:$0x1]
    %v1356 = vlaneseq
    %v1357 = vshrl.u32 %v1356, 7
    %v1358 = vsub.s32 0, %v1357
    %v1359 = vrot.slane %v1354, %v1358
    %v1365 = vunpack.c.l.b16 %v1350
    %v1366 = vunpack.c.l.b16 %v1351
    %v1367 = vunpack.c.l.b16 %v1352
    %v1368 = vunpack.c.l.b16 %v1353
    %v1369 = vpack.c.b16 %v1366, %v1365
    %v1370 = vpack.c.b16 %v1368, %v1367
    %v1374 = vsel %vm221, %v1348, 0
    %v1377 = vsel %vm221, %v1349, 0
    %1379 = vmatprep.subr.bf16.mxu0 0
    %1380 = vmatpush1.bf16.msra.mxu0 %v1369
    %1381 = vmatprep.subr.bf16.mxu0 0
    %1382 = vmatpush1.bf16.msra.mxu0 %v1370
    %1383 = vmatprep.subr.bf16.mxu0 0
    %1384 = vmatpush1.bf16.msra.mxu0 0
    %1385 = vmatprep.subr.bf16.mxu0 0
    %1386 = vmatpush1.bf16.msra.mxu0 0
    %1387 = vmatprep.subr.bf16.mxu0 0
    %1388 = vmatpush1.bf16.msra.mxu0 0
    %1389 = vmatprep.subr.bf16.mxu0 0
    %1390 = vmatpush1.bf16.msra.mxu0 0
    %1391 = vmatprep.subr.bf16.mxu0 0
    %1392 = vmatpush1.bf16.msra.mxu0 0
    %1393 = vmatprep.subr.bf16.mxu0 0
    %1394 = vmatpush1.bf16.msra.mxu0 0
    %1395 = vmatprep.subr.bf16.mxu0 0
    %1396 = vmatpush1.bf16.msra.mxu0 0
    %1397 = vmatprep.subr.bf16.mxu0 0
    %1398 = vmatpush1.bf16.msra.mxu0 0
    %1399 = vmatprep.subr.bf16.mxu0 0
    %1400 = vmatpush1.bf16.msra.mxu0 0
    %1401 = vmatprep.subr.bf16.mxu0 0
    %1402 = vmatpush1.bf16.msra.mxu0 0
    %1403 = vmatprep.subr.bf16.mxu0 0
    %1404 = vmatpush1.bf16.msra.mxu0 0
    %1405 = vmatprep.subr.bf16.mxu0 0
    %1406 = vmatpush1.bf16.msra.mxu0 0
    %1407 = vmatprep.subr.bf16.mxu0 0
    %1408 = vmatpush1.bf16.msra.mxu0 0
    %1409 = vmatprep.subr.bf16.mxu0 0
    %1410 = vmatpush1.bf16.msra.mxu0 0
    %1411 = vmatprep.mubr.bf16.mxu0 0
    %1412 = vmatmul.mubr.bf16.gmra.mrb[0].mxu0 %v1374
    %v1413 = vpop.f32.mrb[0].mxu0
    %v1414 = vadd.f32 %v1359, %v1413
    %v1415 = vpop.f32.mrb[0].mxu0
    %v1416 = vpop.f32.mrb[0].mxu0
    %v1417 = vadd.f32 %v1359, %v1416
    %v1418 = vpop.f32.mrb[0].mxu0
    %1419 = vmatprep.mubr.bf16.mxu0 0
    %1420 = vmatmul.mubr.bf16.gmra.mrb[0].mxu0 %v1377
    %v1421 = vpop.f32.mrb[0].mxu0
    %v1422 = vadd.f32 %v1359, %v1421
    %v1423 = vpop.f32.mrb[0].mxu0
    %v1424 = vpop.f32.mrb[0].mxu0
    %v1425 = vadd.f32 %v1359, %v1424
    %v1426 = vpop.f32.mrb[0].mxu0
    %1427 = vdwg.mxu0
    %v1428 = vmul.f32 %v1414, 0.5
    %v1429 = vmul.f32 %v1417, 0.5
    %v1430 = vmul.f32 %v1422, 0.5
    %v1431 = vmul.f32 %v1425, 0.5
    %v1432 = vmul.f32 %v1414, 0.044715
    %v1433 = vmul.f32 %v1417, 0.044715
    %v1434 = vmul.f32 %v1422, 0.044715
    %v1435 = vmul.f32 %v1425, 0.044715
    %v1436 = vmul.f32 %v1432, %v1414
    %v1437 = vmul.f32 %v1433, %v1417
    %v1438 = vmul.f32 %v1434, %v1422
    %v1439 = vmul.f32 %v1435, %v1425
    %v1440 = vmul.f32 %v1436, %v1414
    %v1441 = vmul.f32 %v1437, %v1417
    %v1442 = vmul.f32 %v1438, %v1422
    %v1443 = vmul.f32 %v1439, %v1425
    %v1444 = vadd.f32 %v1414, %v1440
    %v1445 = vadd.f32 %v1417, %v1441
    %v1446 = vadd.f32 %v1422, %v1442
    %v1447 = vadd.f32 %v1425, %v1443
    %v1448 = vmul.f32 %v1444, 0.7978846
    %v1449 = vmul.f32 %v1445, 0.7978846
    %v1450 = vmul.f32 %v1446, 0.7978846
    %v1451 = vmul.f32 %v1447, 0.7978846
    %v1452 = vtanh.pop %v1448
    %v1453 = vtanh.pop %v1449
    %v1454 = vtanh.pop %v1450
    %v1455 = vtanh.pop %v1451
    %v1456 = vadd.f32 %v1452, 1.0
    %v1457 = vadd.f32 %v1453, 1.0
    %v1458 = vadd.f32 %v1454, 1.0
    %v1459 = vadd.f32 %v1455, 1.0
    %v1460 = vmul.f32 %v1428, %v1456
    %v1461 = vmul.f32 %v1429, %v1457
    %v1462 = vmul.f32 %v1430, %v1458
    %v1463 = vmul.f32 %v1431, %v1459
    %v1464 = vpack.c.bf16 %v1461, %v1460
    %v1465 = vpack.c.bf16 %v1463, %v1462
    %v1466 = vld [vmem:[%s14] sm:$0xf]
    %v1467 = vld [vmem:[%s14 + $0x4] sm:$0xf]
    %v1468 = vld [vmem:[%s14 + $0x8] sm:$0xf]
    %v1469 = vld [vmem:[%s14 + $0xc] sm:$0xf]
    %v1470 = vld [vmem:[%s14 + $0x10] sm:$0xf]
    %v1471 = vld [vmem:[%s14 + $0x14] sm:$0xf]
    %v1472 = vld [vmem:[%s14 + $0x18] sm:$0xf]
    %v1473 = vld [vmem:[%s14 + $0x1c] sm:$0xf]
    %v1474 = vld [vmem:[%s15] sm:$0x1]
    %v1476 = vlaneseq
    %v1477 = vshrl.u32 %v1476, 7
    %v1478 = vsub.s32 0, %v1477
    %v1479 = vrot.slane %v1474, %v1478
    %v1489 = vunpack.c.l.b16 %v1466
    %v1490 = vunpack.c.l.b16 %v1467
    %v1491 = vunpack.c.l.b16 %v1468
    %v1492 = vunpack.c.l.b16 %v1469
    %v1493 = vunpack.c.l.b16 %v1470
    %v1494 = vunpack.c.l.b16 %v1471
    %v1495 = vunpack.c.l.b16 %v1472
    %v1496 = vunpack.c.l.b16 %v1473
    %v1497 = vpack.c.b16 %v1490, %v1489
    %v1498 = vpack.c.b16 %v1492, %v1491
    %v1499 = vpack.c.b16 %v1494, %v1493
    %v1500 = vpack.c.b16 %v1496, %v1495
    %v1506 = vsel %vm163, %v1464, 0
    %v1509 = vsel %vm163, %v1465, 0
    %1511 = vmatprep.subr.bf16.mxu0 0
    %1512 = vmatpush1.bf16.msra.mxu0 %v1497
    %1513 = vmatprep.subr.bf16.mxu0 0
    %1514 = vmatpush1.bf16.msra.mxu0 %v1498
    %1515 = vmatprep.subr.bf16.mxu0 0
    %1516 = vmatpush1.bf16.msra.mxu0 %v1499
    %1517 = vmatprep.subr.bf16.mxu0 0
    %1518 = vmatpush1.bf16.msra.mxu0 %v1500
    %1519 = vmatprep.subr.bf16.mxu0 0
    %1520 = vmatpush1.bf16.msra.mxu0 0
    %1521 = vmatprep.subr.bf16.mxu0 0
    %1522 = vmatpush1.bf16.msra.mxu0 0
    %1523 = vmatprep.subr.bf16.mxu0 0
    %1524 = vmatpush1.bf16.msra.mxu0 0
    %1525 = vmatprep.subr.bf16.mxu0 0
    %1526 = vmatpush1.bf16.msra.mxu0 0
    %1527 = vmatprep.subr.bf16.mxu0 0
    %1528 = vmatpush1.bf16.msra.mxu0 0
    %1529 = vmatprep.subr.bf16.mxu0 0
    %1530 = vmatpush1.bf16.msra.mxu0 0
    %1531 = vmatprep.subr.bf16.mxu0 0
    %1532 = vmatpush1.bf16.msra.mxu0 0
    %1533 = vmatprep.subr.bf16.mxu0 0
    %1534 = vmatpush1.bf16.msra.mxu0 0
    %1535 = vmatprep.subr.bf16.mxu0 0
    %1536 = vmatpush1.bf16.msra.mxu0 0
    %1537 = vmatprep.subr.bf16.mxu0 0
    %1538 = vmatpush1.bf16.msra.mxu0 0
    %1539 = vmatprep.subr.bf16.mxu0 0
    %1540 = vmatpush1.bf16.msra.mxu0 0
    %1541 = vmatprep.subr.bf16.mxu0 0
    %1542 = vmatpush1.bf16.msra.mxu0 0
    %1543 = vmatprep.mubr.bf16.mxu0 0
    %1544 = vmatmul.mubr.bf16.gmra.mrb[0].mxu0 %v1506
    %v1545 = vpop.f32.mrb[0].mxu0
    %v1546 = vadd.f32 %v1479, %v1545
    %v1547 = vpop.f32.mrb[0].mxu0
    %v1548 = vpop.f32.mrb[0].mxu0
    %v1549 = vadd.f32 %v1479, %v1548
    %v1550 = vpop.f32.mrb[0].mxu0
    %1551 = vmatprep.mubr.bf16.mxu0 0
    %1552 = vmatmul.mubr.bf16.gmra.mrb[0].mxu0 %v1509
    %v1553 = vpop.f32.mrb[0].mxu0
    %v1554 = vadd.f32 %v1479, %v1553
    %v1555 = vpop.f32.mrb[0].mxu0
    %v1556 = vpop.f32.mrb[0].mxu0
    %v1557 = vadd.f32 %v1479, %v1556
    %v1558 = vpop.f32.mrb[0].mxu0
    %1559 = vdwg.mxu0
    %v1560 = vadd.f32 %v1546, %v1344
    %v1561 = vadd.f32 %v1549, %v1345
    %v1562 = vadd.f32 %v1554, %v1346
    %v1563 = vadd.f32 %v1557, %v1347
    %v1564 = vld [vmem:[%s16] sm:$0x1]
    %v1565 = vld [vmem:[%s17] sm:$0x1]
    %v1566 = vsel %vm221, %v1560, 0.0
    %1567 = vadd.xlane.f32.xlu0 %v1566
    %v1568 = vpop.xlane.xlu0 %1567
    %v1569 = vsel %vm221, %v1561, 0.0
    %1570 = vadd.xlane.f32.xlu0 %v1569
    %v1571 = vpop.xlane.xlu0 %1570
    %v1572 = vsel %vm221, %v1562, 0.0
    %1573 = vadd.xlane.f32.xlu0 %v1572
    %v1574 = vpop.xlane.xlu0 %1573
    %v1575 = vsel %vm221, %v1563, 0.0
    %1576 = vadd.xlane.f32.xlu0 %v1575
    %v1577 = vpop.xlane.xlu0 %1576
    %v1578 = vmul.f32 %v1568, %v234
    %v1579 = vmul.f32 %v1571, %v234
    %v1580 = vmul.f32 %v1574, %v234
    %v1581 = vmul.f32 %v1577, %v234
    %v1582 = vmul.f32 %v1560, %v1560
    %v1583 = vmul.f32 %v1561, %v1561
    %v1584 = vmul.f32 %v1562, %v1562
    %v1585 = vmul.f32 %v1563, %v1563
    %v1586 = vsel %vm221, %v1582, 0.0
    %1587 = vadd.xlane.f32.xlu0 %v1586
    %v1588 = vpop.xlane.xlu0 %1587
    %v1589 = vsel %vm221, %v1583, 0.0
    %1590 = vadd.xlane.f32.xlu0 %v1589
    %v1591 = vpop.xlane.xlu0 %1590
    %v1592 = vsel %vm221, %v1584, 0.0
    %1593 = vadd.xlane.f32.xlu0 %v1592
    %v1594 = vpop.xlane.xlu0 %1593
    %v1595 = vsel %vm221, %v1585, 0.0
    %1596 = vadd.xlane.f32.xlu0 %v1595
    %v1597 = vpop.xlane.xlu0 %1596
    %v1598 = vmul.f32 %v1588, %v234
    %v1599 = vmul.f32 %v1591, %v234
    %v1600 = vmul.f32 %v1594, %v234
    %v1601 = vmul.f32 %v1597, %v234
    %v1602 = vmul.f32 %v1578, %v1578
    %v1603 = vmul.f32 %v1579, %v1579
    %v1604 = vmul.f32 %v1580, %v1580
    %v1605 = vmul.f32 %v1581, %v1581
    %v1606 = vsub.f32 %v1598, %v1602
    %v1607 = vsub.f32 %v1599, %v1603
    %v1608 = vsub.f32 %v1600, %v1604
    %v1609 = vsub.f32 %v1601, %v1605
    %v1610 = vsub.f32 %v1560, %v1578
    %v1611 = vsub.f32 %v1561, %v1579
    %v1612 = vsub.f32 %v1562, %v1580
    %v1613 = vsub.f32 %v1563, %v1581
    %v1614 = vadd.f32 %v1606, 1e-12
    %v1615 = vadd.f32 %v1607, 1e-12
    %v1616 = vadd.f32 %v1608, 1e-12
    %v1617 = vadd.f32 %v1609, 1e-12
    %v1618 = vrsqrt.pop %v1614
    %v1619 = vrsqrt.pop %v1615
    %v1620 = vrsqrt.pop %v1616
    %v1621 = vrsqrt.pop %v1617
    %v1622 = vmul.f32 %v1610, %v1618
    %v1623 = vmul.f32 %v1611, %v1619
    %v1624 = vmul.f32 %v1612, %v1620
    %v1625 = vmul.f32 %v1613, %v1621
    %v1627 = vlaneseq
    %v1628 = vshrl.u32 %v1627, 7
    %v1629 = vsub.s32 0, %v1628
    %v1630 = vrot.slane %v1564, %v1629
    %v1632 = vmul.f32 %v1622, %v1630
    %v1633 = vmul.f32 %v1623, %v1630
    %v1634 = vmul.f32 %v1624, %v1630
    %v1635 = vmul.f32 %v1625, %v1630
    %v1637 = vlaneseq
    %v1638 = vshrl.u32 %v1637, 7
    %v1639 = vsub.s32 0, %v1638
    %v1640 = vrot.slane %v1565, %v1639
    %v1642 = vadd.f32 %v1632, %v1640
    %v1643 = vadd.f32 %v1633, %v1640
    %v1644 = vadd.f32 %v1634, %v1640
    %v1645 = vadd.f32 %v1635, %v1640
    %v1646 = vpack.c.bf16 %v1643, %v1642
    %v1647 = vpack.c.bf16 %v1645, %v1644
    %s1648 = scalar_lea.vmem %s6, 16
    %v1649 = vld [vmem:[%s1648] sm:$0xf]
    %v1650 = vld [vmem:[%s1648 + $0x4] sm:$0xf]
    %v1651 = vld [vmem:[%s1648 + $0x8] sm:$0xf]
    %v1652 = vld [vmem:[%s1648 + $0xc] sm:$0xf]
    %s1653 = scalar_lea.vmem %s7, 1
    %v1654 = vld [vmem:[%s1653] sm:$0x1]
    %v1656 = vlaneseq
    %v1657 = vshrl.u32 %v1656, 7
    %v1658 = vsub.s32 0, %v1657
    %v1659 = vrot.slane %v1654, %v1658
    %v1665 = vunpack.c.l.b16 %v1649
    %v1666 = vunpack.c.l.b16 %v1650
    %v1667 = vunpack.c.l.b16 %v1651
    %v1668 = vunpack.c.l.b16 %v1652
    %v1669 = vpack.c.b16 %v1666, %v1665
    %v1670 = vpack.c.b16 %v1668, %v1667
    %v1674 = vsel %vm221, %v1646, 0
    %v1677 = vsel %vm221, %v1647, 0
    %1679 = vmatprep.subr.bf16.mxu0 0
    %1680 = vmatpush1.bf16.msra.mxu0 %v1669
    %1681 = vmatprep.subr.bf16.mxu0 0
    %1682 = vmatpush1.bf16.msra.mxu0 %v1670
    %1683 = vmatprep.subr.bf16.mxu0 0
    %1684 = vmatpush1.bf16.msra.mxu0 0
    %1685 = vmatprep.subr.bf16.mxu0 0
    %1686 = vmatpush1.bf16.msra.mxu0 0
    %1687 = vmatprep.subr.bf16.mxu0 0
    %1688 = vmatpush1.bf16.msra.mxu0 0
    %1689 = vmatprep.subr.bf16.mxu0 0
    %1690 = vmatpush1.bf16.msra.mxu0 0
    %1691 = vmatprep.subr.bf16.mxu0 0
    %1692 = vmatpush1.bf16.msra.mxu0 0
    %1693 = vmatprep.subr.bf16.mxu0 0
    %1694 = vmatpush1.bf16.msra.mxu0 0
    %1695 = vmatprep.subr.bf16.mxu0 0
    %1696 = vmatpush1.bf16.msra.mxu0 0
    %1697 = vmatprep.subr.bf16.mxu0 0
    %1698 = vmatpush1.bf16.msra.mxu0 0
    %1699 = vmatprep.subr.bf16.mxu0 0
    %1700 = vmatpush1.bf16.msra.mxu0 0
    %1701 = vmatprep.subr.bf16.mxu0 0
    %1702 = vmatpush1.bf16.msra.mxu0 0
    %1703 = vmatprep.subr.bf16.mxu0 0
    %1704 = vmatpush1.bf16.msra.mxu0 0
    %1705 = vmatprep.subr.bf16.mxu0 0
    %1706 = vmatpush1.bf16.msra.mxu0 0
    %1707 = vmatprep.subr.bf16.mxu0 0
    %1708 = vmatpush1.bf16.msra.mxu0 0
    %1709 = vmatprep.subr.bf16.mxu0 0
    %1710 = vmatpush1.bf16.msra.mxu0 0
    %1711 = vmatprep.mubr.bf16.mxu0 0
    %1712 = vmatmul.mubr.bf16.gmra.mrb[0].mxu0 %v1674
    %v1713 = vpop.f32.mrb[0].mxu0
    %v1714 = vadd.f32 %v1659, %v1713
    %v1715 = vpop.f32.mrb[0].mxu0
    %v1716 = vpop.f32.mrb[0].mxu0
    %v1717 = vadd.f32 %v1659, %v1716
    %v1718 = vpop.f32.mrb[0].mxu0
    %1719 = vmatprep.mubr.bf16.mxu0 0
    %1720 = vmatmul.mubr.bf16.gmra.mrb[0].mxu0 %v1677
    %v1721 = vpop.f32.mrb[0].mxu0
    %v1722 = vadd.f32 %v1659, %v1721
    %v1723 = vpop.f32.mrb[0].mxu0
    %v1724 = vpop.f32.mrb[0].mxu0
    %v1725 = vadd.f32 %v1659, %v1724
    %v1726 = vpop.f32.mrb[0].mxu0
    %1727 = vdwg.mxu0
    %v1728 = vpack.c.bf16 %v1717, %v1714
    %v1729 = vpack.c.bf16 %v1725, %v1722
    %1732 = vrot.lane.b32.xlu0 %v1728, 96
    %v1733 = vpop.permute.xlu0 %1732
    %1734 = vrot.lane.b32.xlu0 %v1729, 96
    %v1735 = vpop.permute.xlu0 %1734
    %v1737 = vsel %vm391, %v1728, 0
    %v1740 = vsel %vm391, %v1729, 0
    %v1743 = vsel %vm391, %v1733, 0
    %v1746 = vsel %vm391, %v1735, 0
    %1748 = vmatprep.subr.bf16.mxu0 0
    %1749 = vmatpush1.bf16.xpose.msra.mxu0 %v1743
    %1750 = vmatprep.subr.bf16.mxu0 0
    %1751 = vmatpush1.bf16.xpose.msra.mxu0 %v1746
    %1752 = vmatprep.subr.bf16.mxu0 0
    %1753 = vmatpush1.bf16.xpose.msra.mxu0 0
    %1754 = vmatprep.subr.bf16.mxu0 0
    %1755 = vmatpush1.bf16.xpose.msra.mxu0 0
    %1756 = vmatprep.subr.bf16.mxu0 0
    %1757 = vmatpush1.bf16.xpose.msra.mxu0 0
    %1758 = vmatprep.subr.bf16.mxu0 0
    %1759 = vmatpush1.bf16.xpose.msra.mxu0 0
    %1760 = vmatprep.subr.bf16.mxu0 0
    %1761 = vmatpush1.bf16.xpose.msra.mxu0 0
    %1762 = vmatprep.subr.bf16.mxu0 0
    %1763 = vmatpush1.bf16.xpose.msra.mxu0 0
    %1764 = vmatprep.subr.bf16.mxu0 0
    %1765 = vmatpush1.bf16.xpose.msra.mxu0 0
    %1766 = vmatprep.subr.bf16.mxu0 0
    %1767 = vmatpush1.bf16.xpose.msra.mxu0 0
    %1768 = vmatprep.subr.bf16.mxu0 0
    %1769 = vmatpush1.bf16.xpose.msra.mxu0 0
    %1770 = vmatprep.subr.bf16.mxu0 0
    %1771 = vmatpush1.bf16.xpose.msra.mxu0 0
    %1772 = vmatprep.subr.bf16.mxu0 0
    %1773 = vmatpush1.bf16.xpose.msra.mxu0 0
    %1774 = vmatprep.subr.bf16.mxu0 0
    %1775 = vmatpush1.bf16.xpose.msra.mxu0 0
    %1776 = vmatprep.subr.bf16.mxu0 0
    %1777 = vmatpush1.bf16.xpose.msra.mxu0 0
    %1778 = vmatprep.subr.bf16.mxu0 0
    %1779 = vmatpush1.bf16.xpose.msra.mxu0 0
    %1780 = vmatprep.mubr.bf16.mxu0 0
    %1781 = vmatmul.mubr.bf16.gmra.mrb[0].mxu0 %v1737
    %v1782 = vpop.f32.mrb[0].mxu0
    %v1783 = vadd.f32 0.0, %v1782
    %v1784 = vpop.f32.mrb[0].mxu0
    %v1785 = vpop.f32.mrb[0].mxu0
    %v1786 = vadd.f32 0.0, %v1785
    %v1787 = vpop.f32.mrb[0].mxu0
    %1788 = vmatprep.mubr.bf16.mxu0 0
    %1789 = vmatmul.mubr.bf16.gmra.mrb[0].mxu0 %v1740
    %v1790 = vpop.f32.mrb[0].mxu0
    %v1791 = vadd.f32 0.0, %v1790
    %v1792 = vpop.f32.mrb[0].mxu0
    %v1793 = vpop.f32.mrb[0].mxu0
    %v1794 = vadd.f32 0.0, %v1793
    %v1795 = vpop.f32.mrb[0].mxu0
    %1796 = vdwg.mxu0
    %v1797 = vmul.f32 %v1783, 0.35355338
    %v1798 = vmul.f32 %v1786, 0.35355338
    %v1799 = vmul.f32 %v1791, 0.35355338
    %v1800 = vmul.f32 %v1794, 0.35355338
    %v1801 = vadd.f32 %v1797, %v88
    %v1802 = vadd.f32 %v1798, %v89
    %v1803 = vadd.f32 %v1799, %v90
    %v1804 = vadd.f32 %v1800, %v91
    %v1805 = vsel %vm221, %v1801, -inf
    %1806 = vmax.xlane.f32.xlu0 %v1805
    %v1807 = vpop.xlane.xlu0 %1806
    %v1808 = vsel %vm221, %v1802, -inf
    %1809 = vmax.xlane.f32.xlu0 %v1808
    %v1810 = vpop.xlane.xlu0 %1809
    %v1811 = vsel %vm221, %v1803, -inf
    %1812 = vmax.xlane.f32.xlu0 %v1811
    %v1813 = vpop.xlane.xlu0 %1812
    %v1814 = vsel %vm221, %v1804, -inf
    %1815 = vmax.xlane.f32.xlu0 %v1814
    %v1816 = vpop.xlane.xlu0 %1815
    %v1817 = vsub.f32 %v1801, %v1807
    %v1818 = vsub.f32 %v1802, %v1810
    %v1819 = vsub.f32 %v1803, %v1813
    %v1820 = vsub.f32 %v1804, %v1816
    %v1821 = vmul.f32 %v1817, 1.442695
    %v1822 = vpow.pop %v1821
    %v1823 = vmul.f32 %v1818, 1.442695
    %v1824 = vpow.pop %v1823
    %v1825 = vmul.f32 %v1819, 1.442695
    %v1826 = vpow.pop %v1825
    %v1827 = vmul.f32 %v1820, 1.442695
    %v1828 = vpow.pop %v1827
    %v1829 = vsel %vm221, %v1822, 0.0
    %1830 = vadd.xlane.f32.xlu0 %v1829
    %v1831 = vpop.xlane.xlu0 %1830
    %v1832 = vsel %vm221, %v1824, 0.0
    %1833 = vadd.xlane.f32.xlu0 %v1832
    %v1834 = vpop.xlane.xlu0 %1833
    %v1835 = vsel %vm221, %v1826, 0.0
    %1836 = vadd.xlane.f32.xlu0 %v1835
    %v1837 = vpop.xlane.xlu0 %1836
    %v1838 = vsel %vm221, %v1828, 0.0
    %1839 = vadd.xlane.f32.xlu0 %v1838
    %v1840 = vpop.xlane.xlu0 %1839
    %v1841 = vrcp.pop %v1831
    %v1842 = vrcp.pop %v1834
    %v1843 = vrcp.pop %v1837
    %v1844 = vrcp.pop %v1840
    %v1845 = vmul.f32 %v1822, %v1841
    %v1846 = vmul.f32 %v1824, %v1842
    %v1847 = vmul.f32 %v1826, %v1843
    %v1848 = vmul.f32 %v1828, %v1844
    %v1849 = vpack.c.bf16 %v1846, %v1845
    %v1850 = vpack.c.bf16 %v1848, %v1847
    %1851 = vrot.lane.b32.xlu0 %v1728, 64
    %v1852 = vpop.permute.xlu0 %1851
    %1853 = vrot.lane.b32.xlu0 %v1729, 64
    %v1854 = vpop.permute.xlu0 %1853
    %v1858 = vsel %vm221, %v1849, 0
    %v1861 = vsel %vm221, %v1850, 0
    %1863 = vmatprep.subr.bf16.mxu0 0
    %1864 = vmatpush1.bf16.msra.mxu0 %v1852
    %1865 = vmatprep.subr.bf16.mxu0 0
    %1866 = vmatpush1.bf16.msra.mxu0 %v1854
    %1867 = vmatprep.subr.bf16.mxu0 0
    %1868 = vmatpush1.bf16.msra.mxu0 0
    %1869 = vmatprep.subr.bf16.mxu0 0
    %1870 = vmatpush1.bf16.msra.mxu0 0
    %1871 = vmatprep.subr.bf16.mxu0 0
    %1872 = vmatpush1.bf16.msra.mxu0 0
    %1873 = vmatprep.subr.bf16.mxu0 0
    %1874 = vmatpush1.bf16.msra.mxu0 0
    %1875 = vmatprep.subr.bf16.mxu0 0
    %1876 = vmatpush1.bf16.msra.mxu0 0
    %1877 = vmatprep.subr.bf16.mxu0 0
    %1878 = vmatpush1.bf16.msra.mxu0 0
    %1879 = vmatprep.subr.bf16.mxu0 0
    %1880 = vmatpush1.bf16.msra.mxu0 0
    %1881 = vmatprep.subr.bf16.mxu0 0
    %1882 = vmatpush1.bf16.msra.mxu0 0
    %1883 = vmatprep.subr.bf16.mxu0 0
    %1884 = vmatpush1.bf16.msra.mxu0 0
    %1885 = vmatprep.subr.bf16.mxu0 0
    %1886 = vmatpush1.bf16.msra.mxu0 0
    %1887 = vmatprep.subr.bf16.mxu0 0
    %1888 = vmatpush1.bf16.msra.mxu0 0
    %1889 = vmatprep.subr.bf16.mxu0 0
    %1890 = vmatpush1.bf16.msra.mxu0 0
    %1891 = vmatprep.subr.bf16.mxu0 0
    %1892 = vmatpush1.bf16.msra.mxu0 0
    %1893 = vmatprep.subr.bf16.mxu0 0
    %1894 = vmatpush1.bf16.msra.mxu0 0
    %1895 = vmatprep.mubr.bf16.mxu0 0
    %1896 = vmatmul.mubr.bf16.gmra.mrb[0].mxu0 %v1858
    %v1897 = vpop.f32.mrb[0].mxu0
    %v1898 = vadd.f32 0.0, %v1897
    %v1899 = vpop.f32.mrb[0].mxu0
    %v1900 = vpop.f32.mrb[0].mxu0
    %v1901 = vadd.f32 0.0, %v1900
    %v1902 = vpop.f32.mrb[0].mxu0
    %1903 = vmatprep.mubr.bf16.mxu0 0
    %1904 = vmatmul.mubr.bf16.gmra.mrb[0].mxu0 %v1861
    %v1905 = vpop.f32.mrb[0].mxu0
    %v1906 = vadd.f32 0.0, %v1905
    %v1907 = vpop.f32.mrb[0].mxu0
    %v1908 = vpop.f32.mrb[0].mxu0
    %v1909 = vadd.f32 0.0, %v1908
    %v1910 = vpop.f32.mrb[0].mxu0
    %1911 = vdwg.mxu0
    %1912 = vrot.lane.b32.xlu0 %v1728, 120
    %v1913 = vpop.permute.xlu0 %1912
    %1914 = vrot.lane.b32.xlu0 %v1729, 120
    %v1915 = vpop.permute.xlu0 %1914
    %1916 = vrot.lane.b32.xlu0 %v1728, 88
    %v1917 = vpop.permute.xlu0 %1916
    %1918 = vrot.lane.b32.xlu0 %v1729, 88
    %v1919 = vpop.permute.xlu0 %1918
    %v1921 = vsel %vm391, %v1913, 0
    %v1924 = vsel %vm391, %v1915, 0
    %v1927 = vsel %vm391, %v1917, 0
    %v1930 = vsel %vm391, %v1919, 0
    %1932 = vmatprep.subr.bf16.mxu0 0
    %1933 = vmatpush1.bf16.xpose.msra.mxu0 %v1927
    %1934 = vmatprep.subr.bf16.mxu0 0
    %1935 = vmatpush1.bf16.xpose.msra.mxu0 %v1930
    %1936 = vmatprep.subr.bf16.mxu0 0
    %1937 = vmatpush1.bf16.xpose.msra.mxu0 0
    %1938 = vmatprep.subr.bf16.mxu0 0
    %1939 = vmatpush1.bf16.xpose.msra.mxu0 0
    %1940 = vmatprep.subr.bf16.mxu0 0
    %1941 = vmatpush1.bf16.xpose.msra.mxu0 0
    %1942 = vmatprep.subr.bf16.mxu0 0
    %1943 = vmatpush1.bf16.xpose.msra.mxu0 0
    %1944 = vmatprep.subr.bf16.mxu0 0
    %1945 = vmatpush1.bf16.xpose.msra.mxu0 0
    %1946 = vmatprep.subr.bf16.mxu0 0
    %1947 = vmatpush1.bf16.xpose.msra.mxu0 0
    %1948 = vmatprep.subr.bf16.mxu0 0
    %1949 = vmatpush1.bf16.xpose.msra.mxu0 0
    %1950 = vmatprep.subr.bf16.mxu0 0
    %1951 = vmatpush1.bf16.xpose.msra.mxu0 0
    %1952 = vmatprep.subr.bf16.mxu0 0
    %1953 = vmatpush1.bf16.xpose.msra.mxu0 0
    %1954 = vmatprep.subr.bf16.mxu0 0
    %1955 = vmatpush1.bf16.xpose.msra.mxu0 0
    %1956 = vmatprep.subr.bf16.mxu0 0
    %1957 = vmatpush1.bf16.xpose.msra.mxu0 0
    %1958 = vmatprep.subr.bf16.mxu0 0
    %1959 = vmatpush1.bf16.xpose.msra.mxu0 0
    %1960 = vmatprep.subr.bf16.mxu0 0
    %1961 = vmatpush1.bf16.xpose.msra.mxu0 0
    %1962 = vmatprep.subr.bf16.mxu0 0
    %1963 = vmatpush1.bf16.xpose.msra.mxu0 0
    %1964 = vmatprep.mubr.bf16.mxu0 0
    %1965 = vmatmul.mubr.bf16.gmra.mrb[0].mxu0 %v1921
    %v1966 = vpop.f32.mrb[0].mxu0
    %v1967 = vadd.f32 0.0, %v1966
    %v1968 = vpop.f32.mrb[0].mxu0
    %v1969 = vpop.f32.mrb[0].mxu0
    %v1970 = vadd.f32 0.0, %v1969
    %v1971 = vpop.f32.mrb[0].mxu0
    %1972 = vmatprep.mubr.bf16.mxu0 0
    %1973 = vmatmul.mubr.bf16.gmra.mrb[0].mxu0 %v1924
    %v1974 = vpop.f32.mrb[0].mxu0
    %v1975 = vadd.f32 0.0, %v1974
    %v1976 = vpop.f32.mrb[0].mxu0
    %v1977 = vpop.f32.mrb[0].mxu0
    %v1978 = vadd.f32 0.0, %v1977
    %v1979 = vpop.f32.mrb[0].mxu0
    %1980 = vdwg.mxu0
    %v1981 = vmul.f32 %v1967, 0.35355338
    %v1982 = vmul.f32 %v1970, 0.35355338
    %v1983 = vmul.f32 %v1975, 0.35355338
    %v1984 = vmul.f32 %v1978, 0.35355338
    %v1985 = vadd.f32 %v1981, %v88
    %v1986 = vadd.f32 %v1982, %v89
    %v1987 = vadd.f32 %v1983, %v90
    %v1988 = vadd.f32 %v1984, %v91
    %v1989 = vsel %vm221, %v1985, -inf
    %1990 = vmax.xlane.f32.xlu0 %v1989
    %v1991 = vpop.xlane.xlu0 %1990
    %v1992 = vsel %vm221, %v1986, -inf
    %1993 = vmax.xlane.f32.xlu0 %v1992
    %v1994 = vpop.xlane.xlu0 %1993
    %v1995 = vsel %vm221, %v1987, -inf
    %1996 = vmax.xlane.f32.xlu0 %v1995
    %v1997 = vpop.xlane.xlu0 %1996
    %v1998 = vsel %vm221, %v1988, -inf
    %1999 = vmax.xlane.f32.xlu0 %v1998
    %v2000 = vpop.xlane.xlu0 %1999
    %v2001 = vsub.f32 %v1985, %v1991
    %v2002 = vsub.f32 %v1986, %v1994
    %v2003 = vsub.f32 %v1987, %v1997
    %v2004 = vsub.f32 %v1988, %v2000
    %v2005 = vmul.f32 %v2001, 1.442695
    %v2006 = vpow.pop %v2005
    %v2007 = vmul.f32 %v2002, 1.442695
    %v2008 = vpow.pop %v2007
    %v2009 = vmul.f32 %v2003, 1.442695
    %v2010 = vpow.pop %v2009
    %v2011 = vmul.f32 %v2004, 1.442695
    %v2012 = vpow.pop %v2011
    %v2013 = vsel %vm221, %v2006, 0.0
    %2014 = vadd.xlane.f32.xlu0 %v2013
    %v2015 = vpop.xlane.xlu0 %2014
    %v2016 = vsel %vm221, %v2008, 0.0
    %2017 = vadd.xlane.f32.xlu0 %v2016
    %v2018 = vpop.xlane.xlu0 %2017
    %v2019 = vsel %vm221, %v2010, 0.0
    %2020 = vadd.xlane.f32.xlu0 %v2019
    %v2021 = vpop.xlane.xlu0 %2020
    %v2022 = vsel %vm221, %v2012, 0.0
    %2023 = vadd.xlane.f32.xlu0 %v2022
    %v2024 = vpop.xlane.xlu0 %2023
    %v2025 = vrcp.pop %v2015
    %v2026 = vrcp.pop %v2018
    %v2027 = vrcp.pop %v2021
    %v2028 = vrcp.pop %v2024
    %v2029 = vmul.f32 %v2006, %v2025
    %v2030 = vmul.f32 %v2008, %v2026
    %v2031 = vmul.f32 %v2010, %v2027
    %v2032 = vmul.f32 %v2012, %v2028
    %v2033 = vpack.c.bf16 %v2030, %v2029
    %v2034 = vpack.c.bf16 %v2032, %v2031
    %2035 = vrot.lane.b32.xlu0 %v1728, 56
    %v2036 = vpop.permute.xlu0 %2035
    %2037 = vrot.lane.b32.xlu0 %v1729, 56
    %v2038 = vpop.permute.xlu0 %2037
    %v2042 = vsel %vm221, %v2033, 0
    %v2045 = vsel %vm221, %v2034, 0
    %2047 = vmatprep.subr.bf16.mxu0 0
    %2048 = vmatpush1.bf16.msra.mxu0 %v2036
    %2049 = vmatprep.subr.bf16.mxu0 0
    %2050 = vmatpush1.bf16.msra.mxu0 %v2038
    %2051 = vmatprep.subr.bf16.mxu0 0
    %2052 = vmatpush1.bf16.msra.mxu0 0
    %2053 = vmatprep.subr.bf16.mxu0 0
    %2054 = vmatpush1.bf16.msra.mxu0 0
    %2055 = vmatprep.subr.bf16.mxu0 0
    %2056 = vmatpush1.bf16.msra.mxu0 0
    %2057 = vmatprep.subr.bf16.mxu0 0
    %2058 = vmatpush1.bf16.msra.mxu0 0
    %2059 = vmatprep.subr.bf16.mxu0 0
    %2060 = vmatpush1.bf16.msra.mxu0 0
    %2061 = vmatprep.subr.bf16.mxu0 0
    %2062 = vmatpush1.bf16.msra.mxu0 0
    %2063 = vmatprep.subr.bf16.mxu0 0
    %2064 = vmatpush1.bf16.msra.mxu0 0
    %2065 = vmatprep.subr.bf16.mxu0 0
    %2066 = vmatpush1.bf16.msra.mxu0 0
    %2067 = vmatprep.subr.bf16.mxu0 0
    %2068 = vmatpush1.bf16.msra.mxu0 0
    %2069 = vmatprep.subr.bf16.mxu0 0
    %2070 = vmatpush1.bf16.msra.mxu0 0
    %2071 = vmatprep.subr.bf16.mxu0 0
    %2072 = vmatpush1.bf16.msra.mxu0 0
    %2073 = vmatprep.subr.bf16.mxu0 0
    %2074 = vmatpush1.bf16.msra.mxu0 0
    %2075 = vmatprep.subr.bf16.mxu0 0
    %2076 = vmatpush1.bf16.msra.mxu0 0
    %2077 = vmatprep.subr.bf16.mxu0 0
    %2078 = vmatpush1.bf16.msra.mxu0 0
    %2079 = vmatprep.mubr.bf16.mxu0 0
    %2080 = vmatmul.mubr.bf16.gmra.mrb[0].mxu0 %v2042
    %v2081 = vpop.f32.mrb[0].mxu0
    %v2082 = vadd.f32 0.0, %v2081
    %v2083 = vpop.f32.mrb[0].mxu0
    %v2084 = vpop.f32.mrb[0].mxu0
    %v2085 = vadd.f32 0.0, %v2084
    %v2086 = vpop.f32.mrb[0].mxu0
    %2087 = vmatprep.mubr.bf16.mxu0 0
    %2088 = vmatmul.mubr.bf16.gmra.mrb[0].mxu0 %v2045
    %v2089 = vpop.f32.mrb[0].mxu0
    %v2090 = vadd.f32 0.0, %v2089
    %v2091 = vpop.f32.mrb[0].mxu0
    %v2092 = vpop.f32.mrb[0].mxu0
    %v2093 = vadd.f32 0.0, %v2092
    %v2094 = vpop.f32.mrb[0].mxu0
    %2095 = vdwg.mxu0
    %2096 = vrot.lane.b32.xlu0 %v1728, 112
    %v2097 = vpop.permute.xlu0 %2096
    %2098 = vrot.lane.b32.xlu0 %v1729, 112
    %v2099 = vpop.permute.xlu0 %2098
    %2100 = vrot.lane.b32.xlu0 %v1728, 80
    %v2101 = vpop.permute.xlu0 %2100
    %2102 = vrot.lane.b32.xlu0 %v1729, 80
    %v2103 = vpop.permute.xlu0 %2102
    %v2105 = vsel %vm391, %v2097, 0
    %v2108 = vsel %vm391, %v2099, 0
    %v2111 = vsel %vm391, %v2101, 0
    %v2114 = vsel %vm391, %v2103, 0
    %2116 = vmatprep.subr.bf16.mxu0 0
    %2117 = vmatpush1.bf16.xpose.msra.mxu0 %v2111
    %2118 = vmatprep.subr.bf16.mxu0 0
    %2119 = vmatpush1.bf16.xpose.msra.mxu0 %v2114
    %2120 = vmatprep.subr.bf16.mxu0 0
    %2121 = vmatpush1.bf16.xpose.msra.mxu0 0
    %2122 = vmatprep.subr.bf16.mxu0 0
    %2123 = vmatpush1.bf16.xpose.msra.mxu0 0
    %2124 = vmatprep.subr.bf16.mxu0 0
    %2125 = vmatpush1.bf16.xpose.msra.mxu0 0
    %2126 = vmatprep.subr.bf16.mxu0 0
    %2127 = vmatpush1.bf16.xpose.msra.mxu0 0
    %2128 = vmatprep.subr.bf16.mxu0 0
    %2129 = vmatpush1.bf16.xpose.msra.mxu0 0
    %2130 = vmatprep.subr.bf16.mxu0 0
    %2131 = vmatpush1.bf16.xpose.msra.mxu0 0
    %2132 = vmatprep.subr.bf16.mxu0 0
    %2133 = vmatpush1.bf16.xpose.msra.mxu0 0
    %2134 = vmatprep.subr.bf16.mxu0 0
    %2135 = vmatpush1.bf16.xpose.msra.mxu0 0
    %2136 = vmatprep.subr.bf16.mxu0 0
    %2137 = vmatpush1.bf16.xpose.msra.mxu0 0
    %2138 = vmatprep.subr.bf16.mxu0 0
    %2139 = vmatpush1.bf16.xpose.msra.mxu0 0
    %2140 = vmatprep.subr.bf16.mxu0 0
    %2141 = vmatpush1.bf16.xpose.msra.mxu0 0
    %2142 = vmatprep.subr.bf16.mxu0 0
    %2143 = vmatpush1.bf16.xpose.msra.mxu0 0
    %2144 = vmatprep.subr.bf16.mxu0 0
    %2145 = vmatpush1.bf16.xpose.msra.mxu0 0
    %2146 = vmatprep.subr.bf16.mxu0 0
    %2147 = vmatpush1.bf16.xpose.msra.mxu0 0
    %2148 = vmatprep.mubr.bf16.mxu0 0
    %2149 = vmatmul.mubr.bf16.gmra.mrb[0].mxu0 %v2105
    %v2150 = vpop.f32.mrb[0].mxu0
    %v2151 = vadd.f32 0.0, %v2150
    %v2152 = vpop.f32.mrb[0].mxu0
    %v2153 = vpop.f32.mrb[0].mxu0
    %v2154 = vadd.f32 0.0, %v2153
    %v2155 = vpop.f32.mrb[0].mxu0
    %2156 = vmatprep.mubr.bf16.mxu0 0
    %2157 = vmatmul.mubr.bf16.gmra.mrb[0].mxu0 %v2108
    %v2158 = vpop.f32.mrb[0].mxu0
    %v2159 = vadd.f32 0.0, %v2158
    %v2160 = vpop.f32.mrb[0].mxu0
    %v2161 = vpop.f32.mrb[0].mxu0
    %v2162 = vadd.f32 0.0, %v2161
    %v2163 = vpop.f32.mrb[0].mxu0
    %2164 = vdwg.mxu0
    %v2165 = vmul.f32 %v2151, 0.35355338
    %v2166 = vmul.f32 %v2154, 0.35355338
    %v2167 = vmul.f32 %v2159, 0.35355338
    %v2168 = vmul.f32 %v2162, 0.35355338
    %v2169 = vadd.f32 %v2165, %v88
    %v2170 = vadd.f32 %v2166, %v89
    %v2171 = vadd.f32 %v2167, %v90
    %v2172 = vadd.f32 %v2168, %v91
    %v2173 = vsel %vm221, %v2169, -inf
    %2174 = vmax.xlane.f32.xlu0 %v2173
    %v2175 = vpop.xlane.xlu0 %2174
    %v2176 = vsel %vm221, %v2170, -inf
    %2177 = vmax.xlane.f32.xlu0 %v2176
    %v2178 = vpop.xlane.xlu0 %2177
    %v2179 = vsel %vm221, %v2171, -inf
    %2180 = vmax.xlane.f32.xlu0 %v2179
    %v2181 = vpop.xlane.xlu0 %2180
    %v2182 = vsel %vm221, %v2172, -inf
    %2183 = vmax.xlane.f32.xlu0 %v2182
    %v2184 = vpop.xlane.xlu0 %2183
    %v2185 = vsub.f32 %v2169, %v2175
    %v2186 = vsub.f32 %v2170, %v2178
    %v2187 = vsub.f32 %v2171, %v2181
    %v2188 = vsub.f32 %v2172, %v2184
    %v2189 = vmul.f32 %v2185, 1.442695
    %v2190 = vpow.pop %v2189
    %v2191 = vmul.f32 %v2186, 1.442695
    %v2192 = vpow.pop %v2191
    %v2193 = vmul.f32 %v2187, 1.442695
    %v2194 = vpow.pop %v2193
    %v2195 = vmul.f32 %v2188, 1.442695
    %v2196 = vpow.pop %v2195
    %v2197 = vsel %vm221, %v2190, 0.0
    %2198 = vadd.xlane.f32.xlu0 %v2197
    %v2199 = vpop.xlane.xlu0 %2198
    %v2200 = vsel %vm221, %v2192, 0.0
    %2201 = vadd.xlane.f32.xlu0 %v2200
    %v2202 = vpop.xlane.xlu0 %2201
    %v2203 = vsel %vm221, %v2194, 0.0
    %2204 = vadd.xlane.f32.xlu0 %v2203
    %v2205 = vpop.xlane.xlu0 %2204
    %v2206 = vsel %vm221, %v2196, 0.0
    %2207 = vadd.xlane.f32.xlu0 %v2206
    %v2208 = vpop.xlane.xlu0 %2207
    %v2209 = vrcp.pop %v2199
    %v2210 = vrcp.pop %v2202
    %v2211 = vrcp.pop %v2205
    %v2212 = vrcp.pop %v2208
    %v2213 = vmul.f32 %v2190, %v2209
    %v2214 = vmul.f32 %v2192, %v2210
    %v2215 = vmul.f32 %v2194, %v2211
    %v2216 = vmul.f32 %v2196, %v2212
    %v2217 = vpack.c.bf16 %v2214, %v2213
    %v2218 = vpack.c.bf16 %v2216, %v2215
    %2219 = vrot.lane.b32.xlu0 %v1728, 48
    %v2220 = vpop.permute.xlu0 %2219
    %2221 = vrot.lane.b32.xlu0 %v1729, 48
    %v2222 = vpop.permute.xlu0 %2221
    %v2226 = vsel %vm221, %v2217, 0
    %v2229 = vsel %vm221, %v2218, 0
    %2231 = vmatprep.subr.bf16.mxu0 0
    %2232 = vmatpush1.bf16.msra.mxu0 %v2220
    %2233 = vmatprep.subr.bf16.mxu0 0
    %2234 = vmatpush1.bf16.msra.mxu0 %v2222
    %2235 = vmatprep.subr.bf16.mxu0 0
    %2236 = vmatpush1.bf16.msra.mxu0 0
    %2237 = vmatprep.subr.bf16.mxu0 0
    %2238 = vmatpush1.bf16.msra.mxu0 0
    %2239 = vmatprep.subr.bf16.mxu0 0
    %2240 = vmatpush1.bf16.msra.mxu0 0
    %2241 = vmatprep.subr.bf16.mxu0 0
    %2242 = vmatpush1.bf16.msra.mxu0 0
    %2243 = vmatprep.subr.bf16.mxu0 0
    %2244 = vmatpush1.bf16.msra.mxu0 0
    %2245 = vmatprep.subr.bf16.mxu0 0
    %2246 = vmatpush1.bf16.msra.mxu0 0
    %2247 = vmatprep.subr.bf16.mxu0 0
    %2248 = vmatpush1.bf16.msra.mxu0 0
    %2249 = vmatprep.subr.bf16.mxu0 0
    %2250 = vmatpush1.bf16.msra.mxu0 0
    %2251 = vmatprep.subr.bf16.mxu0 0
    %2252 = vmatpush1.bf16.msra.mxu0 0
    %2253 = vmatprep.subr.bf16.mxu0 0
    %2254 = vmatpush1.bf16.msra.mxu0 0
    %2255 = vmatprep.subr.bf16.mxu0 0
    %2256 = vmatpush1.bf16.msra.mxu0 0
    %2257 = vmatprep.subr.bf16.mxu0 0
    %2258 = vmatpush1.bf16.msra.mxu0 0
    %2259 = vmatprep.subr.bf16.mxu0 0
    %2260 = vmatpush1.bf16.msra.mxu0 0
    %2261 = vmatprep.subr.bf16.mxu0 0
    %2262 = vmatpush1.bf16.msra.mxu0 0
    %2263 = vmatprep.mubr.bf16.mxu0 0
    %2264 = vmatmul.mubr.bf16.gmra.mrb[0].mxu0 %v2226
    %v2265 = vpop.f32.mrb[0].mxu0
    %v2266 = vadd.f32 0.0, %v2265
    %v2267 = vpop.f32.mrb[0].mxu0
    %v2268 = vpop.f32.mrb[0].mxu0
    %v2269 = vadd.f32 0.0, %v2268
    %v2270 = vpop.f32.mrb[0].mxu0
    %2271 = vmatprep.mubr.bf16.mxu0 0
    %2272 = vmatmul.mubr.bf16.gmra.mrb[0].mxu0 %v2229
    %v2273 = vpop.f32.mrb[0].mxu0
    %v2274 = vadd.f32 0.0, %v2273
    %v2275 = vpop.f32.mrb[0].mxu0
    %v2276 = vpop.f32.mrb[0].mxu0
    %v2277 = vadd.f32 0.0, %v2276
    %v2278 = vpop.f32.mrb[0].mxu0
    %2279 = vdwg.mxu0
    %2280 = vrot.lane.b32.xlu0 %v1728, 104
    %v2281 = vpop.permute.xlu0 %2280
    %2282 = vrot.lane.b32.xlu0 %v1729, 104
    %v2283 = vpop.permute.xlu0 %2282
    %2284 = vrot.lane.b32.xlu0 %v1728, 72
    %v2285 = vpop.permute.xlu0 %2284
    %2286 = vrot.lane.b32.xlu0 %v1729, 72
    %v2287 = vpop.permute.xlu0 %2286
    %v2289 = vsel %vm391, %v2281, 0
    %v2292 = vsel %vm391, %v2283, 0
    %v2295 = vsel %vm391, %v2285, 0
    %v2298 = vsel %vm391, %v2287, 0
    %2300 = vmatprep.subr.bf16.mxu0 0
    %2301 = vmatpush1.bf16.xpose.msra.mxu0 %v2295
    %2302 = vmatprep.subr.bf16.mxu0 0
    %2303 = vmatpush1.bf16.xpose.msra.mxu0 %v2298
    %2304 = vmatprep.subr.bf16.mxu0 0
    %2305 = vmatpush1.bf16.xpose.msra.mxu0 0
    %2306 = vmatprep.subr.bf16.mxu0 0
    %2307 = vmatpush1.bf16.xpose.msra.mxu0 0
    %2308 = vmatprep.subr.bf16.mxu0 0
    %2309 = vmatpush1.bf16.xpose.msra.mxu0 0
    %2310 = vmatprep.subr.bf16.mxu0 0
    %2311 = vmatpush1.bf16.xpose.msra.mxu0 0
    %2312 = vmatprep.subr.bf16.mxu0 0
    %2313 = vmatpush1.bf16.xpose.msra.mxu0 0
    %2314 = vmatprep.subr.bf16.mxu0 0
    %2315 = vmatpush1.bf16.xpose.msra.mxu0 0
    %2316 = vmatprep.subr.bf16.mxu0 0
    %2317 = vmatpush1.bf16.xpose.msra.mxu0 0
    %2318 = vmatprep.subr.bf16.mxu0 0
    %2319 = vmatpush1.bf16.xpose.msra.mxu0 0
    %2320 = vmatprep.subr.bf16.mxu0 0
    %2321 = vmatpush1.bf16.xpose.msra.mxu0 0
    %2322 = vmatprep.subr.bf16.mxu0 0
    %2323 = vmatpush1.bf16.xpose.msra.mxu0 0
    %2324 = vmatprep.subr.bf16.mxu0 0
    %2325 = vmatpush1.bf16.xpose.msra.mxu0 0
    %2326 = vmatprep.subr.bf16.mxu0 0
    %2327 = vmatpush1.bf16.xpose.msra.mxu0 0
    %2328 = vmatprep.subr.bf16.mxu0 0
    %2329 = vmatpush1.bf16.xpose.msra.mxu0 0
    %2330 = vmatprep.subr.bf16.mxu0 0
    %2331 = vmatpush1.bf16.xpose.msra.mxu0 0
    %2332 = vmatprep.mubr.bf16.mxu0 0
    %2333 = vmatmul.mubr.bf16.gmra.mrb[0].mxu0 %v2289
    %v2334 = vpop.f32.mrb[0].mxu0
    %v2335 = vadd.f32 0.0, %v2334
    %v2336 = vpop.f32.mrb[0].mxu0
    %v2337 = vpop.f32.mrb[0].mxu0
    %v2338 = vadd.f32 0.0, %v2337
    %v2339 = vpop.f32.mrb[0].mxu0
    %2340 = vmatprep.mubr.bf16.mxu0 0
    %2341 = vmatmul.mubr.bf16.gmra.mrb[0].mxu0 %v2292
    %v2342 = vpop.f32.mrb[0].mxu0
    %v2343 = vadd.f32 0.0, %v2342
    %v2344 = vpop.f32.mrb[0].mxu0
    %v2345 = vpop.f32.mrb[0].mxu0
    %v2346 = vadd.f32 0.0, %v2345
    %v2347 = vpop.f32.mrb[0].mxu0
    %2348 = vdwg.mxu0
    %v2349 = vmul.f32 %v2335, 0.35355338
    %v2350 = vmul.f32 %v2338, 0.35355338
    %v2351 = vmul.f32 %v2343, 0.35355338
    %v2352 = vmul.f32 %v2346, 0.35355338
    %v2353 = vadd.f32 %v2349, %v88
    %v2354 = vadd.f32 %v2350, %v89
    %v2355 = vadd.f32 %v2351, %v90
    %v2356 = vadd.f32 %v2352, %v91
    %v2357 = vsel %vm221, %v2353, -inf
    %2358 = vmax.xlane.f32.xlu0 %v2357
    %v2359 = vpop.xlane.xlu0 %2358
    %v2360 = vsel %vm221, %v2354, -inf
    %2361 = vmax.xlane.f32.xlu0 %v2360
    %v2362 = vpop.xlane.xlu0 %2361
    %v2363 = vsel %vm221, %v2355, -inf
    %2364 = vmax.xlane.f32.xlu0 %v2363
    %v2365 = vpop.xlane.xlu0 %2364
    %v2366 = vsel %vm221, %v2356, -inf
    %2367 = vmax.xlane.f32.xlu0 %v2366
    %v2368 = vpop.xlane.xlu0 %2367
    %v2369 = vsub.f32 %v2353, %v2359
    %v2370 = vsub.f32 %v2354, %v2362
    %v2371 = vsub.f32 %v2355, %v2365
    %v2372 = vsub.f32 %v2356, %v2368
    %v2373 = vmul.f32 %v2369, 1.442695
    %v2374 = vpow.pop %v2373
    %v2375 = vmul.f32 %v2370, 1.442695
    %v2376 = vpow.pop %v2375
    %v2377 = vmul.f32 %v2371, 1.442695
    %v2378 = vpow.pop %v2377
    %v2379 = vmul.f32 %v2372, 1.442695
    %v2380 = vpow.pop %v2379
    %v2381 = vsel %vm221, %v2374, 0.0
    %2382 = vadd.xlane.f32.xlu0 %v2381
    %v2383 = vpop.xlane.xlu0 %2382
    %v2384 = vsel %vm221, %v2376, 0.0
    %2385 = vadd.xlane.f32.xlu0 %v2384
    %v2386 = vpop.xlane.xlu0 %2385
    %v2387 = vsel %vm221, %v2378, 0.0
    %2388 = vadd.xlane.f32.xlu0 %v2387
    %v2389 = vpop.xlane.xlu0 %2388
    %v2390 = vsel %vm221, %v2380, 0.0
    %2391 = vadd.xlane.f32.xlu0 %v2390
    %v2392 = vpop.xlane.xlu0 %2391
    %v2393 = vrcp.pop %v2383
    %v2394 = vrcp.pop %v2386
    %v2395 = vrcp.pop %v2389
    %v2396 = vrcp.pop %v2392
    %v2397 = vmul.f32 %v2374, %v2393
    %v2398 = vmul.f32 %v2376, %v2394
    %v2399 = vmul.f32 %v2378, %v2395
    %v2400 = vmul.f32 %v2380, %v2396
    %v2401 = vpack.c.bf16 %v2398, %v2397
    %v2402 = vpack.c.bf16 %v2400, %v2399
    %2403 = vrot.lane.b32.xlu0 %v1728, 40
    %v2404 = vpop.permute.xlu0 %2403
    %2405 = vrot.lane.b32.xlu0 %v1729, 40
    %v2406 = vpop.permute.xlu0 %2405
    %v2410 = vsel %vm221, %v2401, 0
    %v2413 = vsel %vm221, %v2402, 0
    %2415 = vmatprep.subr.bf16.mxu0 0
    %2416 = vmatpush1.bf16.msra.mxu0 %v2404
    %2417 = vmatprep.subr.bf16.mxu0 0
    %2418 = vmatpush1.bf16.msra.mxu0 %v2406
    %2419 = vmatprep.subr.bf16.mxu0 0
    %2420 = vmatpush1.bf16.msra.mxu0 0
    %2421 = vmatprep.subr.bf16.mxu0 0
    %2422 = vmatpush1.bf16.msra.mxu0 0
    %2423 = vmatprep.subr.bf16.mxu0 0
    %2424 = vmatpush1.bf16.msra.mxu0 0
    %2425 = vmatprep.subr.bf16.mxu0 0
    %2426 = vmatpush1.bf16.msra.mxu0 0
    %2427 = vmatprep.subr.bf16.mxu0 0
    %2428 = vmatpush1.bf16.msra.mxu0 0
    %2429 = vmatprep.subr.bf16.mxu0 0
    %2430 = vmatpush1.bf16.msra.mxu0 0
    %2431 = vmatprep.subr.bf16.mxu0 0
    %2432 = vmatpush1.bf16.msra.mxu0 0
    %2433 = vmatprep.subr.bf16.mxu0 0
    %2434 = vmatpush1.bf16.msra.mxu0 0
    %2435 = vmatprep.subr.bf16.mxu0 0
    %2436 = vmatpush1.bf16.msra.mxu0 0
    %2437 = vmatprep.subr.bf16.mxu0 0
    %2438 = vmatpush1.bf16.msra.mxu0 0
    %2439 = vmatprep.subr.bf16.mxu0 0
    %2440 = vmatpush1.bf16.msra.mxu0 0
    %2441 = vmatprep.subr.bf16.mxu0 0
    %2442 = vmatpush1.bf16.msra.mxu0 0
    %2443 = vmatprep.subr.bf16.mxu0 0
    %2444 = vmatpush1.bf16.msra.mxu0 0
    %2445 = vmatprep.subr.bf16.mxu0 0
    %2446 = vmatpush1.bf16.msra.mxu0 0
    %2447 = vmatprep.mubr.bf16.mxu0 0
    %2448 = vmatmul.mubr.bf16.gmra.mrb[0].mxu0 %v2410
    %v2449 = vpop.f32.mrb[0].mxu0
    %v2450 = vadd.f32 0.0, %v2449
    %v2451 = vpop.f32.mrb[0].mxu0
    %v2452 = vpop.f32.mrb[0].mxu0
    %v2453 = vadd.f32 0.0, %v2452
    %v2454 = vpop.f32.mrb[0].mxu0
    %2455 = vmatprep.mubr.bf16.mxu0 0
    %2456 = vmatmul.mubr.bf16.gmra.mrb[0].mxu0 %v2413
    %v2457 = vpop.f32.mrb[0].mxu0
    %v2458 = vadd.f32 0.0, %v2457
    %v2459 = vpop.f32.mrb[0].mxu0
    %v2460 = vpop.f32.mrb[0].mxu0
    %v2461 = vadd.f32 0.0, %v2460
    %v2462 = vpop.f32.mrb[0].mxu0
    %2463 = vdwg.mxu0
    %2468 = vrot.lane.b32.xlu0 %v2082, 8
    %v2469 = vpop.permute.xlu0 %2468
    %2470 = vrot.lane.b32.xlu0 %v2085, 8
    %v2471 = vpop.permute.xlu0 %2470
    %2472 = vrot.lane.b32.xlu0 %v2090, 8
    %v2473 = vpop.permute.xlu0 %2472
    %2474 = vrot.lane.b32.xlu0 %v2093, 8
    %v2475 = vpop.permute.xlu0 %2474
    %2484 = vrot.lane.b32.xlu0 %v2266, 16
    %v2485 = vpop.permute.xlu0 %2484
    %2486 = vrot.lane.b32.xlu0 %v2269, 16
    %v2487 = vpop.permute.xlu0 %2486
    %2488 = vrot.lane.b32.xlu0 %v2274, 16
    %v2489 = vpop.permute.xlu0 %2488
    %2490 = vrot.lane.b32.xlu0 %v2277, 16
    %v2491 = vpop.permute.xlu0 %2490
    %2500 = vrot.lane.b32.xlu0 %v2450, 24
    %v2501 = vpop.permute.xlu0 %2500
    %2502 = vrot.lane.b32.xlu0 %v2453, 24
    %v2503 = vpop.permute.xlu0 %2502
    %2504 = vrot.lane.b32.xlu0 %v2458, 24
    %v2505 = vpop.permute.xlu0 %2504
    %2506 = vrot.lane.b32.xlu0 %v2461, 24
    %v2507 = vpop.permute.xlu0 %2506
    %v2512 = vsel %vm391, %v1898, %v2469
    %v2513 = vsel %vm391, %v1901, %v2471
    %v2514 = vsel %vm391, %v1906, %v2473
    %v2515 = vsel %vm391, %v1909, %v2475
    %v2516 = vsel %vm1172, %v2512, %v2485
    %v2517 = vsel %vm1172, %v2513, %v2487
    %v2518 = vsel %vm1172, %v2514, %v2489
    %v2519 = vsel %vm1172, %v2515, %v2491
    %v2520 = vsel %vm1177, %v2516, %v2501
    %v2521 = vsel %vm1177, %v2517, %v2503
    %v2522 = vsel %vm1177, %v2518, %v2505
    %v2523 = vsel %vm1177, %v2519, %v2507
    %v2524 = vpack.c.bf16 %v2521, %v2520
    %v2525 = vpack.c.bf16 %v2523, %v2522
    %s2526 = scalar_lea.vmem %s8, 16
    %v2527 = vld [vmem:[%s2526] sm:$0xf]
    %v2528 = vld [vmem:[%s2526 + $0x4] sm:$0xf]
    %v2529 = vld [vmem:[%s2526 + $0x8] sm:$0xf]
    %v2530 = vld [vmem:[%s2526 + $0xc] sm:$0xf]
    %s2531 = scalar_lea.vmem %s9, 1
    %v2532 = vld [vmem:[%s2531] sm:$0x1]
    %v2534 = vlaneseq
    %v2535 = vshrl.u32 %v2534, 7
    %v2536 = vsub.s32 0, %v2535
    %v2537 = vrot.slane %v2532, %v2536
    %v2543 = vunpack.c.l.b16 %v2527
    %v2544 = vunpack.c.l.b16 %v2528
    %v2545 = vunpack.c.l.b16 %v2529
    %v2546 = vunpack.c.l.b16 %v2530
    %v2547 = vpack.c.b16 %v2544, %v2543
    %v2548 = vpack.c.b16 %v2546, %v2545
    %v2552 = vsel %vm221, %v2524, 0
    %v2555 = vsel %vm221, %v2525, 0
    %2557 = vmatprep.subr.bf16.mxu0 0
    %2558 = vmatpush1.bf16.msra.mxu0 %v2547
    %2559 = vmatprep.subr.bf16.mxu0 0
    %2560 = vmatpush1.bf16.msra.mxu0 %v2548
    %2561 = vmatprep.subr.bf16.mxu0 0
    %2562 = vmatpush1.bf16.msra.mxu0 0
    %2563 = vmatprep.subr.bf16.mxu0 0
    %2564 = vmatpush1.bf16.msra.mxu0 0
    %2565 = vmatprep.subr.bf16.mxu0 0
    %2566 = vmatpush1.bf16.msra.mxu0 0
    %2567 = vmatprep.subr.bf16.mxu0 0
    %2568 = vmatpush1.bf16.msra.mxu0 0
    %2569 = vmatprep.subr.bf16.mxu0 0
    %2570 = vmatpush1.bf16.msra.mxu0 0
    %2571 = vmatprep.subr.bf16.mxu0 0
    %2572 = vmatpush1.bf16.msra.mxu0 0
    %2573 = vmatprep.subr.bf16.mxu0 0
    %2574 = vmatpush1.bf16.msra.mxu0 0
    %2575 = vmatprep.subr.bf16.mxu0 0
    %2576 = vmatpush1.bf16.msra.mxu0 0
    %2577 = vmatprep.subr.bf16.mxu0 0
    %2578 = vmatpush1.bf16.msra.mxu0 0
    %2579 = vmatprep.subr.bf16.mxu0 0
    %2580 = vmatpush1.bf16.msra.mxu0 0
    %2581 = vmatprep.subr.bf16.mxu0 0
    %2582 = vmatpush1.bf16.msra.mxu0 0
    %2583 = vmatprep.subr.bf16.mxu0 0
    %2584 = vmatpush1.bf16.msra.mxu0 0
    %2585 = vmatprep.subr.bf16.mxu0 0
    %2586 = vmatpush1.bf16.msra.mxu0 0
    %2587 = vmatprep.subr.bf16.mxu0 0
    %2588 = vmatpush1.bf16.msra.mxu0 0
    %2589 = vmatprep.mubr.bf16.mxu0 0
    %2590 = vmatmul.mubr.bf16.gmra.mrb[0].mxu0 %v2552
    %v2591 = vpop.f32.mrb[0].mxu0
    %v2592 = vadd.f32 %v2537, %v2591
    %v2593 = vpop.f32.mrb[0].mxu0
    %v2594 = vpop.f32.mrb[0].mxu0
    %v2595 = vadd.f32 %v2537, %v2594
    %v2596 = vpop.f32.mrb[0].mxu0
    %2597 = vmatprep.mubr.bf16.mxu0 0
    %2598 = vmatmul.mubr.bf16.gmra.mrb[0].mxu0 %v2555
    %v2599 = vpop.f32.mrb[0].mxu0
    %v2600 = vadd.f32 %v2537, %v2599
    %v2601 = vpop.f32.mrb[0].mxu0
    %v2602 = vpop.f32.mrb[0].mxu0
    %v2603 = vadd.f32 %v2537, %v2602
    %v2604 = vpop.f32.mrb[0].mxu0
    %2605 = vdwg.mxu0
    %v2606 = vadd.f32 %v2592, %v1642
    %v2607 = vadd.f32 %v2595, %v1643
    %v2608 = vadd.f32 %v2600, %v1644
    %v2609 = vadd.f32 %v2603, %v1645
    %s2610 = scalar_lea.vmem %s10, 1
    %v2611 = vld [vmem:[%s2610] sm:$0x1]
    %s2612 = scalar_lea.vmem %s11, 1
    %v2613 = vld [vmem:[%s2612] sm:$0x1]
    %v2614 = vsel %vm221, %v2606, 0.0
    %2615 = vadd.xlane.f32.xlu0 %v2614
    %v2616 = vpop.xlane.xlu0 %2615
    %v2617 = vsel %vm221, %v2607, 0.0
    %2618 = vadd.xlane.f32.xlu0 %v2617
    %v2619 = vpop.xlane.xlu0 %2618
    %v2620 = vsel %vm221, %v2608, 0.0
    %2621 = vadd.xlane.f32.xlu0 %v2620
    %v2622 = vpop.xlane.xlu0 %2621
    %v2623 = vsel %vm221, %v2609, 0.0
    %2624 = vadd.xlane.f32.xlu0 %v2623
    %v2625 = vpop.xlane.xlu0 %2624
    %v2626 = vmul.f32 %v2616, %v234
    %v2627 = vmul.f32 %v2619, %v234
    %v2628 = vmul.f32 %v2622, %v234
    %v2629 = vmul.f32 %v2625, %v234
    %v2630 = vmul.f32 %v2606, %v2606
    %v2631 = vmul.f32 %v2607, %v2607
    %v2632 = vmul.f32 %v2608, %v2608
    %v2633 = vmul.f32 %v2609, %v2609
    %v2634 = vsel %vm221, %v2630, 0.0
    %2635 = vadd.xlane.f32.xlu0 %v2634
    %v2636 = vpop.xlane.xlu0 %2635
    %v2637 = vsel %vm221, %v2631, 0.0
    %2638 = vadd.xlane.f32.xlu0 %v2637
    %v2639 = vpop.xlane.xlu0 %2638
    %v2640 = vsel %vm221, %v2632, 0.0
    %2641 = vadd.xlane.f32.xlu0 %v2640
    %v2642 = vpop.xlane.xlu0 %2641
    %v2643 = vsel %vm221, %v2633, 0.0
    %2644 = vadd.xlane.f32.xlu0 %v2643
    %v2645 = vpop.xlane.xlu0 %2644
    %v2646 = vmul.f32 %v2636, %v234
    %v2647 = vmul.f32 %v2639, %v234
    %v2648 = vmul.f32 %v2642, %v234
    %v2649 = vmul.f32 %v2645, %v234
    %v2650 = vmul.f32 %v2626, %v2626
    %v2651 = vmul.f32 %v2627, %v2627
    %v2652 = vmul.f32 %v2628, %v2628
    %v2653 = vmul.f32 %v2629, %v2629
    %v2654 = vsub.f32 %v2646, %v2650
    %v2655 = vsub.f32 %v2647, %v2651
    %v2656 = vsub.f32 %v2648, %v2652
    %v2657 = vsub.f32 %v2649, %v2653
    %v2658 = vsub.f32 %v2606, %v2626
    %v2659 = vsub.f32 %v2607, %v2627
    %v2660 = vsub.f32 %v2608, %v2628
    %v2661 = vsub.f32 %v2609, %v2629
    %v2662 = vadd.f32 %v2654, 1e-12
    %v2663 = vadd.f32 %v2655, 1e-12
    %v2664 = vadd.f32 %v2656, 1e-12
    %v2665 = vadd.f32 %v2657, 1e-12
    %v2666 = vrsqrt.pop %v2662
    %v2667 = vrsqrt.pop %v2663
    %v2668 = vrsqrt.pop %v2664
    %v2669 = vrsqrt.pop %v2665
    %v2670 = vmul.f32 %v2658, %v2666
    %v2671 = vmul.f32 %v2659, %v2667
    %v2672 = vmul.f32 %v2660, %v2668
    %v2673 = vmul.f32 %v2661, %v2669
    %v2675 = vlaneseq
    %v2676 = vshrl.u32 %v2675, 7
    %v2677 = vsub.s32 0, %v2676
    %v2678 = vrot.slane %v2611, %v2677
    %v2680 = vmul.f32 %v2670, %v2678
    %v2681 = vmul.f32 %v2671, %v2678
    %v2682 = vmul.f32 %v2672, %v2678
    %v2683 = vmul.f32 %v2673, %v2678
    %v2685 = vlaneseq
    %v2686 = vshrl.u32 %v2685, 7
    %v2687 = vsub.s32 0, %v2686
    %v2688 = vrot.slane %v2613, %v2687
    %v2690 = vadd.f32 %v2680, %v2688
    %v2691 = vadd.f32 %v2681, %v2688
    %v2692 = vadd.f32 %v2682, %v2688
    %v2693 = vadd.f32 %v2683, %v2688
    %v2694 = vpack.c.bf16 %v2691, %v2690
    %v2695 = vpack.c.bf16 %v2693, %v2692
    %s2696 = scalar_lea.vmem %s12, 16
    %v2697 = vld [vmem:[%s2696] sm:$0xf]
    %v2698 = vld [vmem:[%s2696 + $0x4] sm:$0xf]
    %v2699 = vld [vmem:[%s2696 + $0x8] sm:$0xf]
    %v2700 = vld [vmem:[%s2696 + $0xc] sm:$0xf]
    %s2701 = scalar_lea.vmem %s13, 1
    %v2702 = vld [vmem:[%s2701] sm:$0x1]
    %v2704 = vlaneseq
    %v2705 = vshrl.u32 %v2704, 7
    %v2706 = vsub.s32 0, %v2705
    %v2707 = vrot.slane %v2702, %v2706
    %v2713 = vunpack.c.l.b16 %v2697
    %v2714 = vunpack.c.l.b16 %v2698
    %v2715 = vunpack.c.l.b16 %v2699
    %v2716 = vunpack.c.l.b16 %v2700
    %v2717 = vpack.c.b16 %v2714, %v2713
    %v2718 = vpack.c.b16 %v2716, %v2715
    %v2722 = vsel %vm221, %v2694, 0
    %v2725 = vsel %vm221, %v2695, 0
    %2727 = vmatprep.subr.bf16.mxu0 0
    %2728 = vmatpush1.bf16.msra.mxu0 %v2717
    %2729 = vmatprep.subr.bf16.mxu0 0
    %2730 = vmatpush1.bf16.msra.mxu0 %v2718
    %2731 = vmatprep.subr.bf16.mxu0 0
    %2732 = vmatpush1.bf16.msra.mxu0 0
    %2733 = vmatprep.subr.bf16.mxu0 0
    %2734 = vmatpush1.bf16.msra.mxu0 0
    %2735 = vmatprep.subr.bf16.mxu0 0
    %2736 = vmatpush1.bf16.msra.mxu0 0
    %2737 = vmatprep.subr.bf16.mxu0 0
    %2738 = vmatpush1.bf16.msra.mxu0 0
    %2739 = vmatprep.subr.bf16.mxu0 0
    %2740 = vmatpush1.bf16.msra.mxu0 0
    %2741 = vmatprep.subr.bf16.mxu0 0
    %2742 = vmatpush1.bf16.msra.mxu0 0
    %2743 = vmatprep.subr.bf16.mxu0 0
    %2744 = vmatpush1.bf16.msra.mxu0 0
    %2745 = vmatprep.subr.bf16.mxu0 0
    %2746 = vmatpush1.bf16.msra.mxu0 0
    %2747 = vmatprep.subr.bf16.mxu0 0
    %2748 = vmatpush1.bf16.msra.mxu0 0
    %2749 = vmatprep.subr.bf16.mxu0 0
    %2750 = vmatpush1.bf16.msra.mxu0 0
    %2751 = vmatprep.subr.bf16.mxu0 0
    %2752 = vmatpush1.bf16.msra.mxu0 0
    %2753 = vmatprep.subr.bf16.mxu0 0
    %2754 = vmatpush1.bf16.msra.mxu0 0
    %2755 = vmatprep.subr.bf16.mxu0 0
    %2756 = vmatpush1.bf16.msra.mxu0 0
    %2757 = vmatprep.subr.bf16.mxu0 0
    %2758 = vmatpush1.bf16.msra.mxu0 0
    %2759 = vmatprep.mubr.bf16.mxu0 0
    %2760 = vmatmul.mubr.bf16.gmra.mrb[0].mxu0 %v2722
    %v2761 = vpop.f32.mrb[0].mxu0
    %v2762 = vadd.f32 %v2707, %v2761
    %v2763 = vpop.f32.mrb[0].mxu0
    %v2764 = vpop.f32.mrb[0].mxu0
    %v2765 = vadd.f32 %v2707, %v2764
    %v2766 = vpop.f32.mrb[0].mxu0
    %2767 = vmatprep.mubr.bf16.mxu0 0
    %2768 = vmatmul.mubr.bf16.gmra.mrb[0].mxu0 %v2725
    %v2769 = vpop.f32.mrb[0].mxu0
    %v2770 = vadd.f32 %v2707, %v2769
    %v2771 = vpop.f32.mrb[0].mxu0
    %v2772 = vpop.f32.mrb[0].mxu0
    %v2773 = vadd.f32 %v2707, %v2772
    %v2774 = vpop.f32.mrb[0].mxu0
    %2775 = vdwg.mxu0
    %v2776 = vmul.f32 %v2762, 0.5
    %v2777 = vmul.f32 %v2765, 0.5
    %v2778 = vmul.f32 %v2770, 0.5
    %v2779 = vmul.f32 %v2773, 0.5
    %v2780 = vmul.f32 %v2762, 0.044715
    %v2781 = vmul.f32 %v2765, 0.044715
    %v2782 = vmul.f32 %v2770, 0.044715
    %v2783 = vmul.f32 %v2773, 0.044715
    %v2784 = vmul.f32 %v2780, %v2762
    %v2785 = vmul.f32 %v2781, %v2765
    %v2786 = vmul.f32 %v2782, %v2770
    %v2787 = vmul.f32 %v2783, %v2773
    %v2788 = vmul.f32 %v2784, %v2762
    %v2789 = vmul.f32 %v2785, %v2765
    %v2790 = vmul.f32 %v2786, %v2770
    %v2791 = vmul.f32 %v2787, %v2773
    %v2792 = vadd.f32 %v2762, %v2788
    %v2793 = vadd.f32 %v2765, %v2789
    %v2794 = vadd.f32 %v2770, %v2790
    %v2795 = vadd.f32 %v2773, %v2791
    %v2796 = vmul.f32 %v2792, 0.7978846
    %v2797 = vmul.f32 %v2793, 0.7978846
    %v2798 = vmul.f32 %v2794, 0.7978846
    %v2799 = vmul.f32 %v2795, 0.7978846
    %v2800 = vtanh.pop %v2796
    %v2801 = vtanh.pop %v2797
    %v2802 = vtanh.pop %v2798
    %v2803 = vtanh.pop %v2799
    %v2804 = vadd.f32 %v2800, 1.0
    %v2805 = vadd.f32 %v2801, 1.0
    %v2806 = vadd.f32 %v2802, 1.0
    %v2807 = vadd.f32 %v2803, 1.0
    %v2808 = vmul.f32 %v2776, %v2804
    %v2809 = vmul.f32 %v2777, %v2805
    %v2810 = vmul.f32 %v2778, %v2806
    %v2811 = vmul.f32 %v2779, %v2807
    %v2812 = vpack.c.bf16 %v2809, %v2808
    %v2813 = vpack.c.bf16 %v2811, %v2810
    %s2814 = scalar_lea.vmem %s14, 32
    %v2815 = vld [vmem:[%s2814] sm:$0xf]
    %v2816 = vld [vmem:[%s2814 + $0x4] sm:$0xf]
    %v2817 = vld [vmem:[%s2814 + $0x8] sm:$0xf]
    %v2818 = vld [vmem:[%s2814 + $0xc] sm:$0xf]
    %v2819 = vld [vmem:[%s2814 + $0x10] sm:$0xf]
    %v2820 = vld [vmem:[%s2814 + $0x14] sm:$0xf]
    %v2821 = vld [vmem:[%s2814 + $0x18] sm:$0xf]
    %v2822 = vld [vmem:[%s2814 + $0x1c] sm:$0xf]
    %s2823 = scalar_lea.vmem %s15, 1
    %v2824 = vld [vmem:[%s2823] sm:$0x1]
    %v2826 = vlaneseq
    %v2827 = vshrl.u32 %v2826, 7
    %v2828 = vsub.s32 0, %v2827
    %v2829 = vrot.slane %v2824, %v2828
    %v2839 = vunpack.c.l.b16 %v2815
    %v2840 = vunpack.c.l.b16 %v2816
    %v2841 = vunpack.c.l.b16 %v2817
    %v2842 = vunpack.c.l.b16 %v2818
    %v2843 = vunpack.c.l.b16 %v2819
    %v2844 = vunpack.c.l.b16 %v2820
    %v2845 = vunpack.c.l.b16 %v2821
    %v2846 = vunpack.c.l.b16 %v2822
    %v2847 = vpack.c.b16 %v2840, %v2839
    %v2848 = vpack.c.b16 %v2842, %v2841
    %v2849 = vpack.c.b16 %v2844, %v2843
    %v2850 = vpack.c.b16 %v2846, %v2845
    %v2856 = vsel %vm163, %v2812, 0
    %v2859 = vsel %vm163, %v2813, 0
    %2861 = vmatprep.subr.bf16.mxu0 0
    %2862 = vmatpush1.bf16.msra.mxu0 %v2847
    %2863 = vmatprep.subr.bf16.mxu0 0
    %2864 = vmatpush1.bf16.msra.mxu0 %v2848
    %2865 = vmatprep.subr.bf16.mxu0 0
    %2866 = vmatpush1.bf16.msra.mxu0 %v2849
    %2867 = vmatprep.subr.bf16.mxu0 0
    %2868 = vmatpush1.bf16.msra.mxu0 %v2850
    %2869 = vmatprep.subr.bf16.mxu0 0
    %2870 = vmatpush1.bf16.msra.mxu0 0
    %2871 = vmatprep.subr.bf16.mxu0 0
    %2872 = vmatpush1.bf16.msra.mxu0 0
    %2873 = vmatprep.subr.bf16.mxu0 0
    %2874 = vmatpush1.bf16.msra.mxu0 0
    %2875 = vmatprep.subr.bf16.mxu0 0
    %2876 = vmatpush1.bf16.msra.mxu0 0
    %2877 = vmatprep.subr.bf16.mxu0 0
    %2878 = vmatpush1.bf16.msra.mxu0 0
    %2879 = vmatprep.subr.bf16.mxu0 0
    %2880 = vmatpush1.bf16.msra.mxu0 0
    %2881 = vmatprep.subr.bf16.mxu0 0
    %2882 = vmatpush1.bf16.msra.mxu0 0
    %2883 = vmatprep.subr.bf16.mxu0 0
    %2884 = vmatpush1.bf16.msra.mxu0 0
    %2885 = vmatprep.subr.bf16.mxu0 0
    %2886 = vmatpush1.bf16.msra.mxu0 0
    %2887 = vmatprep.subr.bf16.mxu0 0
    %2888 = vmatpush1.bf16.msra.mxu0 0
    %2889 = vmatprep.subr.bf16.mxu0 0
    %2890 = vmatpush1.bf16.msra.mxu0 0
    %2891 = vmatprep.subr.bf16.mxu0 0
    %2892 = vmatpush1.bf16.msra.mxu0 0
    %2893 = vmatprep.mubr.bf16.mxu0 0
    %2894 = vmatmul.mubr.bf16.gmra.mrb[0].mxu0 %v2856
    %v2895 = vpop.f32.mrb[0].mxu0
    %v2896 = vadd.f32 %v2829, %v2895
    %v2897 = vpop.f32.mrb[0].mxu0
    %v2898 = vpop.f32.mrb[0].mxu0
    %v2899 = vadd.f32 %v2829, %v2898
    %v2900 = vpop.f32.mrb[0].mxu0
    %2901 = vmatprep.mubr.bf16.mxu0 0
    %2902 = vmatmul.mubr.bf16.gmra.mrb[0].mxu0 %v2859
    %v2903 = vpop.f32.mrb[0].mxu0
    %v2904 = vadd.f32 %v2829, %v2903
    %v2905 = vpop.f32.mrb[0].mxu0
    %v2906 = vpop.f32.mrb[0].mxu0
    %v2907 = vadd.f32 %v2829, %v2906
    %v2908 = vpop.f32.mrb[0].mxu0
    %2909 = vdwg.mxu0
    %v2910 = vadd.f32 %v2896, %v2690
    %v2911 = vadd.f32 %v2899, %v2691
    %v2912 = vadd.f32 %v2904, %v2692
    %v2913 = vadd.f32 %v2907, %v2693
    %s2914 = scalar_lea.vmem %s16, 1
    %v2915 = vld [vmem:[%s2914] sm:$0x1]
    %s2916 = scalar_lea.vmem %s17, 1
    %v2917 = vld [vmem:[%s2916] sm:$0x1]
    %v2918 = vsel %vm221, %v2910, 0.0
    %2919 = vadd.xlane.f32.xlu0 %v2918
    %v2920 = vpop.xlane.xlu0 %2919
    %v2921 = vsel %vm221, %v2911, 0.0
    %2922 = vadd.xlane.f32.xlu0 %v2921
    %v2923 = vpop.xlane.xlu0 %2922
    %v2924 = vsel %vm221, %v2912, 0.0
    %2925 = vadd.xlane.f32.xlu0 %v2924
    %v2926 = vpop.xlane.xlu0 %2925
    %v2927 = vsel %vm221, %v2913, 0.0
    %2928 = vadd.xlane.f32.xlu0 %v2927
    %v2929 = vpop.xlane.xlu0 %2928
    %v2930 = vmul.f32 %v2920, %v234
    %v2931 = vmul.f32 %v2923, %v234
    %v2932 = vmul.f32 %v2926, %v234
    %v2933 = vmul.f32 %v2929, %v234
    %v2934 = vmul.f32 %v2910, %v2910
    %v2935 = vmul.f32 %v2911, %v2911
    %v2936 = vmul.f32 %v2912, %v2912
    %v2937 = vmul.f32 %v2913, %v2913
    %v2938 = vsel %vm221, %v2934, 0.0
    %2939 = vadd.xlane.f32.xlu0 %v2938
    %v2940 = vpop.xlane.xlu0 %2939
    %v2941 = vsel %vm221, %v2935, 0.0
    %2942 = vadd.xlane.f32.xlu0 %v2941
    %v2943 = vpop.xlane.xlu0 %2942
    %v2944 = vsel %vm221, %v2936, 0.0
    %2945 = vadd.xlane.f32.xlu0 %v2944
    %v2946 = vpop.xlane.xlu0 %2945
    %v2947 = vsel %vm221, %v2937, 0.0
    %2948 = vadd.xlane.f32.xlu0 %v2947
    %v2949 = vpop.xlane.xlu0 %2948
    %v2950 = vmul.f32 %v2940, %v234
    %v2951 = vmul.f32 %v2943, %v234
    %v2952 = vmul.f32 %v2946, %v234
    %v2953 = vmul.f32 %v2949, %v234
    %v2954 = vmul.f32 %v2930, %v2930
    %v2955 = vmul.f32 %v2931, %v2931
    %v2956 = vmul.f32 %v2932, %v2932
    %v2957 = vmul.f32 %v2933, %v2933
    %v2958 = vsub.f32 %v2950, %v2954
    %v2959 = vsub.f32 %v2951, %v2955
    %v2960 = vsub.f32 %v2952, %v2956
    %v2961 = vsub.f32 %v2953, %v2957
    %v2962 = vsub.f32 %v2910, %v2930
    %v2963 = vsub.f32 %v2911, %v2931
    %v2964 = vsub.f32 %v2912, %v2932
    %v2965 = vsub.f32 %v2913, %v2933
    %v2966 = vadd.f32 %v2958, 1e-12
    %v2967 = vadd.f32 %v2959, 1e-12
    %v2968 = vadd.f32 %v2960, 1e-12
    %v2969 = vadd.f32 %v2961, 1e-12
    %v2970 = vrsqrt.pop %v2966
    %v2971 = vrsqrt.pop %v2967
    %v2972 = vrsqrt.pop %v2968
    %v2973 = vrsqrt.pop %v2969
    %v2974 = vmul.f32 %v2962, %v2970
    %v2975 = vmul.f32 %v2963, %v2971
    %v2976 = vmul.f32 %v2964, %v2972
    %v2977 = vmul.f32 %v2965, %v2973
    %v2979 = vlaneseq
    %v2980 = vshrl.u32 %v2979, 7
    %v2981 = vsub.s32 0, %v2980
    %v2982 = vrot.slane %v2915, %v2981
    %v2984 = vmul.f32 %v2974, %v2982
    %v2985 = vmul.f32 %v2975, %v2982
    %v2986 = vmul.f32 %v2976, %v2982
    %v2987 = vmul.f32 %v2977, %v2982
    %v2989 = vlaneseq
    %v2990 = vshrl.u32 %v2989, 7
    %v2991 = vsub.s32 0, %v2990
    %v2992 = vrot.slane %v2917, %v2991
    %v2994 = vadd.f32 %v2984, %v2992
    %v2995 = vadd.f32 %v2985, %v2992
    %v2996 = vadd.f32 %v2986, %v2992
    %v2997 = vadd.f32 %v2987, %v2992
    %2998 = vst.msk [vmem:[#allocation2] sm:$0xff] %vm221, %v2994
    %2999 = vst.msk [vmem:[#allocation2 + $0x8] sm:$0xff] %vm221, %v2995
    %3000 = vst.msk [vmem:[#allocation2 + $0x10] sm:$0xff] %vm221, %v2996
    %3001 = vst.msk [vmem:[#allocation2 + $0x18] sm:$0xff] %vm221, %v2997
    %v3002 = vld [vmem:[#allocation2] ss:$8 sm:$0xf]
    %v3003 = vpack.c.bf16 %v3002, %v3002
    %v3004 = vld [vmem:[%s18] sm:$0xf]
    %v3005 = vld [vmem:[%s18 + $0x4] sm:$0xf]
    %v3006 = vld [vmem:[%s18 + $0x8] sm:$0xf]
    %v3007 = vld [vmem:[%s18 + $0xc] sm:$0xf]
    %v3008 = vld [vmem:[%s19] sm:$0x1]
    %v3010 = vlaneseq
    %v3011 = vshrl.u32 %v3010, 7
    %v3012 = vsub.s32 0, %v3011
    %v3013 = vrot.slane %v3008, %v3012
    %v3019 = vunpack.c.l.b16 %v3004
    %v3020 = vunpack.c.l.b16 %v3005
    %v3021 = vunpack.c.l.b16 %v3006
    %v3022 = vunpack.c.l.b16 %v3007
    %v3023 = vpack.c.b16 %v3020, %v3019
    %v3024 = vpack.c.b16 %v3022, %v3021
    %v3028 = vsel %vm221, %v3003, 0
    %3030 = vmatprep.subr.bf16.mxu0 0
    %3031 = vmatpush1.bf16.msra.mxu0 %v3023
    %3032 = vmatprep.subr.bf16.mxu0 0
    %3033 = vmatpush1.bf16.msra.mxu0 %v3024
    %3034 = vmatprep.subr.bf16.mxu0 0
    %3035 = vmatpush1.bf16.msra.mxu0 0
    %3036 = vmatprep.subr.bf16.mxu0 0
    %3037 = vmatpush1.bf16.msra.mxu0 0
    %3038 = vmatprep.subr.bf16.mxu0 0
    %3039 = vmatpush1.bf16.msra.mxu0 0
    %3040 = vmatprep.subr.bf16.mxu0 0
    %3041 = vmatpush1.bf16.msra.mxu0 0
    %3042 = vmatprep.subr.bf16.mxu0 0
    %3043 = vmatpush1.bf16.msra.mxu0 0
    %3044 = vmatprep.subr.bf16.mxu0 0
    %3045 = vmatpush1.bf16.msra.mxu0 0
    %3046 = vmatprep.subr.bf16.mxu0 0
    %3047 = vmatpush1.bf16.msra.mxu0 0
    %3048 = vmatprep.subr.bf16.mxu0 0
    %3049 = vmatpush1.bf16.msra.mxu0 0
    %3050 = vmatprep.subr.bf16.mxu0 0
    %3051 = vmatpush1.bf16.msra.mxu0 0
    %3052 = vmatprep.subr.bf16.mxu0 0
    %3053 = vmatpush1.bf16.msra.mxu0 0
    %3054 = vmatprep.subr.bf16.mxu0 0
    %3055 = vmatpush1.bf16.msra.mxu0 0
    %3056 = vmatprep.subr.bf16.mxu0 0
    %3057 = vmatpush1.bf16.msra.mxu0 0
    %3058 = vmatprep.subr.bf16.mxu0 0
    %3059 = vmatpush1.bf16.msra.mxu0 0
    %3060 = vmatprep.subr.bf16.mxu0 0
    %3061 = vmatpush1.bf16.msra.mxu0 0
    %3062 = vmatprep.mubr.bf16.mxu0 0
    %3063 = vmatmul.mubr.bf16.gmra.mrb[0].mxu0 %v3028
    %v3064 = vpop.f32.mrb[0].mxu0
    %v3065 = vadd.f32 %v3013, %v3064
    %v3066 = vpop.f32.mrb[0].mxu0
    %v3067 = vpop.f32.mrb[0].mxu0
    %v3068 = vpop.f32.mrb[0].mxu0
    %3069 = vdwg.mxu0
    %v3070 = vtanh.pop %v3065
    %v3072 = vrot.slane %v3070, 2
    %v3074 = vsub.f32 %v3070, %v3072
    %v3075 = vand.u32 2147483647, %v3074
    %v3076 = vpack.c.bf16 %v3070, %v3070
    %v3077 = vld [vmem:[%s20] sm:$0xf]
    %v3078 = vld [vmem:[%s20 + $0x4] sm:$0xf]
    %v3079 = vld [vmem:[%s20 + $0x8] sm:$0xf]
    %v3080 = vld [vmem:[%s20 + $0xc] sm:$0xf]
    %v3081 = vld [vmem:[%s21] sm:$0xf]
    %v3082 = vld [vmem:[%s21 + $0x4] sm:$0xf]
    %v3083 = vld [vmem:[%s21 + $0x8] sm:$0xf]
    %v3084 = vld [vmem:[%s21 + $0xc] sm:$0xf]
    %v3086 = vrot.slane %v3076, 1
    %v3091 = vunpack.c.l.b16 %v3081
    %v3092 = vunpack.c.l.b16 %v3082
    %v3093 = vunpack.c.l.b16 %v3083
    %v3094 = vunpack.c.l.b16 %v3084
    %v3095 = vpack.c.b16 %v3092, %v3091
    %v3096 = vpack.c.b16 %v3094, %v3093
    %v3100 = vsel %vm221, %v3086, 0
    %3102 = vmatprep.subr.bf16.mxu0 0
    %3103 = vmatpush1.bf16.msra.mxu0 %v3095
    %3104 = vmatprep.subr.bf16.mxu0 0
    %3105 = vmatpush1.bf16.msra.mxu0 %v3096
    %3106 = vmatprep.subr.bf16.mxu0 0
    %3107 = vmatpush1.bf16.msra.mxu0 0
    %3108 = vmatprep.subr.bf16.mxu0 0
    %3109 = vmatpush1.bf16.msra.mxu0 0
    %3110 = vmatprep.subr.bf16.mxu0 0
    %3111 = vmatpush1.bf16.msra.mxu0 0
    %3112 = vmatprep.subr.bf16.mxu0 0
    %3113 = vmatpush1.bf16.msra.mxu0 0
    %3114 = vmatprep.subr.bf16.mxu0 0
    %3115 = vmatpush1.bf16.msra.mxu0 0
    %3116 = vmatprep.subr.bf16.mxu0 0
    %3117 = vmatpush1.bf16.msra.mxu0 0
    %3118 = vmatprep.subr.bf16.mxu0 0
    %3119 = vmatpush1.bf16.msra.mxu0 0
    %3120 = vmatprep.subr.bf16.mxu0 0
    %3121 = vmatpush1.bf16.msra.mxu0 0
    %3122 = vmatprep.subr.bf16.mxu0 0
    %3123 = vmatpush1.bf16.msra.mxu0 0
    %3124 = vmatprep.subr.bf16.mxu0 0
    %3125 = vmatpush1.bf16.msra.mxu0 0
    %3126 = vmatprep.subr.bf16.mxu0 0
    %3127 = vmatpush1.bf16.msra.mxu0 0
    %3128 = vmatprep.subr.bf16.mxu0 0
    %3129 = vmatpush1.bf16.msra.mxu0 0
    %3130 = vmatprep.subr.bf16.mxu0 0
    %3131 = vmatpush1.bf16.msra.mxu0 0
    %3132 = vmatprep.subr.bf16.mxu0 0
    %3133 = vmatpush1.bf16.msra.mxu0 0
    %3134 = vmatprep.mubr.bf16.mxu0 0
    %3135 = vmatmul.mubr.bf16.gmra.mrb[0].mxu0 %v3100
    %v3136 = vpop.f32.mrb[0].mxu0
    %v3137 = vadd.f32 0.0, %v3136
    %v3138 = vpop.f32.mrb[0].mxu0
    %v3139 = vpop.f32.mrb[0].mxu0
    %v3140 = vpop.f32.mrb[0].mxu0
    %3141 = vdwg.mxu0
    %v3146 = vunpack.c.l.b16 %v3077
    %v3147 = vunpack.c.l.b16 %v3078
    %v3148 = vunpack.c.l.b16 %v3079
    %v3149 = vunpack.c.l.b16 %v3080
    %v3150 = vpack.c.b16 %v3147, %v3146
    %v3151 = vpack.c.b16 %v3149, %v3148
    %v3155 = vsel %vm221, %v3076, 0
    %3157 = vmatprep.subr.bf16.mxu0 0
    %3158 = vmatpush1.bf16.msra.mxu0 %v3150
    %3159 = vmatprep.subr.bf16.mxu0 0
    %3160 = vmatpush1.bf16.msra.mxu0 %v3151
    %3161 = vmatprep.subr.bf16.mxu0 0
    %3162 = vmatpush1.bf16.msra.mxu0 0
    %3163 = vmatprep.subr.bf16.mxu0 0
    %3164 = vmatpush1.bf16.msra.mxu0 0
    %3165 = vmatprep.subr.bf16.mxu0 0
    %3166 = vmatpush1.bf16.msra.mxu0 0
    %3167 = vmatprep.subr.bf16.mxu0 0
    %3168 = vmatpush1.bf16.msra.mxu0 0
    %3169 = vmatprep.subr.bf16.mxu0 0
    %3170 = vmatpush1.bf16.msra.mxu0 0
    %3171 = vmatprep.subr.bf16.mxu0 0
    %3172 = vmatpush1.bf16.msra.mxu0 0
    %3173 = vmatprep.subr.bf16.mxu0 0
    %3174 = vmatpush1.bf16.msra.mxu0 0
    %3175 = vmatprep.subr.bf16.mxu0 0
    %3176 = vmatpush1.bf16.msra.mxu0 0
    %3177 = vmatprep.subr.bf16.mxu0 0
    %3178 = vmatpush1.bf16.msra.mxu0 0
    %3179 = vmatprep.subr.bf16.mxu0 0
    %3180 = vmatpush1.bf16.msra.mxu0 0
    %3181 = vmatprep.subr.bf16.mxu0 0
    %3182 = vmatpush1.bf16.msra.mxu0 0
    %3183 = vmatprep.subr.bf16.mxu0 0
    %3184 = vmatpush1.bf16.msra.mxu0 0
    %3185 = vmatprep.subr.bf16.mxu0 0
    %3186 = vmatpush1.bf16.msra.mxu0 0
    %3187 = vmatprep.subr.bf16.mxu0 0
    %3188 = vmatpush1.bf16.msra.mxu0 0
    %3189 = vmatprep.mubr.bf16.mxu0 0
    %3190 = vmatmul.mubr.bf16.gmra.mrb[0].mxu0 %v3155
    %v3191 = vpop.f32.mrb[0].mxu0
    %v3192 = vadd.f32 %v3137, %v3191
    %v3193 = vpop.f32.mrb[0].mxu0
    %v3194 = vpop.f32.mrb[0].mxu0
    %v3195 = vpop.f32.mrb[0].mxu0
    %3196 = vdwg.mxu0
    %v3197 = vpack.c.bf16 %v3075, %v3075
    %v3198 = vld [vmem:[%s22] sm:$0xf]
    %v3199 = vld [vmem:[%s22 + $0x4] sm:$0xf]
    %v3200 = vld [vmem:[%s22 + $0x8] sm:$0xf]
    %v3201 = vld [vmem:[%s22 + $0xc] sm:$0xf]
    %v3206 = vunpack.c.l.b16 %v3198
    %v3207 = vunpack.c.l.b16 %v3199
    %v3208 = vunpack.c.l.b16 %v3200
    %v3209 = vunpack.c.l.b16 %v3201
    %v3210 = vpack.c.b16 %v3207, %v3206
    %v3211 = vpack.c.b16 %v3209, %v3208
    %v3215 = vsel %vm221, %v3197, 0
    %3217 = vmatprep.subr.bf16.mxu0 0
    %3218 = vmatpush1.bf16.msra.mxu0 %v3210
    %3219 = vmatprep.subr.bf16.mxu0 0
    %3220 = vmatpush1.bf16.msra.mxu0 %v3211
    %3221 = vmatprep.subr.bf16.mxu0 0
    %3222 = vmatpush1.bf16.msra.mxu0 0
    %3223 = vmatprep.subr.bf16.mxu0 0
    %3224 = vmatpush1.bf16.msra.mxu0 0
    %3225 = vmatprep.subr.bf16.mxu0 0
    %3226 = vmatpush1.bf16.msra.mxu0 0
    %3227 = vmatprep.subr.bf16.mxu0 0
    %3228 = vmatpush1.bf16.msra.mxu0 0
    %3229 = vmatprep.subr.bf16.mxu0 0
    %3230 = vmatpush1.bf16.msra.mxu0 0
    %3231 = vmatprep.subr.bf16.mxu0 0
    %3232 = vmatpush1.bf16.msra.mxu0 0
    %3233 = vmatprep.subr.bf16.mxu0 0
    %3234 = vmatpush1.bf16.msra.mxu0 0
    %3235 = vmatprep.subr.bf16.mxu0 0
    %3236 = vmatpush1.bf16.msra.mxu0 0
    %3237 = vmatprep.subr.bf16.mxu0 0
    %3238 = vmatpush1.bf16.msra.mxu0 0
    %3239 = vmatprep.subr.bf16.mxu0 0
    %3240 = vmatpush1.bf16.msra.mxu0 0
    %3241 = vmatprep.subr.bf16.mxu0 0
    %3242 = vmatpush1.bf16.msra.mxu0 0
    %3243 = vmatprep.subr.bf16.mxu0 0
    %3244 = vmatpush1.bf16.msra.mxu0 0
    %3245 = vmatprep.subr.bf16.mxu0 0
    %3246 = vmatpush1.bf16.msra.mxu0 0
    %3247 = vmatprep.subr.bf16.mxu0 0
    %3248 = vmatpush1.bf16.msra.mxu0 0
    %3249 = vmatprep.mubr.bf16.mxu0 0
    %3250 = vmatmul.mubr.bf16.gmra.mrb[0].mxu0 %v3215
    %v3251 = vpop.f32.mrb[0].mxu0
    %v3252 = vadd.f32 0.0, %v3251
    %v3253 = vpop.f32.mrb[0].mxu0
    %v3254 = vpop.f32.mrb[0].mxu0
    %v3255 = vpop.f32.mrb[0].mxu0
    %3256 = vdwg.mxu0
    %v3257 = vadd.f32 %v3192, %v3252
    %v3258 = vld [vmem:[%s23] sm:$0x1]
    %v3260 = vlaneseq
    %v3261 = vshrl.u32 %v3260, 7
    %v3262 = vsub.s32 0, %v3261
    %v3263 = vrot.slane %v3258, %v3262
    %v3265 = vadd.f32 %v3257, %v3263
    %v3266 = vmax.f32 %v3265, 0.0
    %v3267 = vpack.c.bf16 %v3266, %v3266
    %v3268 = vld [vmem:[%s24] sm:$0xf]
    %v3269 = vld [vmem:[%s24 + $0x4] sm:$0xf]
    %v3270 = vld [vmem:[%s25] sm:$0x1]
    %v3272 = vlaneseq
    %v3273 = vshrl.u32 %v3272, 7
    %v3274 = vsub.s32 0, %v3273
    %v3275 = vrot.slane %v3270, %v3274
    %v3279 = vunpack.c.l.b16 %v3268
    %v3280 = vunpack.c.l.b16 %v3269
    %v3281 = vpack.c.b16 %v3280, %v3279
    %v3284 = vsel %vm1172, %v3267, 0
    %3286 = vmatprep.subr.bf16.mxu0 0
    %3287 = vmatpush1.bf16.msra.mxu0 %v3281
    %3288 = vmatprep.subr.bf16.mxu0 0
    %3289 = vmatpush1.bf16.msra.mxu0 0
    %3290 = vmatprep.subr.bf16.mxu0 0
    %3291 = vmatpush1.bf16.msra.mxu0 0
    %3292 = vmatprep.subr.bf16.mxu0 0
    %3293 = vmatpush1.bf16.msra.mxu0 0
    %3294 = vmatprep.subr.bf16.mxu0 0
    %3295 = vmatpush1.bf16.msra.mxu0 0
    %3296 = vmatprep.subr.bf16.mxu0 0
    %3297 = vmatpush1.bf16.msra.mxu0 0
    %3298 = vmatprep.subr.bf16.mxu0 0
    %3299 = vmatpush1.bf16.msra.mxu0 0
    %3300 = vmatprep.subr.bf16.mxu0 0
    %3301 = vmatpush1.bf16.msra.mxu0 0
    %3302 = vmatprep.subr.bf16.mxu0 0
    %3303 = vmatpush1.bf16.msra.mxu0 0
    %3304 = vmatprep.subr.bf16.mxu0 0
    %3305 = vmatpush1.bf16.msra.mxu0 0
    %3306 = vmatprep.subr.bf16.mxu0 0
    %3307 = vmatpush1.bf16.msra.mxu0 0
    %3308 = vmatprep.subr.bf16.mxu0 0
    %3309 = vmatpush1.bf16.msra.mxu0 0
    %3310 = vmatprep.subr.bf16.mxu0 0
    %3311 = vmatpush1.bf16.msra.mxu0 0
    %3312 = vmatprep.subr.bf16.mxu0 0
    %3313 = vmatpush1.bf16.msra.mxu0 0
    %3314 = vmatprep.subr.bf16.mxu0 0
    %3315 = vmatpush1.bf16.msra.mxu0 0
    %3316 = vmatprep.subr.bf16.mxu0 0
    %3317 = vmatpush1.bf16.msra.mxu0 0
    %3318 = vmatprep.mubr.bf16.mxu0 0
    %3319 = vmatmul.mubr.bf16.gmra.mrb[0].mxu0 %v3284
    %v3320 = vpop.f32.mrb[0].mxu0
    %v3321 = vadd.f32 %v3275, %v3320
    %v3322 = vpop.f32.mrb[0].mxu0
    %v3323 = vpop.f32.mrb[0].mxu0
    %v3324 = vpop.f32.mrb[0].mxu0
    %3325 = vdwg.mxu0
    %vm3326 = vcmask 9216
    %3327 = vst.msk [vmem:[#allocation3] sm:$0x3] %vm3326, %v3321
    %v3328 = vsel %vm3326, %v3321, -inf
    %3329 = vmax.xlane.f32.xlu0 %v3328
    %v3330 = vpop.xlane.xlu0 %3329
    %v3331 = vsub.f32 %v3321, %v3330
    %v3332 = vmul.f32 %v3331, 1.442695
    %v3333 = vpow.pop %v3332
    %v3334 = vsel %vm3326, %v3333, 0.0
    %3335 = vadd.xlane.f32.xlu0 %v3334
    %v3336 = vpop.xlane.xlu0 %3335
    %v3337 = vrcp.pop %v3336
    %v3338 = vmul.f32 %v3333, %v3337
    %3339 = vst.msk [vmem:[#allocation5] sm:$0x3] %vm3326, %v3338
    // Predicated region
    $region106: #{forward.1} parent=1 // pred_check
      _
    $region107: #{forward.1} parent=1 // pred_check_branch
      %3341 = sbr.rel (0) target = $region109
    $region108: #{forward.1} parent=1 // pred_region
      %s3343 = ssub.s32 32, 32
      %3344 = vsyncadd [#allocation4], %s3343
      %s3346 = sshll.u32 [#allocation3], 4
      %s3347 = int_to_ptr.vmem [resolvable:$true] %s3346
      %3349 = dma.vmem_to_hbm [thread:$0]  %s3347, 32, %s26, [#allocation4]
    $region109: #{forward.1} parent=1 // pred_fallthru
      _
    // Predicated region
    $region110: #{forward.1} parent=1 // pred_check
      _
    $region111: #{forward.1} parent=1 // pred_check_branch
      %3351 = sbr.rel (0) target = $region113
    $region112: #{forward.1} parent=1 // pred_region
      %s3353 = ssub.s32 32, 32
      %3354 = vsyncadd [#allocation6], %s3353
      %s3356 = sshll.u32 [#allocation5], 4
      %s3357 = int_to_ptr.vmem [resolvable:$true] %s3356
      %3359 = dma.vmem_to_hbm [thread:$0]  %s3357, 32, %s27, [#allocation6]
    $region113: #{forward.1} parent=1 // pred_fallthru
      _
    // Predicated region
    $region114: #{forward.1} parent=1 // pred_check
      _
    $region115: #{forward.1} parent=1 // pred_check_branch
      %3361 = sbr.rel (0) target = $region117
    $region116: #{forward.1} parent=1 // pred_region
      %3362 = dma.done [#allocation4], 32
    $region117: #{forward.1} parent=1 // pred_fallthru
      _
    // Predicated region
    $region118: #{forward.1} parent=1 // pred_check
      _
    $region119: #{forward.1} parent=1 // pred_check_branch
      %3364 = sbr.rel (0) target = $region121
    $region120: #{forward.1} parent=1 // pred_region
      %3365 = dma.done [#allocation6], 32
    $region121: #{forward.1} parent=1 // pred_fallthru
      _
    %3366 = vsyncpa [#allocation4], 1
    %3367 = vsyncpa [#allocation6], 1

</llo_original>
